<compile_context>
chip_gen: v7x
topology: tpu7x:2x2x1
jax: 0.10.0
libtpu: 0.0.40
codegen_flags: <defaults>
</compile_context>

<pallas_src>
import functools
import math

import jax
import jax.numpy as jnp
from jax.experimental import pallas as pl
from jax.experimental.pallas import tpu as pltpu


ACT_DTYPE = jnp.bfloat16     # activations + conv weights fed to the MXU
LRELU_SLOPE = 0.2


# ----------------------------------------------------------------------------
# Compiler-parameter helpers (VMEM budget per TPU generation, megacore hints)
# ----------------------------------------------------------------------------
@functools.lru_cache(maxsize=None)
def _vmem_limit_bytes():
    cap = 64 * 1024 * 1024                       # conservative fallback (v7x)
    try:
        cap = int(pltpu.get_tpu_info().vmem_capacity_bytes)
    except Exception:
        pass
    return int(min(cap * 0.85, 100 * 1024 * 1024))


def _block_budget():
    # budget for (double-buffered) blocks + in-kernel f32 intermediates
    return max(4 * 1024 * 1024, min(20 * 1024 * 1024, _vmem_limit_bytes() // 3))


def _cparams(dims):
    vmem = _vmem_limit_bytes()
    try:
        return pltpu.CompilerParams(dimension_semantics=dims, vmem_limit_bytes=vmem)
    except Exception:
        try:  # older jax spelling
            return pltpu.TPUCompilerParams(dimension_semantics=dims, vmem_limit_bytes=vmem)
        except Exception:
            return None


def _round_up(x, m):
    return (x + m - 1) // m * m


# ----------------------------------------------------------------------------
# Conv2d (1x1 / 3x3, stride 1, 'same') as shifted MXU matmuls, row-tiled
# ----------------------------------------------------------------------------
def _conv_tile_rows(H, W, Wpad, Cin, Cout, out_bytes, has_res):
    budget = _block_budget()

    def est(th):
        body = th * Wpad * Cin * 2
        halo = 2 * Wpad * Cin * 2
        outb = th * W * Cout * out_bytes
        resb = th * W * Cout * 2 if has_res else 0
        slab = (th + 2) * Wpad * Cin * 2
        inter = 3 * th * Wpad * Cout * 4          # f32 accumulators / rolls
        return 2 * (body + halo + outb + resb) + slab + inter

    th = H
    while th > 8 and th % 2 == 0 and H % (th // 2) == 0 and est(th) > budget:
        th //= 2
    return th


def _make_conv_kernel(KH, KW, TH, W, Wpad, Cout, has_halo, has_res, res_scale):
    M = TH * Wpad  # flattened (rows x padded width) of one output tile

    def kernel(*refs):
        i = 0
        body_ref = refs[i]; i += 1
        halo_ref = None
        if has_halo:
            halo_ref = refs[i]; i += 1
        w_ref = refs[i]; i += 1
        b_ref = refs[i]; i += 1
        res_ref = None
        if has_res:
            res_ref = refs[i]; i += 1
        o_ref = refs[i]

        if has_halo:
            # body tile + 2 halo rows -> one contiguous (SLAB*Wpad, Cin) operand
            slab = jnp.concatenate([body_ref[...], halo_ref[...]], axis=0)

            def row_block(ky):
                return slab[ky * Wpad: ky * Wpad + M]
        else:
            def row_block(ky):
                return body_ref[ky * Wpad: ky * Wpad + M, :]

        # out[f] = sum_kx acc_kx[f + kx];  acc_kx[f] = sum_ky x[f + ky*Wpad] @ W[ky, kx]
        out = None
        for kx in range(KW):
            acc = None
            for ky in range(KH):
                p = jnp.dot(row_block(ky), w_ref[ky, kx],
                            preferred_element_type=jnp.float32)
                acc = p if acc is None else acc + p
            if kx:
                acc = jnp.roll(acc, -kx, axis=0)   # rolled-in rows land in width padding
            out = acc if out is None else out + acc

        out = out + b_ref[...]                     # (1, Cout) broadcasts
        y = out.reshape(TH, Wpad, Cout)[:, :W, :]  # drop width padding (aligned slice)
        if has_res:
            y = (y + res_ref[...].astype(jnp.float32)) * res_scale
        o_ref[...] = y.astype(o_ref.dtype)

    return kernel


def conv2d(x, w, b, *, residual=None, res_scale=1.0, out_dtype=None,
           max_tile_rows=None):
    """'same' conv, stride 1.  x:(N,H,W,Cin) NHWC, w:(KH,KW,Cin,Cout) HWIO.
    Optionally fuses  out = (conv(x)+b + residual) * res_scale  into the epilogue."""
    N, H, W, Cin = x.shape
    KH, KW, _, Cout = w.shape
    assert (KH, KW) in ((1, 1), (3, 3))
    ph, pw = KH // 2, KW // 2
    out_dtype = out_dtype or ACT_DTYPE
    has_res = residual is not None

    Wpad = _round_up(W + 2 * pw, 8)                # width multiple of 8 -> contiguous flatten
    Hp = H + 2 * ph
    xp = jnp.pad(x.astype(ACT_DTYPE),
                 ((0, 0), (ph, ph), (pw, Wpad - W - pw), (0, 0)))
    xp = xp.reshape(N, Hp * Wpad, Cin)             # row-major merge: free
    wv = w.astype(ACT_DTYPE)
    bv = b.reshape(1, Cout).astype(jnp.float32)

    out_bytes = jnp.dtype(out_dtype).itemsize
    TH = _conv_tile_rows(H, W, Wpad, Cin, Cout, out_bytes, has_res)
    if max_tile_rows is not None:                  # test hook (exercise halo path)
        TH = min(TH, max_tile_rows)
    if ph and TH < H and TH % 2:
        TH = H                                     # keep the halo block index integral
    assert H % TH == 0
    T = H // TH
    M = TH * Wpad
    single = (T == 1)
    has_halo = (ph > 0) and (not single)

    if single and ph > 0:
        body_rows = Hp * Wpad                      # whole padded sample in one block
        body_map = lambda n, t: (n, 0, 0)
    else:
        body_rows = M
        body_map = lambda n, t: (n, t, 0)

    in_specs = [pl.BlockSpec((None, body_rows, Cin), body_map)]
    args = [xp]
    if has_halo:
        # the 2 rows just below this tile (= first 2 rows of the next body block)
        in_specs.append(pl.BlockSpec((None, 2 * Wpad, Cin),
                                     lambda n, t: (n, (t + 1) * (TH // 2), 0)))
        args.append(xp)
    in_specs.append(pl.BlockSpec((KH, KW, Cin, Cout), lambda n, t: (0, 0, 0, 0)))
    args.append(wv)
    in_specs.append(pl.BlockSpec((1, Cout), lambda n, t: (0, 0)))
    args.append(bv)
    if has_res:
        assert residual.shape == (N, H, W, Cout)
        in_specs.append(pl.BlockSpec((None, TH, W, Cout), lambda n, t: (n, t, 0, 0)))
        args.append(residual.astype(ACT_DTYPE))

    kernel = _make_conv_kernel(KH, KW, TH, W, Wpad, Cout, has_halo, has_res, res_scale)
    return pl.pallas_call(
        kernel,
        out_shape=jax.ShapeDtypeStruct((N, H, W, Cout), out_dtype),
        grid=(N, T),
        in_specs=in_specs,
        out_specs=pl.BlockSpec((None, TH, W, Cout), lambda n, t: (n, t, 0, 0)),
        compiler_params=_cparams(("parallel", "parallel")),
    )(*args)


# ----------------------------------------------------------------------------
# Instance norm (+ per-(sample,channel) scale/shift + LeakyReLU), row-tiled
# ----------------------------------------------------------------------------
def _sums_kernel(x_ref, s1_ref, s2_ref):
    @pl.when(pl.program_id(1) == 0)
    def _init():
        s1_ref[...] = jnp.zeros_like(s1_ref)
        s2_ref[...] = jnp.zeros_like(s2_ref)

    xv = x_ref[...].astype(jnp.float32)
    s1_ref[...] += jnp.sum(xv, axis=0, keepdims=True)
    s2_ref[...] += jnp.sum(xv * xv, axis=0, keepdims=True)


def _make_affine_kernel(act):
    def kernel(x_ref, m_ref, a_ref, o_ref):
        y = x_ref[...].astype(jnp.float32) * m_ref[...] + a_ref[...]
        if act:
            y = jnp.where(y > 0, y, LRELU_SLOPE * y)   # LeakyReLU(0.2)
        o_ref[...] = y.astype(o_ref.dtype)
    return kernel


def _norm_chunk(HW, C):
    budget = _block_budget()

    def est(ch):
        return ch * C * 16

    ch = HW
    while ch > 8 and ch % 2 == 0 and HW % (ch // 2) == 0 and est(ch) > budget:
        ch //= 2
    return ch


def instance_norm_act(x, scale, shift, act=True, eps=1e-5):
    """InstanceNorm (biased var, per sample+channel) -> y*scale + shift -> LeakyReLU.
    scale/shift: (N, C); for AdaIN the '1+gamma' is already folded into scale."""
    N, H, W, C = x.shape
    HW = H * W
    xf = x.astype(ACT_DTYPE).reshape(N, HW, C)
    CH = _norm_chunk(HW, C)
    T = HW // CH

    s1, s2 = pl.pallas_call(
        _sums_kernel,
        out_shape=(jax.ShapeDtypeStruct((N, C), jnp.float32),
                   jax.ShapeDtypeStruct((N, C), jnp.float32)),
        grid=(N, T),
        in_specs=[pl.BlockSpec((None, CH, C), lambda n, t: (n, t, 0))],
        out_specs=(pl.BlockSpec((1, C), lambda n, t: (n, 0)),
                   pl.BlockSpec((1, C), lambda n, t: (n, 0))),
        compiler_params=_cparams(("parallel", "arbitrary")),
    )(xf)

    # tiny (N, C) math in plain JAX; fold gamma/beta into a single mul/add
    mean = s1 / HW
    var = jnp.maximum(s2 / HW - mean * mean, 0.0)     # biased, like torch
    mul = scale.astype(jnp.float32) * jax.lax.rsqrt(var + eps)
    add = shift.astype(jnp.float32) - mean * mul

    y = pl.pallas_call(
        _make_affine_kernel(act),
        out_shape=jax.ShapeDtypeStruct((N, HW, C), ACT_DTYPE),
        grid=(N, T),
        in_specs=[pl.BlockSpec((None, CH, C), lambda n, t: (n, t, 0)),
                  pl.BlockSpec((1, C), lambda n, t: (n, 0)),
                  pl.BlockSpec((1, C), lambda n, t: (n, 0))],
        out_specs=pl.BlockSpec((None, CH, C), lambda n, t: (n, t, 0)),
        compiler_params=_cparams(("parallel", "parallel")),
    )(xf, mul, add)
    return y.reshape(N, H, W, C)


# ----------------------------------------------------------------------------
# Linear (used once per forward for ALL stacked AdaIN style projections)
# ----------------------------------------------------------------------------
def _linear_kernel(x_ref, w_ref, b_ref, o_ref):
    o_ref[...] = (jnp.dot(x_ref[...], w_ref[...], preferred_element_type=jnp.float32)
                  + b_ref[...]).astype(o_ref.dtype)


def linear(x, w, b):
    N, S = x.shape
    F = w.shape[1]
    return pl.pallas_call(
        _linear_kernel,
        out_shape=jax.ShapeDtypeStruct((N, F), jnp.float32),
        grid=(1,),
        in_specs=[pl.BlockSpec((N, S), lambda i: (0, 0)),
                  pl.BlockSpec((S, F), lambda i: (0, 0)),
                  pl.BlockSpec((1, F), lambda i: (0, 0))],
        out_specs=pl.BlockSpec((N, F), lambda i: (0, 0)),
    )(x.astype(jnp.float32), w.astype(jnp.float32),
      b.reshape(1, F).astype(jnp.float32))


# ----------------------------------------------------------------------------
# Plain-JAX glue (cheap reshuffles, fused by XLA)
# ----------------------------------------------------------------------------
def avg_pool2(x):
    # TODO(synk): could be fused into the preceding conv's epilogue.
    N, H, W, C = x.shape
    return x.reshape(N, H // 2, 2, W // 2, 2, C).mean(axis=(2, 4))


def upsample_nearest2(x):
    # TODO(synk): could be fused into the following conv's input read.
    return jnp.repeat(jnp.repeat(x, 2, axis=1), 2, axis=2)


# ----------------------------------------------------------------------------
# Parameter construction (deterministic, in-script)
# ----------------------------------------------------------------------------
def _init_conv(key, kh, kw, cin, cout, bias=True):
    k1, k2 = jax.random.split(key)
    w = (jax.random.normal(k1, (kh, kw, cin, cout), jnp.float32)
         / math.sqrt(kh * kw * cin)).astype(ACT_DTYPE)
    b = (0.01 * jax.random.normal(k2, (cout,), jnp.float32)) if bias \
        else jnp.zeros((cout,), jnp.float32)
    return w, b


def _init_linear(key, s, f):
    k1, k2 = jax.random.split(key)
    w = jax.random.normal(k1, (s, f), jnp.float32) / math.sqrt(s)
    b = 0.01 * jax.random.normal(k2, (f,), jnp.float32)
    return w, b


def _init_resblk(key, dim_in, dim_out, downsample):
    ks = jax.random.split(key, 3)
    p = {
        "downsample": downsample,
        "norm1_w": jnp.ones((dim_in,), jnp.float32), "norm1_b": jnp.zeros((dim_in,), jnp.float32),
        "norm2_w": jnp.ones((dim_in,), jnp.float32), "norm2_b": jnp.zeros((dim_in,), jnp.float32),
    }
    p["conv1_w"], p["conv1_b"] = _init_conv(ks[0], 3, 3, dim_in, dim_in)
    p["conv2_w"], p["conv2_b"] = _init_conv(ks[1], 3, 3, dim_in, dim_out)
    if dim_in != dim_out:
        p["conv1x1_w"], _ = _init_conv(ks[2], 1, 1, dim_in, dim_out, bias=False)
        p["conv1x1_b"] = jnp.zeros((dim_out,), jnp.float32)
    else:
        p["conv1x1_w"] = None
    return p


def _init_adain_resblk(key, dim_in, dim_out, style_dim, w_hpf, upsample):
    ks = jax.random.split(key, 5)
    p = {"upsample": upsample, "w_hpf": w_hpf}
    p["fc1_w"], p["fc1_b"] = _init_linear(ks[0], style_dim, 2 * dim_in)
    p["fc2_w"], p["fc2_b"] = _init_linear(ks[1], style_dim, 2 * dim_out)
    p["conv1_w"], p["conv1_b"] = _init_conv(ks[2], 3, 3, dim_in, dim_out)
    p["conv2_w"], p["conv2_b"] = _init_conv(ks[3], 3, 3, dim_out, dim_out)
    if dim_in != dim_out:
        p["conv1x1_w"], _ = _init_conv(ks[4], 1, 1, dim_in, dim_out, bias=False)
        p["conv1x1_b"] = jnp.zeros((dim_out,), jnp.float32)
    else:
        p["conv1x1_w"] = None
    return p


def build_generator_params(key, img_size, style_dim, max_conv_dim, w_hpf, dim_in=None):
    # Mirrors Generator.__init__ / _build_encoder_decoder (dim_in is 2**14//img_size
    # by default; overridable only to keep the synthetic test small).
    if dim_in is None:
        dim_in = 2 ** 14 // img_size
    repeat_num = int(math.log2(img_size)) - 4
    if w_hpf > 0:
        repeat_num += 1

    keys = jax.random.split(key, 4 + 2 * (repeat_num + 2))
    ki = iter(range(len(keys)))

    params = {}
    params["from_rgb"] = _init_conv(keys[next(ki)], 1, 1, 3, dim_in)

    encode, decode = [], []
    d = dim_in
    for _ in range(repeat_num):
        d_out = min(d * 2, max_conv_dim)
        encode.append(_init_resblk(keys[next(ki)], d, d_out, downsample=True))
        decode.insert(0, _init_adain_resblk(keys[next(ki)], d_out, d, style_dim, w_hpf, upsample=True))
        d = d_out
    for _ in range(2):
        encode.append(_init_resblk(keys[next(ki)], d, d, downsample=False))
        decode.insert(0, _init_adain_resblk(keys[next(ki)], d, d, style_dim, w_hpf, upsample=False))
    params["encode"] = encode
    params["decode"] = decode

    to_w, to_b = _init_conv(keys[next(ki)], 1, 1, dim_in, 3)
    params["to_rgb"] = {
        "norm_w": jnp.ones((dim_in,), jnp.float32),
        "norm_b": jnp.zeros((dim_in,), jnp.float32),
        "conv_w": to_w, "conv_b": to_b,
    }
    return params


# ----------------------------------------------------------------------------
# Forward pass (mirrors the PyTorch module, masks=None path)
# ----------------------------------------------------------------------------
def _resblk_forward(p, x):
    N, _, _, C = x.shape
    sc = x
    if p["conv1x1_w"] is not None:
        sc = conv2d(sc, p["conv1x1_w"], p["conv1x1_b"])
    if p["downsample"]:
        sc = avg_pool2(sc)

    g1 = jnp.broadcast_to(p["norm1_w"][None, :], (N, C))
    b1 = jnp.broadcast_to(p["norm1_b"][None, :], (N, C))
    h = instance_norm_act(x, g1, b1, act=True)
    h = conv2d(h, p["conv1_w"], p["conv1_b"])
    if p["downsample"]:
        h = avg_pool2(h)
    C2 = h.shape[-1]
    g2 = jnp.broadcast_to(p["norm2_w"][None, :], (N, C2))
    b2 = jnp.broadcast_to(p["norm2_b"][None, :], (N, C2))
    h = instance_norm_act(h, g2, b2, act=True)
    # residual add + 1/sqrt(2) fused into conv2's epilogue
    return conv2d(h, p["conv2_w"], p["conv2_b"],
                  residual=sc, res_scale=1.0 / math.sqrt(2.0))


def _adain_resblk_forward(p, x, scale1, shift1, scale2, shift2):
    out = instance_norm_act(x, scale1, shift1, act=True)
    if p["upsample"]:
        out = upsample_nearest2(out)
    out = conv2d(out, p["conv1_w"], p["conv1_b"])
    out = instance_norm_act(out, scale2, shift2, act=True)
    if p["w_hpf"] == 0:
        sc = x
        if p["upsample"]:
            sc = upsample_nearest2(sc)
        if p["conv1x1_w"] is not None:
            sc = conv2d(sc, p["conv1x1_w"], p["conv1x1_b"])
        return conv2d(out, p["conv2_w"], p["conv2_b"],
                      residual=sc, res_scale=1.0 / math.sqrt(2.0))
    return conv2d(out, p["conv2_w"], p["conv2_b"])


def _stacked_style_projection(decode_params, s):
    """All AdaIN fc layers of the decoder as ONE Pallas matmul.
    '1 + gamma' is folded into the bias.  Returns (h_all, metas[i]=(offset, half))."""
    ws, bs, metas = [], [], []
    off = 0
    for p in decode_params:
        for kw, kb in (("fc1_w", "fc1_b"), ("fc2_w", "fc2_b")):
            w = p[kw].astype(jnp.float32)
            b = p[kb].astype(jnp.float32)
            c = w.shape[1] // 2
            ws.append(w)
            bs.append(jnp.concatenate([b[:c] + 1.0, b[c:]]))   # fold the AdaIN '1 +'
            metas.append((off, c))
            off += w.shape[1]
    h_all = linear(s, jnp.concatenate(ws, axis=1), jnp.concatenate(bs))
    return h_all, metas


def generator_forward(params, x, s, masks=None):
    """x: (N, H, W, 3) NHWC, s: (N, style_dim)."""
    # TODO(synk): masks branch (bilinear interpolate + HighPass conv on cached
    # encoder features) is not implemented; only the masks=None path is covered.
    assert masks is None
    x = conv2d(x.astype(ACT_DTYPE), *params["from_rgb"])
    for blk in params["encode"]:
        x = _resblk_forward(blk, x)

    h_all, metas = _stacked_style_projection(params["decode"], s)
    for i, blk in enumerate(params["decode"]):
        o1, c1 = metas[2 * i]
        o2, c2 = metas[2 * i + 1]
        x = _adain_resblk_forward(
            blk, x,
            h_all[:, o1:o1 + c1], h_all[:, o1 + c1:o1 + 2 * c1],
            h_all[:, o2:o2 + c2], h_all[:, o2 + c2:o2 + 2 * c2])

    # to_rgb: InstanceNorm2d(affine) -> LeakyReLU(0.2) -> Conv1x1 -> 3 channels
    N, _, _, C = x.shape
    g = jnp.broadcast_to(params["to_rgb"]["norm_w"][None, :], (N, C))
    b = jnp.broadcast_to(params["to_rgb"]["norm_b"][None, :], (N, C))
    x = instance_norm_act(x, g, b, act=True)
    x = conv2d(x, params["to_rgb"]["conv_w"], params["to_rgb"]["conv_b"],
               out_dtype=jnp.float32)
    return x


# ----------------------------------------------------------------------------
# Small self-check of the conv kernel (single-tile and forced row-tiled paths)
# ----------------------------------------------------------------------------
def _check_conv_against_xla():
    k1, k2, k3 = jax.random.split(jax.random.PRNGKey(42), 3)
    N, H, W, Cin, Cout = 2, 16, 16, 8, 16
    x = jax.random.normal(k1, (N, H, W, Cin), jnp.float32).astype(ACT_DTYPE)
    w = (jax.random.normal(k2, (3, 3, Cin, Cout), jnp.float32)
         / math.sqrt(9 * Cin)).astype(ACT_DTYPE)
    b = 0.01 * jax.random.normal(k3, (Cout,), jnp.float32)
    ref = jax.lax.conv_general_dilated(
        x.astype(jnp.float32), w.astype(jnp.float32), (1, 1), "SAME",
        dimension_numbers=("NHWC", "HWIO", "NHWC")) + b
    for tile in (None, 8):                      # whole-sample path and halo path
        got = conv2d(x, w, b, max_tile_rows=tile).astype(jnp.float32)
        err = float(jnp.max(jnp.abs(got - ref)))
        assert err < 5e-2, f"conv2d mismatch (tile={tile}): {err}"


# ----------------------------------------------------------------------------
if __name__ == "__main__":
    _check_conv_against_xla()

    key = jax.random.PRNGKey(0)
    kp, kx, ks = jax.random.split(key, 3)

    # Small synthetic configuration (dim_in overridden from 2**14//img_size to 16
    # so the test stays tiny; the op sequence / semantics are unchanged).
    img_size, style_dim, max_conv_dim, w_hpf = 32, 16, 32, 1
    batch = 2

    params = build_generator_params(kp, img_size, style_dim, max_conv_dim, w_hpf, dim_in=16)

    x = jax.random.normal(kx, (batch, img_size, img_size, 3), jnp.float32)  # NHWC
    s = jax.random.normal(ks, (batch, style_dim), jnp.float32)

    fwd = jax.jit(lambda xi, si: generator_forward(params, xi, si))
    out = jax.block_until_ready(fwd(x, s))

    assert out.shape == (batch, img_size, img_size, 3), out.shape
    assert bool(jnp.all(jnp.isfinite(out)))
    print("KERNEL_OK")
</pallas_src>

<mosaic_0001>
module attributes {stable_mosaic.version = 11 : i64} {
  func.func @kernel(%arg0: i32, %arg1: i32, %arg2: memref<1x432x8xbf16, #tpu.memory_space<vmem>>, %arg3: memref<3x3x8x16xbf16, #tpu.memory_space<vmem>>, %arg4: memref<1x16xf32, #tpu.memory_space<vmem>>, %arg5: memref<1x16x16x16xbf16, #tpu.memory_space<vmem>>) attributes {dimension_semantics = [#tpu.dimension_semantics<parallel>, #tpu.dimension_semantics<parallel>], iteration_bounds = array<i64: 2, 1>, scalar_prefetch = 0 : i64, scratch_operands = 0 : i64, tpu.core_type = #tpu.core_type<tc>, window_params = [{transform_indices = @transform_0, window_bounds = array<i64: 1, 432, 8>}, {pipeline_mode = #tpu.pipeline_mode<synchronous>, transform_indices = @transform_1, window_bounds = array<i64: 3, 3, 8, 16>}, {pipeline_mode = #tpu.pipeline_mode<synchronous>, transform_indices = @transform_2, window_bounds = array<i64: 1, 16>}, {transform_indices = @transform_3, window_bounds = array<i64: 1, 16, 16, 16>}]} {
    %c0 = arith.constant 0 : index
    %c0_0 = arith.constant 0 : index
    %c0_1 = arith.constant 0 : index
    %0 = vector.load %arg2[%c0, %c0_0, %c0_1] : memref<1x432x8xbf16, #tpu.memory_space<vmem>>, vector<1x384x8xbf16>
    %1 = vector.shape_cast %0 : vector<1x384x8xbf16> to vector<384x8xbf16>
    %c0_2 = arith.constant 0 : index
    %c0_3 = arith.constant 0 : index
    %c0_4 = arith.constant 0 : index
    %c0_5 = arith.constant 0 : index
    %2 = vector.load %arg3[%c0_2, %c0_3, %c0_4, %c0_5] : memref<3x3x8x16xbf16, #tpu.memory_space<vmem>>, vector<1x1x8x16xbf16>
    %3 = vector.shape_cast %2 : vector<1x1x8x16xbf16> to vector<8x16xbf16>
    %cst = arith.constant dense<0.000000e+00> : vector<384x16xf32>
    %4 = tpu.matmul %1, %3, %cst {dimension_numbers = #tpu.dot_dimension_numbers<[1], [0], [0], [1], [0, 0, 1, 1], [], []>} : vector<384x8xbf16>, vector<8x16xbf16>, vector<384x16xf32> -> vector<384x16xf32>
    %c0_6 = arith.constant 0 : index
    %c24 = arith.constant 24 : index
    %c0_7 = arith.constant 0 : index
    %5 = vector.load %arg2[%c0_6, %c24, %c0_7] : memref<1x432x8xbf16, #tpu.memory_space<vmem>>, vector<1x384x8xbf16>
    %6 = vector.shape_cast %5 : vector<1x384x8xbf16> to vector<384x8xbf16>
    %c1 = arith.constant 1 : index
    %c0_8 = arith.constant 0 : index
    %c0_9 = arith.constant 0 : index
    %c0_10 = arith.constant 0 : index
    %7 = vector.load %arg3[%c1, %c0_8, %c0_9, %c0_10] : memref<3x3x8x16xbf16, #tpu.memory_space<vmem>>, vector<1x1x8x16xbf16>
    %8 = vector.shape_cast %7 : vector<1x1x8x16xbf16> to vector<8x16xbf16>
    %cst_11 = arith.constant dense<0.000000e+00> : vector<384x16xf32>
    %9 = tpu.matmul %6, %8, %cst_11 {dimension_numbers = #tpu.dot_dimension_numbers<[1], [0], [0], [1], [0, 0, 1, 1], [], []>} : vector<384x8xbf16>, vector<8x16xbf16>, vector<384x16xf32> -> vector<384x16xf32>
    %10 = arith.addf %4, %9 : vector<384x16xf32>
    %c0_12 = arith.constant 0 : index
    %c48 = arith.constant 48 : index
    %c0_13 = arith.constant 0 : index
    %11 = vector.load %arg2[%c0_12, %c48, %c0_13] : memref<1x432x8xbf16, #tpu.memory_space<vmem>>, vector<1x384x8xbf16>
    %12 = vector.shape_cast %11 : vector<1x384x8xbf16> to vector<384x8xbf16>
    %c2 = arith.constant 2 : index
    %c0_14 = arith.constant 0 : index
    %c0_15 = arith.constant 0 : index
    %c0_16 = arith.constant 0 : index
    %13 = vector.load %arg3[%c2, %c0_14, %c0_15, %c0_16] : memref<3x3x8x16xbf16, #tpu.memory_space<vmem>>, vector<1x1x8x16xbf16>
    %14 = vector.shape_cast %13 : vector<1x1x8x16xbf16> to vector<8x16xbf16>
    %cst_17 = arith.constant dense<0.000000e+00> : vector<384x16xf32>
    %15 = tpu.matmul %12, %14, %cst_17 {dimension_numbers = #tpu.dot_dimension_numbers<[1], [0], [0], [1], [0, 0, 1, 1], [], []>} : vector<384x8xbf16>, vector<8x16xbf16>, vector<384x16xf32> -> vector<384x16xf32>
    %16 = arith.addf %10, %15 : vector<384x16xf32>
    %c0_18 = arith.constant 0 : index
    %c0_19 = arith.constant 0 : index
    %c0_20 = arith.constant 0 : index
    %17 = vector.load %arg2[%c0_18, %c0_19, %c0_20] : memref<1x432x8xbf16, #tpu.memory_space<vmem>>, vector<1x384x8xbf16>
    %18 = vector.shape_cast %17 : vector<1x384x8xbf16> to vector<384x8xbf16>
    %c0_21 = arith.constant 0 : index
    %c1_22 = arith.constant 1 : index
    %c0_23 = arith.constant 0 : index
    %c0_24 = arith.constant 0 : index
    %19 = vector.load %arg3[%c0_21, %c1_22, %c0_23, %c0_24] : memref<3x3x8x16xbf16, #tpu.memory_space<vmem>>, vector<1x1x8x16xbf16>
    %20 = vector.shape_cast %19 : vector<1x1x8x16xbf16> to vector<8x16xbf16>
    %cst_25 = arith.constant dense<0.000000e+00> : vector<384x16xf32>
    %21 = tpu.matmul %18, %20, %cst_25 {dimension_numbers = #tpu.dot_dimension_numbers<[1], [0], [0], [1], [0, 0, 1, 1], [], []>} : vector<384x8xbf16>, vector<8x16xbf16>, vector<384x16xf32> -> vector<384x16xf32>
    %c0_26 = arith.constant 0 : index
    %c24_27 = arith.constant 24 : index
    %c0_28 = arith.constant 0 : index
    %22 = vector.load %arg2[%c0_26, %c24_27, %c0_28] : memref<1x432x8xbf16, #tpu.memory_space<vmem>>, vector<1x384x8xbf16>
    %23 = vector.shape_cast %22 : vector<1x384x8xbf16> to vector<384x8xbf16>
    %c1_29 = arith.constant 1 : index
    %c1_30 = arith.constant 1 : index
    %c0_31 = arith.constant 0 : index
    %c0_32 = arith.constant 0 : index
    %24 = vector.load %arg3[%c1_29, %c1_30, %c0_31, %c0_32] : memref<3x3x8x16xbf16, #tpu.memory_space<vmem>>, vector<1x1x8x16xbf16>
    %25 = vector.shape_cast %24 : vector<1x1x8x16xbf16> to vector<8x16xbf16>
    %cst_33 = arith.constant dense<0.000000e+00> : vector<384x16xf32>
    %26 = tpu.matmul %23, %25, %cst_33 {dimension_numbers = #tpu.dot_dimension_numbers<[1], [0], [0], [1], [0, 0, 1, 1], [], []>} : vector<384x8xbf16>, vector<8x16xbf16>, vector<384x16xf32> -> vector<384x16xf32>
    %27 = arith.addf %21, %26 : vector<384x16xf32>
    %c0_34 = arith.constant 0 : index
    %c48_35 = arith.constant 48 : index
    %c0_36 = arith.constant 0 : index
    %28 = vector.load %arg2[%c0_34, %c48_35, %c0_36] : memref<1x432x8xbf16, #tpu.memory_space<vmem>>, vector<1x384x8xbf16>
    %29 = vector.shape_cast %28 : vector<1x384x8xbf16> to vector<384x8xbf16>
    %c2_37 = arith.constant 2 : index
    %c1_38 = arith.constant 1 : index
    %c0_39 = arith.constant 0 : index
    %c0_40 = arith.constant 0 : index
    %30 = vector.load %arg3[%c2_37, %c1_38, %c0_39, %c0_40] : memref<3x3x8x16xbf16, #tpu.memory_space<vmem>>, vector<1x1x8x16xbf16>
    %31 = vector.shape_cast %30 : vector<1x1x8x16xbf16> to vector<8x16xbf16>
    %cst_41 = arith.constant dense<0.000000e+00> : vector<384x16xf32>
    %32 = tpu.matmul %29, %31, %cst_41 {dimension_numbers = #tpu.dot_dimension_numbers<[1], [0], [0], [1], [0, 0, 1, 1], [], []>} : vector<384x8xbf16>, vector<8x16xbf16>, vector<384x16xf32> -> vector<384x16xf32>
    %33 = arith.addf %27, %32 : vector<384x16xf32>
    %34 = vector.extract_strided_slice %33 {offsets = [1, 0], sizes = [383, 16], strides = [1, 1]} : vector<384x16xf32> to vector<383x16xf32>
    %35 = vector.extract_strided_slice %33 {offsets = [0, 0], sizes = [1, 16], strides = [1, 1]} : vector<384x16xf32> to vector<1x16xf32>
    %36 = tpu.concatenate %34, %35 in 0 : vector<383x16xf32>, vector<1x16xf32> -> vector<384x16xf32>
    %37 = arith.addf %16, %36 : vector<384x16xf32>
    %c0_42 = arith.constant 0 : index
    %c0_43 = arith.constant 0 : index
    %c0_44 = arith.constant 0 : index
    %38 = vector.load %arg2[%c0_42, %c0_43, %c0_44] : memref<1x432x8xbf16, #tpu.memory_space<vmem>>, vector<1x384x8xbf16>
    %39 = vector.shape_cast %38 : vector<1x384x8xbf16> to vector<384x8xbf16>
    %c0_45 = arith.constant 0 : index
    %c2_46 = arith.constant 2 : index
    %c0_47 = arith.constant 0 : index
    %c0_48 = arith.constant 0 : index
    %40 = vector.load %arg3[%c0_45, %c2_46, %c0_47, %c0_48] : memref<3x3x8x16xbf16, #tpu.memory_space<vmem>>, vector<1x1x8x16xbf16>
    %41 = vector.shape_cast %40 : vector<1x1x8x16xbf16> to vector<8x16xbf16>
    %cst_49 = arith.constant dense<0.000000e+00> : vector<384x16xf32>
    %42 = tpu.matmul %39, %41, %cst_49 {dimension_numbers = #tpu.dot_dimension_numbers<[1], [0], [0], [1], [0, 0, 1, 1], [], []>} : vector<384x8xbf16>, vector<8x16xbf16>, vector<384x16xf32> -> vector<384x16xf32>
    %c0_50 = arith.constant 0 : index
    %c24_51 = arith.constant 24 : index
    %c0_52 = arith.constant 0 : index
    %43 = vector.load %arg2[%c0_50, %c24_51, %c0_52] : memref<1x432x8xbf16, #tpu.memory_space<vmem>>, vector<1x384x8xbf16>
    %44 = vector.shape_cast %43 : vector<1x384x8xbf16> to vector<384x8xbf16>
    %c1_53 = arith.constant 1 : index
    %c2_54 = arith.constant 2 : index
    %c0_55 = arith.constant 0 : index
    %c0_56 = arith.constant 0 : index
    %45 = vector.load %arg3[%c1_53, %c2_54, %c0_55, %c0_56] : memref<3x3x8x16xbf16, #tpu.memory_space<vmem>>, vector<1x1x8x16xbf16>
    %46 = vector.shape_cast %45 : vector<1x1x8x16xbf16> to vector<8x16xbf16>
    %cst_57 = arith.constant dense<0.000000e+00> : vector<384x16xf32>
    %47 = tpu.matmul %44, %46, %cst_57 {dimension_numbers = #tpu.dot_dimension_numbers<[1], [0], [0], [1], [0, 0, 1, 1], [], []>} : vector<384x8xbf16>, vector<8x16xbf16>, vector<384x16xf32> -> vector<384x16xf32>
    %48 = arith.addf %42, %47 : vector<384x16xf32>
    %c0_58 = arith.constant 0 : index
    %c48_59 = arith.constant 48 : index
    %c0_60 = arith.constant 0 : index
    %49 = vector.load %arg2[%c0_58, %c48_59, %c0_60] : memref<1x432x8xbf16, #tpu.memory_space<vmem>>, vector<1x384x8xbf16>
    %50 = vector.shape_cast %49 : vector<1x384x8xbf16> to vector<384x8xbf16>
    %c2_61 = arith.constant 2 : index
    %c2_62 = arith.constant 2 : index
    %c0_63 = arith.constant 0 : index
    %c0_64 = arith.constant 0 : index
    %51 = vector.load %arg3[%c2_61, %c2_62, %c0_63, %c0_64] : memref<3x3x8x16xbf16, #tpu.memory_space<vmem>>, vector<1x1x8x16xbf16>
    %52 = vector.shape_cast %51 : vector<1x1x8x16xbf16> to vector<8x16xbf16>
    %cst_65 = arith.constant dense<0.000000e+00> : vector<384x16xf32>
    %53 = tpu.matmul %50, %52, %cst_65 {dimension_numbers = #tpu.dot_dimension_numbers<[1], [0], [0], [1], [0, 0, 1, 1], [], []>} : vector<384x8xbf16>, vector<8x16xbf16>, vector<384x16xf32> -> vector<384x16xf32>
    %54 = arith.addf %48, %53 : vector<384x16xf32>
    %55 = vector.extract_strided_slice %54 {offsets = [2, 0], sizes = [382, 16], strides = [1, 1]} : vector<384x16xf32> to vector<382x16xf32>
    %56 = vector.extract_strided_slice %54 {offsets = [0, 0], sizes = [2, 16], strides = [1, 1]} : vector<384x16xf32> to vector<2x16xf32>
    %57 = tpu.concatenate %55, %56 in 0 : vector<382x16xf32>, vector<2x16xf32> -> vector<384x16xf32>
    %58 = arith.addf %37, %57 : vector<384x16xf32>
    %c0_66 = arith.constant 0 : index
    %c0_67 = arith.constant 0 : index
    %59 = vector.load %arg4[%c0_66, %c0_67] : memref<1x16xf32, #tpu.memory_space<vmem>>, vector<1x16xf32>
    %60 = vector.broadcast %59 : vector<1x16xf32> to vector<384x16xf32>
    %61 = arith.addf %58, %60 : vector<384x16xf32>
    %62 = vector.shape_cast %61 : vector<384x16xf32> to vector<16x24x16xf32>
    %63 = vector.extract_strided_slice %62 {offsets = [0, 0, 0], sizes = [16, 16, 16], strides = [1, 1, 1]} : vector<16x24x16xf32> to vector<16x16x16xf32>
    %64 = arith.truncf %63 : vector<16x16x16xf32> to vector<16x16x16xbf16>
    %c0_68 = arith.constant 0 : index
    %c0_69 = arith.constant 0 : index
    %c0_70 = arith.constant 0 : index
    %c0_71 = arith.constant 0 : index
    %65 = vector.load %arg5[%c0_68, %c0_69, %c0_70, %c0_71] : memref<1x16x16x16xbf16, #tpu.memory_space<vmem>>, vector<1x16x16x16xbf16>
    %66 = vector.shape_cast %65 : vector<1x16x16x16xbf16> to vector<16x16x16xbf16>
    %67 = vector.shape_cast %64 : vector<16x16x16xbf16> to vector<1x16x16x16xbf16>
    tpu.vector_store %arg5[%c0_68, %c0_69, %c0_70, %c0_71], %67 {strides = array<i32>} : memref<1x16x16x16xbf16, #tpu.memory_space<vmem>>, vector<1x16x16x16xbf16>,
    return
  }
  func.func @transform_0(%arg0: i32, %arg1: i32) -> (i32, i32, i32) {
    %c0_i32 = arith.constant 0 : i32
    %c0_i32_0 = arith.constant 0 : i32
    %c0_i32_1 = arith.constant 0 : i32
    return %arg0, %c0_i32, %c0_i32_0 : i32, i32, i32
  }
  func.func @transform_1(%arg0: i32, %arg1: i32) -> (i32, i32, i32, i32) {
    %c0_i32 = arith.constant 0 : i32
    %c0_i32_0 = arith.constant 0 : i32
    %c0_i32_1 = arith.constant 0 : i32
    %c0_i32_2 = arith.constant 0 : i32
    %c0_i32_3 = arith.constant 0 : i32
    return %c0_i32, %c0_i32_0, %c0_i32_1, %c0_i32_2 : i32, i32, i32, i32
  }
  func.func @transform_2(%arg0: i32, %arg1: i32) -> (i32, i32) {
    %c0_i32 = arith.constant 0 : i32
    %c0_i32_0 = arith.constant 0 : i32
    %c0_i32_1 = arith.constant 0 : i32
    return %c0_i32, %c0_i32_0 : i32, i32
  }
  func.func @transform_3(%arg0: i32, %arg1: i32) -> (i32, i32, i32, i32) {
    %c0_i32 = arith.constant 0 : i32
    %c0_i32_0 = arith.constant 0 : i32
    %c0_i32_1 = arith.constant 0 : i32
    return %arg0, %arg1, %c0_i32, %c0_i32_0 : i32, i32, i32, i32
  }
}

</mosaic_0001>

<llo_original>
// kernel: tpu_custom_call.1
$region0: #{tpu_custom_call.1}
  #allocation0 [shape = 'u32[]', space=smem, size = 0x4, offset = 0x4, fixed_abs, tag = 'smem constant byte address 0x4 - core index']
  #allocation1 [shape = 'u32[144,128]{1,0:T(1,128)}', space=vmem, size = 0x12000, scoped, tag = 'internal scratch']
  %s0 = inlined_call_operand.vmem [shape: bf16[2,432,8], index: 0, kind: input, shape index: {}]
  %s1 = inlined_call_operand.vmem [shape: bf16[3,3,8,16], index: 1, kind: input, shape index: {}]
  %s2 = inlined_call_operand.vmem [shape: f32[1,16], index: 2, kind: input, shape index: {}]
  %s3 = inlined_call_operand.hbm [shape: bf16[2,16,16,16], index: 3, kind: output, shape index: {}]
  %s4 = sld [smem:[#allocation0]]
  $region45: #{tpu_custom_call.1} parent=0
    _
  %s6 = ssub.s32 1, %s4
  %s7 = scalar_select 0, %s6, %s4
  $region1: #{tpu_custom_call.1} parent=0
    #allocation2 [shape = 'u8[131072]{0}', space=vmem, size = 0x20000, scoped, tag = 'output window, operand 0']
    #allocation3 [shape = 's32[2]{0}', space=sflag, size = 0x8, scoped, tag = 'scoped memory for tpu_custom_call.1']
    %8 = vsyncpa [#allocation3], 0
    %s9 = scalar_lea.sflag [#allocation3], 1
    %10 = vsyncpa %s9, 0
    loop: start=0, step=1, limit=4
    $region2: #{tpu_custom_call.1} parent=1 // loop_pre_header
      _
    $region3: #{tpu_custom_call.1} parent=1 // loop_header
      %s12 = sphi 0, %s16
      %p13 = scmp.ge.s32.totalorder %s12, 4
      %s19 = sphi 0, %s31
      %s20 = sphi 0, %s27
      %s21 = sphi 0, %s19
      %s22 = sphi 0, %s20
      %s23 = sphi 0, %s21
      %s24 = sphi 0, %s22
      %s34 = sphi 0, %s36
      %s37 = sphi 0, %s34
      %s38 = sphi 0, %s37
      %s54 = sphi 0, %s38
      %s58 = sphi 0, %s58
      %s60 = sphi 0, %s58
      %s61 = sphi 0, %s60
      %s75 = sphi 0, %s61
      %s79 = sphi 0, %s79
      %s81 = sphi 0, %s79
      %s82 = sphi 0, %s81
      %s96 = sphi 0, %s82
      %s104 = sphi 0, %s106
      %s107 = sphi 0, %s104
      %s108 = sphi 0, %s107
      %s124 = sphi 0, %s108
    $region4: #{tpu_custom_call.1} parent=1 // loop_header_branch
      %15 = sbr.rel (%p13) target = $region8
    $region5: #{tpu_custom_call.1} parent=1 // loop_body
      %s17 = ssub.s32 %s12, 1
      %s18 = ssub.s32 %s12, 2
      %s25 = sadd.s32 1, %s20
      %p26 = scmp.ge.s32.totalorder %s25, 1
      %s27 = scalar_select %p26, 0, %s25
      %s28 = sadd.s32 1, %s19
      %s29 = scalar_select %p26, %s28, %s19
      %p30 = scmp.ge.s32.totalorder %s29, 2
      %s31 = scalar_select %p30, 0, %s29
      %s32 = ssub.s32 %s19, %s31
      %p33 = scmp.eq.s32.totalorder %s32, 0
      %s35 = sadd.s32 %s34, 1
      %s36 = scalar_select %p33, %s34, %s35
      %p39 = pneg %p33
      %p40 = scmp.eq.s32.totalorder %s12, 1
      %p41 = por %p39, %p40
      %p42 = scmp.ne.s32.totalorder %s34, %s37
      %p43 = scmp.eq.s32.totalorder %s12, 0
      %p44 = por %p42, %p43
      %p45 = scmp.ne.s32.totalorder %s34, %s37
      %p46 = scmp.eq.s32.totalorder %s17, 1
      %p47 = por %p45, %p46
      %p48 = scmp.ne.s32.totalorder %s37, %s38
      %p49 = scmp.eq.s32.totalorder %s17, 0
      %p50 = por %p48, %p49
      %p51 = scmp.ne.s32.totalorder %s37, %s38
      %p52 = scmp.eq.s32.totalorder %s18, 1
      %p53 = por %p51, %p52
      %p55 = scmp.ne.s32.totalorder %s38, %s54
      %p56 = scmp.eq.s32.totalorder %s18, 0
      %p57 = por %p55, %p56
      %s59 = sadd.s32 %s58, 1
      %p62 = scmp.eq.s32.totalorder %s12, 1
      %p63 = scmp.ne.s32.totalorder %s58, %s60
      %p64 = scmp.eq.s32.totalorder %s12, 0
      %p65 = por %p63, %p64
      %p66 = scmp.ne.s32.totalorder %s58, %s60
      %p67 = scmp.eq.s32.totalorder %s17, 1
      %p68 = por %p66, %p67
      %p69 = scmp.ne.s32.totalorder %s60, %s61
      %p70 = scmp.eq.s32.totalorder %s17, 0
      %p71 = por %p69, %p70
      %p72 = scmp.ne.s32.totalorder %s60, %s61
      %p73 = scmp.eq.s32.totalorder %s18, 1
      %p74 = por %p72, %p73
      %p76 = scmp.ne.s32.totalorder %s61, %s75
      %p77 = scmp.eq.s32.totalorder %s18, 0
      %p78 = por %p76, %p77
      %s80 = sadd.s32 %s79, 1
      %p83 = scmp.eq.s32.totalorder %s12, 1
      %p84 = scmp.ne.s32.totalorder %s79, %s81
      %p85 = scmp.eq.s32.totalorder %s12, 0
      %p86 = por %p84, %p85
      %p87 = scmp.ne.s32.totalorder %s79, %s81
      %p88 = scmp.eq.s32.totalorder %s17, 1
      %p89 = por %p87, %p88
      %p90 = scmp.ne.s32.totalorder %s81, %s82
      %p91 = scmp.eq.s32.totalorder %s17, 0
      %p92 = por %p90, %p91
      %p93 = scmp.ne.s32.totalorder %s81, %s82
      %p94 = scmp.eq.s32.totalorder %s18, 1
      %p95 = por %p93, %p94
      %p97 = scmp.ne.s32.totalorder %s82, %s96
      %p98 = scmp.eq.s32.totalorder %s18, 0
      %p99 = por %p97, %p98
      %s100 = ssub.s32 %s19, %s31
      %s101 = ssub.s32 %s20, %s27
      %s102 = sor.u32 %s100, %s101
      %p103 = scmp.eq.s32.totalorder %s102, 0
      %s105 = sadd.s32 %s104, 1
      %s106 = scalar_select %p103, %s104, %s105
      %p109 = pneg %p103
      %p110 = scmp.eq.s32.totalorder %s12, 1
      %p111 = por %p109, %p110
      %p112 = scmp.ne.s32.totalorder %s104, %s107
      %p113 = scmp.eq.s32.totalorder %s12, 0
      %p114 = por %p112, %p113
      %p115 = scmp.ne.s32.totalorder %s104, %s107
      %p116 = scmp.eq.s32.totalorder %s17, 1
      %p117 = por %p115, %p116
      %p118 = scmp.ne.s32.totalorder %s107, %s108
      %p119 = scmp.eq.s32.totalorder %s17, 0
      %p120 = por %p118, %p119
      %p121 = scmp.ne.s32.totalorder %s107, %s108
      %p122 = scmp.eq.s32.totalorder %s18, 1
      %p123 = por %p121, %p122
      %p125 = scmp.ne.s32.totalorder %s108, %s124
      %p126 = scmp.eq.s32.totalorder %s18, 0
      %p127 = por %p125, %p126
      %p128 = scmp.le.s32.totalorder 1, %s12
      %p129 = scmp.lt.s32.totalorder %s12, 3
      %p130 = pnand %p128, %p129
      %p131 = pneg %p130
      // Predicated region
      $region9: #{tpu_custom_call.1} parent=5 // pred_check
        _
      $region10: #{tpu_custom_call.1} parent=5 // pred_check_branch
        %133 = sbr.rel (%p130) target = $region12
      $region11: #{tpu_custom_call.1} parent=5 // pred_region
        %s134 = ssub.s32 %s12, 1
        // Predicated region
        $region13: #{tpu_custom_call.1} parent=11 // pred_check
          %p135 = pneg %p71
        $region14: #{tpu_custom_call.1} parent=11 // pred_check_branch
          %137 = sbr.rel (%p135) target = $region16
        $region15: #{tpu_custom_call.1} parent=11 // pred_region
          _
        $region16: #{tpu_custom_call.1} parent=11 // pred_fallthru
          _
        // Predicated region
        $region17: #{tpu_custom_call.1} parent=11 // pred_check
          %p138 = pneg %p92
        $region18: #{tpu_custom_call.1} parent=11 // pred_check_branch
          %140 = sbr.rel (%p138) target = $region20
        $region19: #{tpu_custom_call.1} parent=11 // pred_region
          _
        $region20: #{tpu_custom_call.1} parent=11 // pred_fallthru
          _
      $region12: #{tpu_custom_call.1} parent=5 // pred_fallthru
        _
      %p141 = scmp.lt.s32.totalorder %s12, 2
      // Predicated region
      $region21: #{tpu_custom_call.1} parent=5 // pred_check
        %p142 = pneg %p141
      $region22: #{tpu_custom_call.1} parent=5 // pred_check_branch
        %144 = sbr.rel (%p142) target = $region24
      $region23: #{tpu_custom_call.1} parent=5 // pred_region
        // Predicated region
        $region25: #{tpu_custom_call.1} parent=23 // pred_check
          %p145 = pneg %p44
        $region26: #{tpu_custom_call.1} parent=23 // pred_check_branch
          %147 = sbr.rel (%p145) target = $region28
        $region27: #{tpu_custom_call.1} parent=23 // pred_region
          %p148 = scmp.lt.s32.totalorder %s19, 1
          %s149 = scalar_select %p148, %s19, 1
          %s150 = smul.addr %s149, 54
          %s151 = smul.addr %s150, 4
          %s152 = scalar_lea.vmem %s0, %s151
        $region28: #{tpu_custom_call.1} parent=23 // pred_fallthru
          _
      $region24: #{tpu_custom_call.1} parent=5 // pred_fallthru
        _
      %p153 = scmp.le.s32.totalorder 1, %s12
      %p154 = scmp.lt.s32.totalorder %s12, 3
      %p155 = pnand %p153, %p154
      %p156 = pneg %p155
      // Predicated region
      $region29: #{tpu_custom_call.1} parent=5 // pred_check
        _
      $region30: #{tpu_custom_call.1} parent=5 // pred_check_branch
        %158 = sbr.rel (%p155) target = $region32
      $region31: #{tpu_custom_call.1} parent=5 // pred_region
        %s159 = ssub.s32 %s12, 1
        %p160 = scmp.lt.s32.totalorder %s21, 1
        %s161 = scalar_select %p160, %s21, 1
        %s162 = smul.addr %s161, 54
        %s163 = smul.addr %s162, 4
        %s164 = scalar_lea.vmem %s0, %s163
        %p165 = pneg %p50
        %p166 = pneg %p47
        %p167 = pneg %p71
        %p168 = pneg %p68
        %p169 = pneg %p92
        %p170 = pneg %p89
        %p171 = pneg %p120
        %p172 = pneg %p117
        %s173 = sand.u32 %s107, 1
        %s174 = scalar_lea.sflag [#allocation3], %s173
        %s175 = sand.u32 %s107, 1
        %s176 = smul.addr %s175, 128
        %s177 = scalar_lea.vmem [#allocation2], %s176
        %p178 = scmp.lt.s32.totalorder %s21, 1
        %s179 = scalar_select %p178, %s21, 1
        %s180 = smul.addr %s179, 54
        %s181 = smul.addr %s180, 4
        %s182 = scalar_lea.vmem %s0, %s181
        %s183 = smul.u32 16, %s22
        %v185 = vld [vmem:[%s182] sm:$0xf]
        %v186 = vld [vmem:[%s182 + $0x4] sm:$0xf]
        %v187 = vld [vmem:[%s182 + $0x8] sm:$0xf]
        %v188 = vld [vmem:[%s182 + $0xc] sm:$0xf]
        %v189 = vld [vmem:[%s182 + $0x10] sm:$0xf]
        %v190 = vld [vmem:[%s182 + $0x14] sm:$0xf]
        %v191 = vld [vmem:[%s182 + $0x18] sm:$0xf]
        %v192 = vld [vmem:[%s182 + $0x1c] sm:$0xf]
        %v193 = vld [vmem:[%s182 + $0x20] sm:$0xf]
        %v194 = vld [vmem:[%s182 + $0x24] sm:$0xf]
        %v195 = vld [vmem:[%s182 + $0x28] sm:$0xf]
        %v196 = vld [vmem:[%s182 + $0x2c] sm:$0xf]
        %v197 = vld [vmem:[%s182 + $0x30] sm:$0xf]
        %v198 = vld [vmem:[%s182 + $0x34] sm:$0xf]
        %v199 = vld [vmem:[%s182 + $0x38] sm:$0xf]
        %v200 = vld [vmem:[%s182 + $0x3c] sm:$0xf]
        %v201 = vld [vmem:[%s182 + $0x40] sm:$0xf]
        %v202 = vld [vmem:[%s182 + $0x44] sm:$0xf]
        %v203 = vld [vmem:[%s182 + $0x48] sm:$0xf]
        %v204 = vld [vmem:[%s182 + $0x4c] sm:$0xf]
        %v205 = vld [vmem:[%s182 + $0x50] sm:$0xf]
        %v206 = vld [vmem:[%s182 + $0x54] sm:$0xf]
        %v207 = vld [vmem:[%s182 + $0x58] sm:$0xf]
        %v208 = vld [vmem:[%s182 + $0x5c] sm:$0xf]
        %v209 = vld [vmem:[%s182 + $0x60] sm:$0xf]
        %v210 = vld [vmem:[%s182 + $0x64] sm:$0xf]
        %v211 = vld [vmem:[%s182 + $0x68] sm:$0xf]
        %v212 = vld [vmem:[%s182 + $0x6c] sm:$0xf]
        %v213 = vld [vmem:[%s182 + $0x70] sm:$0xf]
        %v214 = vld [vmem:[%s182 + $0x74] sm:$0xf]
        %v215 = vld [vmem:[%s182 + $0x78] sm:$0xf]
        %v216 = vld [vmem:[%s182 + $0x7c] sm:$0xf]
        %v217 = vld [vmem:[%s182 + $0x80] sm:$0xf]
        %v218 = vld [vmem:[%s182 + $0x84] sm:$0xf]
        %v219 = vld [vmem:[%s182 + $0x88] sm:$0xf]
        %v220 = vld [vmem:[%s182 + $0x8c] sm:$0xf]
        %v221 = vld [vmem:[%s182 + $0x90] sm:$0xf]
        %v222 = vld [vmem:[%s182 + $0x94] sm:$0xf]
        %v223 = vld [vmem:[%s182 + $0x98] sm:$0xf]
        %v224 = vld [vmem:[%s182 + $0x9c] sm:$0xf]
        %v225 = vld [vmem:[%s182 + $0xa0] sm:$0xf]
        %v226 = vld [vmem:[%s182 + $0xa4] sm:$0xf]
        %v227 = vld [vmem:[%s182 + $0xa8] sm:$0xf]
        %v228 = vld [vmem:[%s182 + $0xac] sm:$0xf]
        %v229 = vld [vmem:[%s182 + $0xb0] sm:$0xf]
        %v230 = vld [vmem:[%s182 + $0xb4] sm:$0xf]
        %v231 = vld [vmem:[%s182 + $0xb8] sm:$0xf]
        %v232 = vld [vmem:[%s182 + $0xbc] sm:$0xf]
        %v233 = vld [vmem:[%s1] sm:$0xf]
        %v234 = vld [vmem:[%s182 + $0xc0] sm:$0xf]
        %v235 = vld [vmem:[%s182 + $0xc4] sm:$0xf]
        %v236 = vld [vmem:[%s182 + $0xc8] sm:$0xf]
        %s237 = scalar_lea.vmem %s1, 12
        %v238 = vld [vmem:[%s237] sm:$0xf]
        %v287 = vunpack.c.l.b16 %v188
        %v288 = vunpack.c.l.b16 %v189
        %v289 = vunpack.c.l.b16 %v190
        %v290 = vunpack.c.l.b16 %v191
        %v291 = vunpack.c.l.b16 %v192
        %v292 = vunpack.c.l.b16 %v193
        %v293 = vunpack.c.l.b16 %v194
        %v294 = vunpack.c.l.b16 %v195
        %v295 = vunpack.c.l.b16 %v196
        %v296 = vunpack.c.l.b16 %v197
        %v297 = vunpack.c.l.b16 %v198
        %v298 = vunpack.c.l.b16 %v199
        %v299 = vunpack.c.l.b16 %v200
        %v300 = vunpack.c.l.b16 %v201
        %v301 = vunpack.c.l.b16 %v202
        %v302 = vunpack.c.l.b16 %v203
        %v303 = vunpack.c.l.b16 %v204
        %v304 = vunpack.c.l.b16 %v205
        %v305 = vunpack.c.l.b16 %v206
        %v306 = vunpack.c.l.b16 %v207
        %v307 = vunpack.c.l.b16 %v208
        %v308 = vunpack.c.l.b16 %v209
        %v309 = vunpack.c.l.b16 %v210
        %v310 = vunpack.c.l.b16 %v211
        %v311 = vunpack.c.l.b16 %v212
        %v312 = vunpack.c.l.b16 %v213
        %v313 = vunpack.c.l.b16 %v214
        %v314 = vunpack.c.l.b16 %v215
        %v315 = vunpack.c.l.b16 %v216
        %v316 = vunpack.c.l.b16 %v217
        %v317 = vunpack.c.l.b16 %v218
        %v318 = vunpack.c.l.b16 %v219
        %v319 = vunpack.c.l.b16 %v220
        %v320 = vunpack.c.l.b16 %v221
        %v321 = vunpack.c.l.b16 %v222
        %v322 = vunpack.c.l.b16 %v223
        %v323 = vunpack.c.l.b16 %v224
        %v324 = vunpack.c.l.b16 %v225
        %v325 = vunpack.c.l.b16 %v226
        %v326 = vunpack.c.l.b16 %v227
        %v327 = vunpack.c.l.b16 %v228
        %v328 = vunpack.c.l.b16 %v229
        %v329 = vunpack.c.l.b16 %v230
        %v330 = vunpack.c.l.b16 %v231
        %v331 = vunpack.c.l.b16 %v232
        %v332 = vunpack.c.l.b16 %v234
        %v333 = vunpack.c.l.b16 %v235
        %v334 = vunpack.c.l.b16 %v236
        %v335 = vpack.c.b16 %v288, %v287
        %v336 = vpack.c.b16 %v290, %v289
        %v337 = vpack.c.b16 %v292, %v291
        %v338 = vpack.c.b16 %v294, %v293
        %v339 = vpack.c.b16 %v296, %v295
        %v340 = vpack.c.b16 %v298, %v297
        %v341 = vpack.c.b16 %v300, %v299
        %v342 = vpack.c.b16 %v302, %v301
        %v343 = vpack.c.b16 %v304, %v303
        %v344 = vpack.c.b16 %v306, %v305
        %v345 = vpack.c.b16 %v308, %v307
        %v346 = vpack.c.b16 %v310, %v309
        %v347 = vpack.c.b16 %v312, %v311
        %v348 = vpack.c.b16 %v314, %v313
        %v349 = vpack.c.b16 %v316, %v315
        %v350 = vpack.c.b16 %v318, %v317
        %v351 = vpack.c.b16 %v320, %v319
        %v352 = vpack.c.b16 %v322, %v321
        %v353 = vpack.c.b16 %v324, %v323
        %v354 = vpack.c.b16 %v326, %v325
        %v355 = vpack.c.b16 %v328, %v327
        %v356 = vpack.c.b16 %v330, %v329
        %v357 = vpack.c.b16 %v332, %v331
        %v358 = vpack.c.b16 %v334, %v333
        %vm359 = vcmask 64512
        %v361 = vsel %vm359, %v335, 0
        %v364 = vsel %vm359, %v336, 0
        %v367 = vsel %vm359, %v337, 0
        %v370 = vsel %vm359, %v338, 0
        %v373 = vsel %vm359, %v339, 0
        %v376 = vsel %vm359, %v340, 0
        %v379 = vsel %vm359, %v341, 0
        %v382 = vsel %vm359, %v342, 0
        %v385 = vsel %vm359, %v343, 0
        %v388 = vsel %vm359, %v344, 0
        %v391 = vsel %vm359, %v345, 0
        %v394 = vsel %vm359, %v346, 0
        %v397 = vsel %vm359, %v347, 0
        %v400 = vsel %vm359, %v348, 0
        %v403 = vsel %vm359, %v349, 0
        %v406 = vsel %vm359, %v350, 0
        %v409 = vsel %vm359, %v351, 0
        %v412 = vsel %vm359, %v352, 0
        %v415 = vsel %vm359, %v353, 0
        %v418 = vsel %vm359, %v354, 0
        %v421 = vsel %vm359, %v355, 0
        %v424 = vsel %vm359, %v356, 0
        %v427 = vsel %vm359, %v357, 0
        %v430 = vsel %vm359, %v358, 0
        %vm432 = vcmask 1043456
        %v434 = vsel %vm432, %v238, 0
        %436 = vmatprep.subr.bf16.mxu0 0
        %437 = vmatpush1.bf16.msra.mxu0 %v434
        %438 = vmatprep.subr.bf16.mxu0 0
        %439 = vmatpush1.bf16.msra.mxu0 0
        %440 = vmatprep.subr.bf16.mxu0 0
        %441 = vmatpush1.bf16.msra.mxu0 0
        %442 = vmatprep.subr.bf16.mxu0 0
        %443 = vmatpush1.bf16.msra.mxu0 0
        %444 = vmatprep.subr.bf16.mxu0 0
        %445 = vmatpush1.bf16.msra.mxu0 0
        %446 = vmatprep.subr.bf16.mxu0 0
        %447 = vmatpush1.bf16.msra.mxu0 0
        %448 = vmatprep.subr.bf16.mxu0 0
        %449 = vmatpush1.bf16.msra.mxu0 0
        %450 = vmatprep.subr.bf16.mxu0 0
        %451 = vmatpush1.bf16.msra.mxu0 0
        %452 = vmatprep.subr.bf16.mxu0 0
        %453 = vmatpush1.bf16.msra.mxu0 0
        %454 = vmatprep.subr.bf16.mxu0 0
        %455 = vmatpush1.bf16.msra.mxu0 0
        %456 = vmatprep.subr.bf16.mxu0 0
        %457 = vmatpush1.bf16.msra.mxu0 0
        %458 = vmatprep.subr.bf16.mxu0 0
        %459 = vmatpush1.bf16.msra.mxu0 0
        %460 = vmatprep.subr.bf16.mxu0 0
        %461 = vmatpush1.bf16.msra.mxu0 0
        %462 = vmatprep.subr.bf16.mxu0 0
        %463 = vmatpush1.bf16.msra.mxu0 0
        %464 = vmatprep.subr.bf16.mxu0 0
        %465 = vmatpush1.bf16.msra.mxu0 0
        %466 = vmatprep.subr.bf16.mxu0 0
        %467 = vmatpush1.bf16.msra.mxu0 0
        %468 = vmatprep.mubr.bf16.mxu0 0
        %469 = vmatmul.mubr.bf16.gmra.mrb[0].mxu0 %v361
        %v470 = vpop.f32.mrb[0].mxu0
        %v471 = vadd.f32 0.0, %v470
        %v472 = vpop.f32.mrb[0].mxu0
        %v473 = vpop.f32.mrb[0].mxu0
        %v474 = vadd.f32 0.0, %v473
        %v475 = vpop.f32.mrb[0].mxu0
        %476 = vmatprep.mubr.bf16.mxu0 0
        %477 = vmatmul.mubr.bf16.gmra.mrb[0].mxu0 %v364
        %v478 = vpop.f32.mrb[0].mxu0
        %v479 = vpop.f32.mrb[0].mxu0
        %v480 = vpop.f32.mrb[0].mxu0
        %v481 = vadd.f32 0.0, %v480
        %v482 = vpop.f32.mrb[0].mxu0
        %483 = vmatprep.mubr.bf16.mxu0 0
        %484 = vmatmul.mubr.bf16.gmra.mrb[0].mxu0 %v367
        %v485 = vpop.f32.mrb[0].mxu0
        %v486 = vadd.f32 0.0, %v485
        %v487 = vpop.f32.mrb[0].mxu0
        %v488 = vpop.f32.mrb[0].mxu0
        %v489 = vpop.f32.mrb[0].mxu0
        %490 = vmatprep.mubr.bf16.mxu0 0
        %491 = vmatmul.mubr.bf16.gmra.mrb[0].mxu0 %v370
        %v492 = vpop.f32.mrb[0].mxu0
        %v493 = vadd.f32 0.0, %v492
        %v494 = vpop.f32.mrb[0].mxu0
        %v495 = vpop.f32.mrb[0].mxu0
        %v496 = vadd.f32 0.0, %v495
        %v497 = vpop.f32.mrb[0].mxu0
        %498 = vmatprep.mubr.bf16.mxu0 0
        %499 = vmatmul.mubr.bf16.gmra.mrb[0].mxu0 %v373
        %v500 = vpop.f32.mrb[0].mxu0
        %v501 = vpop.f32.mrb[0].mxu0
        %v502 = vpop.f32.mrb[0].mxu0
        %v503 = vadd.f32 0.0, %v502
        %v504 = vpop.f32.mrb[0].mxu0
        %505 = vmatprep.mubr.bf16.mxu0 0
        %506 = vmatmul.mubr.bf16.gmra.mrb[0].mxu0 %v376
        %v507 = vpop.f32.mrb[0].mxu0
        %v508 = vadd.f32 0.0, %v507
        %v509 = vpop.f32.mrb[0].mxu0
        %v510 = vpop.f32.mrb[0].mxu0
        %v511 = vpop.f32.mrb[0].mxu0
        %512 = vmatprep.mubr.bf16.mxu0 0
        %513 = vmatmul.mubr.bf16.gmra.mrb[0].mxu0 %v379
        %v514 = vpop.f32.mrb[0].mxu0
        %v515 = vadd.f32 0.0, %v514
        %v516 = vpop.f32.mrb[0].mxu0
        %v517 = vpop.f32.mrb[0].mxu0
        %v518 = vadd.f32 0.0, %v517
        %v519 = vpop.f32.mrb[0].mxu0
        %520 = vmatprep.mubr.bf16.mxu0 0
        %521 = vmatmul.mubr.bf16.gmra.mrb[0].mxu0 %v382
        %v522 = vpop.f32.mrb[0].mxu0
        %v523 = vpop.f32.mrb[0].mxu0
        %v524 = vpop.f32.mrb[0].mxu0
        %v525 = vadd.f32 0.0, %v524
        %v526 = vpop.f32.mrb[0].mxu0
        %527 = vmatprep.mubr.bf16.mxu0 0
        %528 = vmatmul.mubr.bf16.gmra.mrb[0].mxu0 %v385
        %v529 = vpop.f32.mrb[0].mxu0
        %v530 = vadd.f32 0.0, %v529
        %v531 = vpop.f32.mrb[0].mxu0
        %v532 = vpop.f32.mrb[0].mxu0
        %v533 = vpop.f32.mrb[0].mxu0
        %534 = vmatprep.mubr.bf16.mxu0 0
        %535 = vmatmul.mubr.bf16.gmra.mrb[0].mxu0 %v388
        %v536 = vpop.f32.mrb[0].mxu0
        %v537 = vadd.f32 0.0, %v536
        %v538 = vpop.f32.mrb[0].mxu0
        %v539 = vpop.f32.mrb[0].mxu0
        %v540 = vadd.f32 0.0, %v539
        %v541 = vpop.f32.mrb[0].mxu0
        %542 = vmatprep.mubr.bf16.mxu0 0
        %543 = vmatmul.mubr.bf16.gmra.mrb[0].mxu0 %v391
        %v544 = vpop.f32.mrb[0].mxu0
        %v545 = vpop.f32.mrb[0].mxu0
        %v546 = vpop.f32.mrb[0].mxu0
        %v547 = vadd.f32 0.0, %v546
        %v548 = vpop.f32.mrb[0].mxu0
        %549 = vmatprep.mubr.bf16.mxu0 0
        %550 = vmatmul.mubr.bf16.gmra.mrb[0].mxu0 %v394
        %v551 = vpop.f32.mrb[0].mxu0
        %v552 = vadd.f32 0.0, %v551
        %v553 = vpop.f32.mrb[0].mxu0
        %v554 = vpop.f32.mrb[0].mxu0
        %v555 = vpop.f32.mrb[0].mxu0
        %556 = vmatprep.mubr.bf16.mxu0 0
        %557 = vmatmul.mubr.bf16.gmra.mrb[0].mxu0 %v397
        %v558 = vpop.f32.mrb[0].mxu0
        %v559 = vadd.f32 0.0, %v558
        %v560 = vpop.f32.mrb[0].mxu0
        %v561 = vpop.f32.mrb[0].mxu0
        %v562 = vadd.f32 0.0, %v561
        %v563 = vpop.f32.mrb[0].mxu0
        %564 = vmatprep.mubr.bf16.mxu0 0
        %565 = vmatmul.mubr.bf16.gmra.mrb[0].mxu0 %v400
        %v566 = vpop.f32.mrb[0].mxu0
        %v567 = vpop.f32.mrb[0].mxu0
        %v568 = vpop.f32.mrb[0].mxu0
        %v569 = vadd.f32 0.0, %v568
        %v570 = vpop.f32.mrb[0].mxu0
        %571 = vmatprep.mubr.bf16.mxu0 0
        %572 = vmatmul.mubr.bf16.gmra.mrb[0].mxu0 %v403
        %v573 = vpop.f32.mrb[0].mxu0
        %v574 = vadd.f32 0.0, %v573
        %v575 = vpop.f32.mrb[0].mxu0
        %v576 = vpop.f32.mrb[0].mxu0
        %v577 = vpop.f32.mrb[0].mxu0
        %578 = vmatprep.mubr.bf16.mxu0 0
        %579 = vmatmul.mubr.bf16.gmra.mrb[0].mxu0 %v406
        %v580 = vpop.f32.mrb[0].mxu0
        %v581 = vadd.f32 0.0, %v580
        %v582 = vpop.f32.mrb[0].mxu0
        %v583 = vpop.f32.mrb[0].mxu0
        %v584 = vadd.f32 0.0, %v583
        %v585 = vpop.f32.mrb[0].mxu0
        %586 = vmatprep.mubr.bf16.mxu0 0
        %587 = vmatmul.mubr.bf16.gmra.mrb[0].mxu0 %v409
        %v588 = vpop.f32.mrb[0].mxu0
        %v589 = vpop.f32.mrb[0].mxu0
        %v590 = vpop.f32.mrb[0].mxu0
        %v591 = vadd.f32 0.0, %v590
        %v592 = vpop.f32.mrb[0].mxu0
        %593 = vmatprep.mubr.bf16.mxu0 0
        %594 = vmatmul.mubr.bf16.gmra.mrb[0].mxu0 %v412
        %v595 = vpop.f32.mrb[0].mxu0
        %v596 = vadd.f32 0.0, %v595
        %v597 = vpop.f32.mrb[0].mxu0
        %v598 = vpop.f32.mrb[0].mxu0
        %v599 = vpop.f32.mrb[0].mxu0
        %600 = vmatprep.mubr.bf16.mxu0 0
        %601 = vmatmul.mubr.bf16.gmra.mrb[0].mxu0 %v415
        %v602 = vpop.f32.mrb[0].mxu0
        %v603 = vadd.f32 0.0, %v602
        %v604 = vpop.f32.mrb[0].mxu0
        %v605 = vpop.f32.mrb[0].mxu0
        %v606 = vadd.f32 0.0, %v605
        %v607 = vpop.f32.mrb[0].mxu0
        %608 = vmatprep.mubr.bf16.mxu0 0
        %609 = vmatmul.mubr.bf16.gmra.mrb[0].mxu0 %v418
        %v610 = vpop.f32.mrb[0].mxu0
        %v611 = vpop.f32.mrb[0].mxu0
        %v612 = vpop.f32.mrb[0].mxu0
        %v613 = vadd.f32 0.0, %v612
        %v614 = vpop.f32.mrb[0].mxu0
        %615 = vmatprep.mubr.bf16.mxu0 0
        %616 = vmatmul.mubr.bf16.gmra.mrb[0].mxu0 %v421
        %v617 = vpop.f32.mrb[0].mxu0
        %v618 = vadd.f32 0.0, %v617
        %v619 = vpop.f32.mrb[0].mxu0
        %v620 = vpop.f32.mrb[0].mxu0
        %v621 = vpop.f32.mrb[0].mxu0
        %622 = vmatprep.mubr.bf16.mxu0 0
        %623 = vmatmul.mubr.bf16.gmra.mrb[0].mxu0 %v424
        %v624 = vpop.f32.mrb[0].mxu0
        %v625 = vadd.f32 0.0, %v624
        %v626 = vpop.f32.mrb[0].mxu0
        %v627 = vpop.f32.mrb[0].mxu0
        %v628 = vadd.f32 0.0, %v627
        %v629 = vpop.f32.mrb[0].mxu0
        %630 = vmatprep.mubr.bf16.mxu0 0
        %631 = vmatmul.mubr.bf16.gmra.mrb[0].mxu0 %v427
        %v632 = vpop.f32.mrb[0].mxu0
        %v633 = vpop.f32.mrb[0].mxu0
        %v634 = vpop.f32.mrb[0].mxu0
        %v635 = vadd.f32 0.0, %v634
        %v636 = vpop.f32.mrb[0].mxu0
        %637 = vmatprep.mubr.bf16.mxu0 0
        %638 = vmatmul.mubr.bf16.gmra.mrb[0].mxu0 %v430
        %v639 = vpop.f32.mrb[0].mxu0
        %v640 = vadd.f32 0.0, %v639
        %v641 = vpop.f32.mrb[0].mxu0
        %v642 = vpop.f32.mrb[0].mxu0
        %v643 = vpop.f32.mrb[0].mxu0
        %644 = vdwg.mxu0
        %v648 = vunpack.c.l.b16 %v185
        %v649 = vunpack.c.l.b16 %v186
        %v650 = vunpack.c.l.b16 %v187
        %v651 = vpack.c.b16 %v649, %v648
        %v652 = vpack.c.b16 %v287, %v650
        %v653 = vpack.c.b16 %v289, %v288
        %v654 = vpack.c.b16 %v291, %v290
        %v655 = vpack.c.b16 %v293, %v292
        %v656 = vpack.c.b16 %v295, %v294
        %v657 = vpack.c.b16 %v297, %v296
        %v658 = vpack.c.b16 %v299, %v298
        %v659 = vpack.c.b16 %v301, %v300
        %v660 = vpack.c.b16 %v303, %v302
        %v661 = vpack.c.b16 %v305, %v304
        %v662 = vpack.c.b16 %v307, %v306
        %v663 = vpack.c.b16 %v309, %v308
        %v664 = vpack.c.b16 %v311, %v310
        %v665 = vpack.c.b16 %v313, %v312
        %v666 = vpack.c.b16 %v315, %v314
        %v667 = vpack.c.b16 %v317, %v316
        %v668 = vpack.c.b16 %v319, %v318
        %v669 = vpack.c.b16 %v321, %v320
        %v670 = vpack.c.b16 %v323, %v322
        %v671 = vpack.c.b16 %v325, %v324
        %v672 = vpack.c.b16 %v327, %v326
        %v673 = vpack.c.b16 %v329, %v328
        %v674 = vpack.c.b16 %v331, %v330
        %v676 = vsel %vm359, %v651, 0
        %v679 = vsel %vm359, %v652, 0
        %v682 = vsel %vm359, %v653, 0
        %v685 = vsel %vm359, %v654, 0
        %v688 = vsel %vm359, %v655, 0
        %v691 = vsel %vm359, %v656, 0
        %v694 = vsel %vm359, %v657, 0
        %v697 = vsel %vm359, %v658, 0
        %v700 = vsel %vm359, %v659, 0
        %v703 = vsel %vm359, %v660, 0
        %v706 = vsel %vm359, %v661, 0
        %v709 = vsel %vm359, %v662, 0
        %v712 = vsel %vm359, %v663, 0
        %v715 = vsel %vm359, %v664, 0
        %v718 = vsel %vm359, %v665, 0
        %v721 = vsel %vm359, %v666, 0
        %v724 = vsel %vm359, %v667, 0
        %v727 = vsel %vm359, %v668, 0
        %v730 = vsel %vm359, %v669, 0
        %v733 = vsel %vm359, %v670, 0
        %v736 = vsel %vm359, %v671, 0
        %v739 = vsel %vm359, %v672, 0
        %v742 = vsel %vm359, %v673, 0
        %v745 = vsel %vm359, %v674, 0
        %v748 = vsel %vm432, %v233, 0
        %750 = vmatprep.subr.bf16.mxu0 0
        %751 = vmatpush1.bf16.msra.mxu0 %v748
        %752 = vmatprep.subr.bf16.mxu0 0
        %753 = vmatpush1.bf16.msra.mxu0 0
        %754 = vmatprep.subr.bf16.mxu0 0
        %755 = vmatpush1.bf16.msra.mxu0 0
        %756 = vmatprep.subr.bf16.mxu0 0
        %757 = vmatpush1.bf16.msra.mxu0 0
        %758 = vmatprep.subr.bf16.mxu0 0
        %759 = vmatpush1.bf16.msra.mxu0 0
        %760 = vmatprep.subr.bf16.mxu0 0
        %761 = vmatpush1.bf16.msra.mxu0 0
        %762 = vmatprep.subr.bf16.mxu0 0
        %763 = vmatpush1.bf16.msra.mxu0 0
        %764 = vmatprep.subr.bf16.mxu0 0
        %765 = vmatpush1.bf16.msra.mxu0 0
        %766 = vmatprep.subr.bf16.mxu0 0
        %767 = vmatpush1.bf16.msra.mxu0 0
        %768 = vmatprep.subr.bf16.mxu0 0
        %769 = vmatpush1.bf16.msra.mxu0 0
        %770 = vmatprep.subr.bf16.mxu0 0
        %771 = vmatpush1.bf16.msra.mxu0 0
        %772 = vmatprep.subr.bf16.mxu0 0
        %773 = vmatpush1.bf16.msra.mxu0 0
        %774 = vmatprep.subr.bf16.mxu0 0
        %775 = vmatpush1.bf16.msra.mxu0 0
        %776 = vmatprep.subr.bf16.mxu0 0
        %777 = vmatpush1.bf16.msra.mxu0 0
        %778 = vmatprep.subr.bf16.mxu0 0
        %779 = vmatpush1.bf16.msra.mxu0 0
        %780 = vmatprep.subr.bf16.mxu0 0
        %781 = vmatpush1.bf16.msra.mxu0 0
        %782 = vmatprep.mubr.bf16.mxu0 0
        %783 = vmatmul.mubr.bf16.gmra.mrb[0].mxu0 %v676
        %v784 = vpop.f32.mrb[0].mxu0
        %v785 = vadd.f32 %v471, %v784
        %v786 = vpop.f32.mrb[0].mxu0
        %v787 = vpop.f32.mrb[0].mxu0
        %v788 = vadd.f32 %v474, %v787
        %v789 = vpop.f32.mrb[0].mxu0
        %790 = vmatprep.mubr.bf16.mxu0 0
        %791 = vmatmul.mubr.bf16.gmra.mrb[0].mxu0 %v679
        %v792 = vpop.f32.mrb[0].mxu0
        %v793 = vpop.f32.mrb[0].mxu0
        %v794 = vpop.f32.mrb[0].mxu0
        %v795 = vadd.f32 %v481, %v794
        %v796 = vpop.f32.mrb[0].mxu0
        %797 = vmatprep.mubr.bf16.mxu0 0
        %798 = vmatmul.mubr.bf16.gmra.mrb[0].mxu0 %v682
        %v799 = vpop.f32.mrb[0].mxu0
        %v800 = vadd.f32 %v486, %v799
        %v801 = vpop.f32.mrb[0].mxu0
        %v802 = vpop.f32.mrb[0].mxu0
        %v803 = vpop.f32.mrb[0].mxu0
        %804 = vmatprep.mubr.bf16.mxu0 0
        %805 = vmatmul.mubr.bf16.gmra.mrb[0].mxu0 %v685
        %v806 = vpop.f32.mrb[0].mxu0
        %v807 = vadd.f32 %v493, %v806
        %v808 = vpop.f32.mrb[0].mxu0
        %v809 = vpop.f32.mrb[0].mxu0
        %v810 = vadd.f32 %v496, %v809
        %v811 = vpop.f32.mrb[0].mxu0
        %812 = vmatprep.mubr.bf16.mxu0 0
        %813 = vmatmul.mubr.bf16.gmra.mrb[0].mxu0 %v688
        %v814 = vpop.f32.mrb[0].mxu0
        %v815 = vpop.f32.mrb[0].mxu0
        %v816 = vpop.f32.mrb[0].mxu0
        %v817 = vadd.f32 %v503, %v816
        %v818 = vpop.f32.mrb[0].mxu0
        %819 = vmatprep.mubr.bf16.mxu0 0
        %820 = vmatmul.mubr.bf16.gmra.mrb[0].mxu0 %v691
        %v821 = vpop.f32.mrb[0].mxu0
        %v822 = vadd.f32 %v508, %v821
        %v823 = vpop.f32.mrb[0].mxu0
        %v824 = vpop.f32.mrb[0].mxu0
        %v825 = vpop.f32.mrb[0].mxu0
        %826 = vmatprep.mubr.bf16.mxu0 0
        %827 = vmatmul.mubr.bf16.gmra.mrb[0].mxu0 %v694
        %v828 = vpop.f32.mrb[0].mxu0
        %v829 = vadd.f32 %v515, %v828
        %v830 = vpop.f32.mrb[0].mxu0
        %v831 = vpop.f32.mrb[0].mxu0
        %v832 = vadd.f32 %v518, %v831
        %v833 = vpop.f32.mrb[0].mxu0
        %834 = vmatprep.mubr.bf16.mxu0 0
        %835 = vmatmul.mubr.bf16.gmra.mrb[0].mxu0 %v697
        %v836 = vpop.f32.mrb[0].mxu0
        %v837 = vpop.f32.mrb[0].mxu0
        %v838 = vpop.f32.mrb[0].mxu0
        %v839 = vadd.f32 %v525, %v838
        %v840 = vpop.f32.mrb[0].mxu0
        %841 = vmatprep.mubr.bf16.mxu0 0
        %842 = vmatmul.mubr.bf16.gmra.mrb[0].mxu0 %v700
        %v843 = vpop.f32.mrb[0].mxu0
        %v844 = vadd.f32 %v530, %v843
        %v845 = vpop.f32.mrb[0].mxu0
        %v846 = vpop.f32.mrb[0].mxu0
        %v847 = vpop.f32.mrb[0].mxu0
        %848 = vmatprep.mubr.bf16.mxu0 0
        %849 = vmatmul.mubr.bf16.gmra.mrb[0].mxu0 %v703
        %v850 = vpop.f32.mrb[0].mxu0
        %v851 = vadd.f32 %v537, %v850
        %v852 = vpop.f32.mrb[0].mxu0
        %v853 = vpop.f32.mrb[0].mxu0
        %v854 = vadd.f32 %v540, %v853
        %v855 = vpop.f32.mrb[0].mxu0
        %856 = vmatprep.mubr.bf16.mxu0 0
        %857 = vmatmul.mubr.bf16.gmra.mrb[0].mxu0 %v706
        %v858 = vpop.f32.mrb[0].mxu0
        %v859 = vpop.f32.mrb[0].mxu0
        %v860 = vpop.f32.mrb[0].mxu0
        %v861 = vadd.f32 %v547, %v860
        %v862 = vpop.f32.mrb[0].mxu0
        %863 = vmatprep.mubr.bf16.mxu0 0
        %864 = vmatmul.mubr.bf16.gmra.mrb[0].mxu0 %v709
        %v865 = vpop.f32.mrb[0].mxu0
        %v866 = vadd.f32 %v552, %v865
        %v867 = vpop.f32.mrb[0].mxu0
        %v868 = vpop.f32.mrb[0].mxu0
        %v869 = vpop.f32.mrb[0].mxu0
        %870 = vmatprep.mubr.bf16.mxu0 0
        %871 = vmatmul.mubr.bf16.gmra.mrb[0].mxu0 %v712
        %v872 = vpop.f32.mrb[0].mxu0
        %v873 = vadd.f32 %v559, %v872
        %v874 = vpop.f32.mrb[0].mxu0
        %v875 = vpop.f32.mrb[0].mxu0
        %v876 = vadd.f32 %v562, %v875
        %v877 = vpop.f32.mrb[0].mxu0
        %878 = vmatprep.mubr.bf16.mxu0 0
        %879 = vmatmul.mubr.bf16.gmra.mrb[0].mxu0 %v715
        %v880 = vpop.f32.mrb[0].mxu0
        %v881 = vpop.f32.mrb[0].mxu0
        %v882 = vpop.f32.mrb[0].mxu0
        %v883 = vadd.f32 %v569, %v882
        %v884 = vpop.f32.mrb[0].mxu0
        %885 = vmatprep.mubr.bf16.mxu0 0
        %886 = vmatmul.mubr.bf16.gmra.mrb[0].mxu0 %v718
        %v887 = vpop.f32.mrb[0].mxu0
        %v888 = vadd.f32 %v574, %v887
        %v889 = vpop.f32.mrb[0].mxu0
        %v890 = vpop.f32.mrb[0].mxu0
        %v891 = vpop.f32.mrb[0].mxu0
        %892 = vmatprep.mubr.bf16.mxu0 0
        %893 = vmatmul.mubr.bf16.gmra.mrb[0].mxu0 %v721
        %v894 = vpop.f32.mrb[0].mxu0
        %v895 = vadd.f32 %v581, %v894
        %v896 = vpop.f32.mrb[0].mxu0
        %v897 = vpop.f32.mrb[0].mxu0
        %v898 = vadd.f32 %v584, %v897
        %v899 = vpop.f32.mrb[0].mxu0
        %900 = vmatprep.mubr.bf16.mxu0 0
        %901 = vmatmul.mubr.bf16.gmra.mrb[0].mxu0 %v724
        %v902 = vpop.f32.mrb[0].mxu0
        %v903 = vpop.f32.mrb[0].mxu0
        %v904 = vpop.f32.mrb[0].mxu0
        %v905 = vadd.f32 %v591, %v904
        %v906 = vpop.f32.mrb[0].mxu0
        %907 = vmatprep.mubr.bf16.mxu0 0
        %908 = vmatmul.mubr.bf16.gmra.mrb[0].mxu0 %v727
        %v909 = vpop.f32.mrb[0].mxu0
        %v910 = vadd.f32 %v596, %v909
        %v911 = vpop.f32.mrb[0].mxu0
        %v912 = vpop.f32.mrb[0].mxu0
        %v913 = vpop.f32.mrb[0].mxu0
        %914 = vmatprep.mubr.bf16.mxu0 0
        %915 = vmatmul.mubr.bf16.gmra.mrb[0].mxu0 %v730
        %v916 = vpop.f32.mrb[0].mxu0
        %v917 = vadd.f32 %v603, %v916
        %v918 = vpop.f32.mrb[0].mxu0
        %v919 = vpop.f32.mrb[0].mxu0
        %v920 = vadd.f32 %v606, %v919
        %v921 = vpop.f32.mrb[0].mxu0
        %922 = vmatprep.mubr.bf16.mxu0 0
        %923 = vmatmul.mubr.bf16.gmra.mrb[0].mxu0 %v733
        %v924 = vpop.f32.mrb[0].mxu0
        %v925 = vpop.f32.mrb[0].mxu0
        %v926 = vpop.f32.mrb[0].mxu0
        %v927 = vadd.f32 %v613, %v926
        %v928 = vpop.f32.mrb[0].mxu0
        %929 = vmatprep.mubr.bf16.mxu0 0
        %930 = vmatmul.mubr.bf16.gmra.mrb[0].mxu0 %v736
        %v931 = vpop.f32.mrb[0].mxu0
        %v932 = vadd.f32 %v618, %v931
        %v933 = vpop.f32.mrb[0].mxu0
        %v934 = vpop.f32.mrb[0].mxu0
        %v935 = vpop.f32.mrb[0].mxu0
        %936 = vmatprep.mubr.bf16.mxu0 0
        %937 = vmatmul.mubr.bf16.gmra.mrb[0].mxu0 %v739
        %v938 = vpop.f32.mrb[0].mxu0
        %v939 = vadd.f32 %v625, %v938
        %v940 = vpop.f32.mrb[0].mxu0
        %v941 = vpop.f32.mrb[0].mxu0
        %v942 = vadd.f32 %v628, %v941
        %v943 = vpop.f32.mrb[0].mxu0
        %944 = vmatprep.mubr.bf16.mxu0 0
        %945 = vmatmul.mubr.bf16.gmra.mrb[0].mxu0 %v742
        %v946 = vpop.f32.mrb[0].mxu0
        %v947 = vpop.f32.mrb[0].mxu0
        %v948 = vpop.f32.mrb[0].mxu0
        %v949 = vadd.f32 %v635, %v948
        %v950 = vpop.f32.mrb[0].mxu0
        %951 = vmatprep.mubr.bf16.mxu0 0
        %952 = vmatmul.mubr.bf16.gmra.mrb[0].mxu0 %v745
        %v953 = vpop.f32.mrb[0].mxu0
        %v954 = vadd.f32 %v640, %v953
        %v955 = vpop.f32.mrb[0].mxu0
        %v956 = vpop.f32.mrb[0].mxu0
        %v957 = vpop.f32.mrb[0].mxu0
        %958 = vdwg.mxu0
        %v959 = vld [vmem:[%s182 + $0x18] sm:$0xf]
        %v960 = vld [vmem:[%s182 + $0x1c] sm:$0xf]
        %v961 = vld [vmem:[%s182 + $0x20] sm:$0xf]
        %v962 = vld [vmem:[%s182 + $0x24] sm:$0xf]
        %v963 = vld [vmem:[%s182 + $0x28] sm:$0xf]
        %v964 = vld [vmem:[%s182 + $0x2c] sm:$0xf]
        %v965 = vld [vmem:[%s182 + $0x30] sm:$0xf]
        %v966 = vld [vmem:[%s182 + $0x34] sm:$0xf]
        %v967 = vld [vmem:[%s182 + $0x38] sm:$0xf]
        %v968 = vld [vmem:[%s182 + $0x3c] sm:$0xf]
        %v969 = vld [vmem:[%s182 + $0x40] sm:$0xf]
        %v970 = vld [vmem:[%s182 + $0x44] sm:$0xf]
        %v971 = vld [vmem:[%s182 + $0x48] sm:$0xf]
        %v972 = vld [vmem:[%s182 + $0x4c] sm:$0xf]
        %v973 = vld [vmem:[%s182 + $0x50] sm:$0xf]
        %v974 = vld [vmem:[%s182 + $0x54] sm:$0xf]
        %v975 = vld [vmem:[%s182 + $0x58] sm:$0xf]
        %v976 = vld [vmem:[%s182 + $0x5c] sm:$0xf]
        %v977 = vld [vmem:[%s182 + $0x60] sm:$0xf]
        %v978 = vld [vmem:[%s182 + $0x64] sm:$0xf]
        %v979 = vld [vmem:[%s182 + $0x68] sm:$0xf]
        %v980 = vld [vmem:[%s182 + $0x6c] sm:$0xf]
        %v981 = vld [vmem:[%s182 + $0x70] sm:$0xf]
        %v982 = vld [vmem:[%s182 + $0x74] sm:$0xf]
        %v983 = vld [vmem:[%s182 + $0x78] sm:$0xf]
        %v984 = vld [vmem:[%s182 + $0x7c] sm:$0xf]
        %v985 = vld [vmem:[%s182 + $0x80] sm:$0xf]
        %v986 = vld [vmem:[%s182 + $0x84] sm:$0xf]
        %v987 = vld [vmem:[%s182 + $0x88] sm:$0xf]
        %v988 = vld [vmem:[%s182 + $0x8c] sm:$0xf]
        %v989 = vld [vmem:[%s182 + $0x90] sm:$0xf]
        %v990 = vld [vmem:[%s182 + $0x94] sm:$0xf]
        %v991 = vld [vmem:[%s182 + $0x98] sm:$0xf]
        %v992 = vld [vmem:[%s182 + $0x9c] sm:$0xf]
        %v993 = vld [vmem:[%s182 + $0xa0] sm:$0xf]
        %v994 = vld [vmem:[%s182 + $0xa4] sm:$0xf]
        %v995 = vld [vmem:[%s182 + $0xa8] sm:$0xf]
        %v996 = vld [vmem:[%s182 + $0xac] sm:$0xf]
        %v997 = vld [vmem:[%s182 + $0xb0] sm:$0xf]
        %v998 = vld [vmem:[%s182 + $0xb4] sm:$0xf]
        %v999 = vld [vmem:[%s182 + $0xb8] sm:$0xf]
        %v1000 = vld [vmem:[%s182 + $0xbc] sm:$0xf]
        %v1001 = vld [vmem:[%s182 + $0xc0] sm:$0xf]
        %v1002 = vld [vmem:[%s182 + $0xc4] sm:$0xf]
        %v1003 = vld [vmem:[%s182 + $0xc8] sm:$0xf]
        %v1004 = vld [vmem:[%s182 + $0xcc] sm:$0xf]
        %v1005 = vld [vmem:[%s182 + $0xd0] sm:$0xf]
        %v1006 = vld [vmem:[%s182 + $0xd4] sm:$0xf]
        %s1007 = scalar_lea.vmem %s1, 24
        %v1008 = vld [vmem:[%s1007] sm:$0xf]
        %v1057 = vunpack.c.l.b16 %v959
        %v1058 = vunpack.c.l.b16 %v960
        %v1059 = vunpack.c.l.b16 %v961
        %v1060 = vunpack.c.l.b16 %v962
        %v1061 = vunpack.c.l.b16 %v963
        %v1062 = vunpack.c.l.b16 %v964
        %v1063 = vunpack.c.l.b16 %v965
        %v1064 = vunpack.c.l.b16 %v966
        %v1065 = vunpack.c.l.b16 %v967
        %v1066 = vunpack.c.l.b16 %v968
        %v1067 = vunpack.c.l.b16 %v969
        %v1068 = vunpack.c.l.b16 %v970
        %v1069 = vunpack.c.l.b16 %v971
        %v1070 = vunpack.c.l.b16 %v972
        %v1071 = vunpack.c.l.b16 %v973
        %v1072 = vunpack.c.l.b16 %v974
        %v1073 = vunpack.c.l.b16 %v975
        %v1074 = vunpack.c.l.b16 %v976
        %v1075 = vunpack.c.l.b16 %v977
        %v1076 = vunpack.c.l.b16 %v978
        %v1077 = vunpack.c.l.b16 %v979
        %v1078 = vunpack.c.l.b16 %v980
        %v1079 = vunpack.c.l.b16 %v981
        %v1080 = vunpack.c.l.b16 %v982
        %v1081 = vunpack.c.l.b16 %v983
        %v1082 = vunpack.c.l.b16 %v984
        %v1083 = vunpack.c.l.b16 %v985
        %v1084 = vunpack.c.l.b16 %v986
        %v1085 = vunpack.c.l.b16 %v987
        %v1086 = vunpack.c.l.b16 %v988
        %v1087 = vunpack.c.l.b16 %v989
        %v1088 = vunpack.c.l.b16 %v990
        %v1089 = vunpack.c.l.b16 %v991
        %v1090 = vunpack.c.l.b16 %v992
        %v1091 = vunpack.c.l.b16 %v993
        %v1092 = vunpack.c.l.b16 %v994
        %v1093 = vunpack.c.l.b16 %v995
        %v1094 = vunpack.c.l.b16 %v996
        %v1095 = vunpack.c.l.b16 %v997
        %v1096 = vunpack.c.l.b16 %v998
        %v1097 = vunpack.c.l.b16 %v999
        %v1098 = vunpack.c.l.b16 %v1000
        %v1099 = vunpack.c.l.b16 %v1001
        %v1100 = vunpack.c.l.b16 %v1002
        %v1101 = vunpack.c.l.b16 %v1003
        %v1102 = vunpack.c.l.b16 %v1004
        %v1103 = vunpack.c.l.b16 %v1005
        %v1104 = vunpack.c.l.b16 %v1006
        %v1105 = vpack.c.b16 %v1058, %v1057
        %v1106 = vpack.c.b16 %v1060, %v1059
        %v1107 = vpack.c.b16 %v1062, %v1061
        %v1108 = vpack.c.b16 %v1064, %v1063
        %v1109 = vpack.c.b16 %v1066, %v1065
        %v1110 = vpack.c.b16 %v1068, %v1067
        %v1111 = vpack.c.b16 %v1070, %v1069
        %v1112 = vpack.c.b16 %v1072, %v1071
        %v1113 = vpack.c.b16 %v1074, %v1073
        %v1114 = vpack.c.b16 %v1076, %v1075
        %v1115 = vpack.c.b16 %v1078, %v1077
        %v1116 = vpack.c.b16 %v1080, %v1079
        %v1117 = vpack.c.b16 %v1082, %v1081
        %v1118 = vpack.c.b16 %v1084, %v1083
        %v1119 = vpack.c.b16 %v1086, %v1085
        %v1120 = vpack.c.b16 %v1088, %v1087
        %v1121 = vpack.c.b16 %v1090, %v1089
        %v1122 = vpack.c.b16 %v1092, %v1091
        %v1123 = vpack.c.b16 %v1094, %v1093
        %v1124 = vpack.c.b16 %v1096, %v1095
        %v1125 = vpack.c.b16 %v1098, %v1097
        %v1126 = vpack.c.b16 %v1100, %v1099
        %v1127 = vpack.c.b16 %v1102, %v1101
        %v1128 = vpack.c.b16 %v1104, %v1103
        %v1130 = vsel %vm359, %v1105, 0
        %v1133 = vsel %vm359, %v1106, 0
        %v1136 = vsel %vm359, %v1107, 0
        %v1139 = vsel %vm359, %v1108, 0
        %v1142 = vsel %vm359, %v1109, 0
        %v1145 = vsel %vm359, %v1110, 0
        %v1148 = vsel %vm359, %v1111, 0
        %v1151 = vsel %vm359, %v1112, 0
        %v1154 = vsel %vm359, %v1113, 0
        %v1157 = vsel %vm359, %v1114, 0
        %v1160 = vsel %vm359, %v1115, 0
        %v1163 = vsel %vm359, %v1116, 0
        %v1166 = vsel %vm359, %v1117, 0
        %v1169 = vsel %vm359, %v1118, 0
        %v1172 = vsel %vm359, %v1119, 0
        %v1175 = vsel %vm359, %v1120, 0
        %v1178 = vsel %vm359, %v1121, 0
        %v1181 = vsel %vm359, %v1122, 0
        %v1184 = vsel %vm359, %v1123, 0
        %v1187 = vsel %vm359, %v1124, 0
        %v1190 = vsel %vm359, %v1125, 0
        %v1193 = vsel %vm359, %v1126, 0
        %v1196 = vsel %vm359, %v1127, 0
        %v1199 = vsel %vm359, %v1128, 0
        %v1202 = vsel %vm432, %v1008, 0
        %1204 = vmatprep.subr.bf16.mxu0 0
        %1205 = vmatpush1.bf16.msra.mxu0 %v1202
        %1206 = vmatprep.subr.bf16.mxu0 0
        %1207 = vmatpush1.bf16.msra.mxu0 0
        %1208 = vmatprep.subr.bf16.mxu0 0
        %1209 = vmatpush1.bf16.msra.mxu0 0
        %1210 = vmatprep.subr.bf16.mxu0 0
        %1211 = vmatpush1.bf16.msra.mxu0 0
        %1212 = vmatprep.subr.bf16.mxu0 0
        %1213 = vmatpush1.bf16.msra.mxu0 0
        %1214 = vmatprep.subr.bf16.mxu0 0
        %1215 = vmatpush1.bf16.msra.mxu0 0
        %1216 = vmatprep.subr.bf16.mxu0 0
        %1217 = vmatpush1.bf16.msra.mxu0 0
        %1218 = vmatprep.subr.bf16.mxu0 0
        %1219 = vmatpush1.bf16.msra.mxu0 0
        %1220 = vmatprep.subr.bf16.mxu0 0
        %1221 = vmatpush1.bf16.msra.mxu0 0
        %1222 = vmatprep.subr.bf16.mxu0 0
        %1223 = vmatpush1.bf16.msra.mxu0 0
        %1224 = vmatprep.subr.bf16.mxu0 0
        %1225 = vmatpush1.bf16.msra.mxu0 0
        %1226 = vmatprep.subr.bf16.mxu0 0
        %1227 = vmatpush1.bf16.msra.mxu0 0
        %1228 = vmatprep.subr.bf16.mxu0 0
        %1229 = vmatpush1.bf16.msra.mxu0 0
        %1230 = vmatprep.subr.bf16.mxu0 0
        %1231 = vmatpush1.bf16.msra.mxu0 0
        %1232 = vmatprep.subr.bf16.mxu0 0
        %1233 = vmatpush1.bf16.msra.mxu0 0
        %1234 = vmatprep.subr.bf16.mxu0 0
        %1235 = vmatpush1.bf16.msra.mxu0 0
        %1236 = vmatprep.mubr.bf16.mxu0 0
        %1237 = vmatmul.mubr.bf16.gmra.mrb[0].mxu0 %v1130
        %v1238 = vpop.f32.mrb[0].mxu0
        %v1239 = vadd.f32 0.0, %v1238
        %v1240 = vpop.f32.mrb[0].mxu0
        %v1241 = vpop.f32.mrb[0].mxu0
        %v1242 = vadd.f32 0.0, %v1241
        %v1243 = vpop.f32.mrb[0].mxu0
        %1244 = vmatprep.mubr.bf16.mxu0 0
        %1245 = vmatmul.mubr.bf16.gmra.mrb[0].mxu0 %v1133
        %v1246 = vpop.f32.mrb[0].mxu0
        %v1247 = vpop.f32.mrb[0].mxu0
        %v1248 = vpop.f32.mrb[0].mxu0
        %v1249 = vadd.f32 0.0, %v1248
        %v1250 = vpop.f32.mrb[0].mxu0
        %1251 = vmatprep.mubr.bf16.mxu0 0
        %1252 = vmatmul.mubr.bf16.gmra.mrb[0].mxu0 %v1136
        %v1253 = vpop.f32.mrb[0].mxu0
        %v1254 = vadd.f32 0.0, %v1253
        %v1255 = vpop.f32.mrb[0].mxu0
        %v1256 = vpop.f32.mrb[0].mxu0
        %v1257 = vpop.f32.mrb[0].mxu0
        %1258 = vmatprep.mubr.bf16.mxu0 0
        %1259 = vmatmul.mubr.bf16.gmra.mrb[0].mxu0 %v1139
        %v1260 = vpop.f32.mrb[0].mxu0
        %v1261 = vadd.f32 0.0, %v1260
        %v1262 = vpop.f32.mrb[0].mxu0
        %v1263 = vpop.f32.mrb[0].mxu0
        %v1264 = vadd.f32 0.0, %v1263
        %v1265 = vpop.f32.mrb[0].mxu0
        %1266 = vmatprep.mubr.bf16.mxu0 0
        %1267 = vmatmul.mubr.bf16.gmra.mrb[0].mxu0 %v1142
        %v1268 = vpop.f32.mrb[0].mxu0
        %v1269 = vpop.f32.mrb[0].mxu0
        %v1270 = vpop.f32.mrb[0].mxu0
        %v1271 = vadd.f32 0.0, %v1270
        %v1272 = vpop.f32.mrb[0].mxu0
        %1273 = vmatprep.mubr.bf16.mxu0 0
        %1274 = vmatmul.mubr.bf16.gmra.mrb[0].mxu0 %v1145
        %v1275 = vpop.f32.mrb[0].mxu0
        %v1276 = vadd.f32 0.0, %v1275
        %v1277 = vpop.f32.mrb[0].mxu0
        %v1278 = vpop.f32.mrb[0].mxu0
        %v1279 = vpop.f32.mrb[0].mxu0
        %1280 = vmatprep.mubr.bf16.mxu0 0
        %1281 = vmatmul.mubr.bf16.gmra.mrb[0].mxu0 %v1148
        %v1282 = vpop.f32.mrb[0].mxu0
        %v1283 = vadd.f32 0.0, %v1282
        %v1284 = vpop.f32.mrb[0].mxu0
        %v1285 = vpop.f32.mrb[0].mxu0
        %v1286 = vadd.f32 0.0, %v1285
        %v1287 = vpop.f32.mrb[0].mxu0
        %1288 = vmatprep.mubr.bf16.mxu0 0
        %1289 = vmatmul.mubr.bf16.gmra.mrb[0].mxu0 %v1151
        %v1290 = vpop.f32.mrb[0].mxu0
        %v1291 = vpop.f32.mrb[0].mxu0
        %v1292 = vpop.f32.mrb[0].mxu0
        %v1293 = vadd.f32 0.0, %v1292
        %v1294 = vpop.f32.mrb[0].mxu0
        %1295 = vmatprep.mubr.bf16.mxu0 0
        %1296 = vmatmul.mubr.bf16.gmra.mrb[0].mxu0 %v1154
        %v1297 = vpop.f32.mrb[0].mxu0
        %v1298 = vadd.f32 0.0, %v1297
        %v1299 = vpop.f32.mrb[0].mxu0
        %v1300 = vpop.f32.mrb[0].mxu0
        %v1301 = vpop.f32.mrb[0].mxu0
        %1302 = vmatprep.mubr.bf16.mxu0 0
        %1303 = vmatmul.mubr.bf16.gmra.mrb[0].mxu0 %v1157
        %v1304 = vpop.f32.mrb[0].mxu0
        %v1305 = vadd.f32 0.0, %v1304
        %v1306 = vpop.f32.mrb[0].mxu0
        %v1307 = vpop.f32.mrb[0].mxu0
        %v1308 = vadd.f32 0.0, %v1307
        %v1309 = vpop.f32.mrb[0].mxu0
        %1310 = vmatprep.mubr.bf16.mxu0 0
        %1311 = vmatmul.mubr.bf16.gmra.mrb[0].mxu0 %v1160
        %v1312 = vpop.f32.mrb[0].mxu0
        %v1313 = vpop.f32.mrb[0].mxu0
        %v1314 = vpop.f32.mrb[0].mxu0
        %v1315 = vadd.f32 0.0, %v1314
        %v1316 = vpop.f32.mrb[0].mxu0
        %1317 = vmatprep.mubr.bf16.mxu0 0
        %1318 = vmatmul.mubr.bf16.gmra.mrb[0].mxu0 %v1163
        %v1319 = vpop.f32.mrb[0].mxu0
        %v1320 = vadd.f32 0.0, %v1319
        %v1321 = vpop.f32.mrb[0].mxu0
        %v1322 = vpop.f32.mrb[0].mxu0
        %v1323 = vpop.f32.mrb[0].mxu0
        %1324 = vmatprep.mubr.bf16.mxu0 0
        %1325 = vmatmul.mubr.bf16.gmra.mrb[0].mxu0 %v1166
        %v1326 = vpop.f32.mrb[0].mxu0
        %v1327 = vadd.f32 0.0, %v1326
        %v1328 = vpop.f32.mrb[0].mxu0
        %v1329 = vpop.f32.mrb[0].mxu0
        %v1330 = vadd.f32 0.0, %v1329
        %v1331 = vpop.f32.mrb[0].mxu0
        %1332 = vmatprep.mubr.bf16.mxu0 0
        %1333 = vmatmul.mubr.bf16.gmra.mrb[0].mxu0 %v1169
        %v1334 = vpop.f32.mrb[0].mxu0
        %v1335 = vpop.f32.mrb[0].mxu0
        %v1336 = vpop.f32.mrb[0].mxu0
        %v1337 = vadd.f32 0.0, %v1336
        %v1338 = vpop.f32.mrb[0].mxu0
        %1339 = vmatprep.mubr.bf16.mxu0 0
        %1340 = vmatmul.mubr.bf16.gmra.mrb[0].mxu0 %v1172
        %v1341 = vpop.f32.mrb[0].mxu0
        %v1342 = vadd.f32 0.0, %v1341
        %v1343 = vpop.f32.mrb[0].mxu0
        %v1344 = vpop.f32.mrb[0].mxu0
        %v1345 = vpop.f32.mrb[0].mxu0
        %1346 = vmatprep.mubr.bf16.mxu0 0
        %1347 = vmatmul.mubr.bf16.gmra.mrb[0].mxu0 %v1175
        %v1348 = vpop.f32.mrb[0].mxu0
        %v1349 = vadd.f32 0.0, %v1348
        %v1350 = vpop.f32.mrb[0].mxu0
        %v1351 = vpop.f32.mrb[0].mxu0
        %v1352 = vadd.f32 0.0, %v1351
        %v1353 = vpop.f32.mrb[0].mxu0
        %1354 = vmatprep.mubr.bf16.mxu0 0
        %1355 = vmatmul.mubr.bf16.gmra.mrb[0].mxu0 %v1178
        %v1356 = vpop.f32.mrb[0].mxu0
        %v1357 = vpop.f32.mrb[0].mxu0
        %v1358 = vpop.f32.mrb[0].mxu0
        %v1359 = vadd.f32 0.0, %v1358
        %v1360 = vpop.f32.mrb[0].mxu0
        %1361 = vmatprep.mubr.bf16.mxu0 0
        %1362 = vmatmul.mubr.bf16.gmra.mrb[0].mxu0 %v1181
        %v1363 = vpop.f32.mrb[0].mxu0
        %v1364 = vadd.f32 0.0, %v1363
        %v1365 = vpop.f32.mrb[0].mxu0
        %v1366 = vpop.f32.mrb[0].mxu0
        %v1367 = vpop.f32.mrb[0].mxu0
        %1368 = vmatprep.mubr.bf16.mxu0 0
        %1369 = vmatmul.mubr.bf16.gmra.mrb[0].mxu0 %v1184
        %v1370 = vpop.f32.mrb[0].mxu0
        %v1371 = vadd.f32 0.0, %v1370
        %v1372 = vpop.f32.mrb[0].mxu0
        %v1373 = vpop.f32.mrb[0].mxu0
        %v1374 = vadd.f32 0.0, %v1373
        %v1375 = vpop.f32.mrb[0].mxu0
        %1376 = vmatprep.mubr.bf16.mxu0 0
        %1377 = vmatmul.mubr.bf16.gmra.mrb[0].mxu0 %v1187
        %v1378 = vpop.f32.mrb[0].mxu0
        %v1379 = vpop.f32.mrb[0].mxu0
        %v1380 = vpop.f32.mrb[0].mxu0
        %v1381 = vadd.f32 0.0, %v1380
        %v1382 = vpop.f32.mrb[0].mxu0
        %1383 = vmatprep.mubr.bf16.mxu0 0
        %1384 = vmatmul.mubr.bf16.gmra.mrb[0].mxu0 %v1190
        %v1385 = vpop.f32.mrb[0].mxu0
        %v1386 = vadd.f32 0.0, %v1385
        %v1387 = vpop.f32.mrb[0].mxu0
        %v1388 = vpop.f32.mrb[0].mxu0
        %v1389 = vpop.f32.mrb[0].mxu0
        %1390 = vmatprep.mubr.bf16.mxu0 0
        %1391 = vmatmul.mubr.bf16.gmra.mrb[0].mxu0 %v1193
        %v1392 = vpop.f32.mrb[0].mxu0
        %v1393 = vadd.f32 0.0, %v1392
        %v1394 = vpop.f32.mrb[0].mxu0
        %v1395 = vpop.f32.mrb[0].mxu0
        %v1396 = vadd.f32 0.0, %v1395
        %v1397 = vpop.f32.mrb[0].mxu0
        %1398 = vmatprep.mubr.bf16.mxu0 0
        %1399 = vmatmul.mubr.bf16.gmra.mrb[0].mxu0 %v1196
        %v1400 = vpop.f32.mrb[0].mxu0
        %v1401 = vpop.f32.mrb[0].mxu0
        %v1402 = vpop.f32.mrb[0].mxu0
        %v1403 = vadd.f32 0.0, %v1402
        %v1404 = vpop.f32.mrb[0].mxu0
        %1405 = vmatprep.mubr.bf16.mxu0 0
        %1406 = vmatmul.mubr.bf16.gmra.mrb[0].mxu0 %v1199
        %v1407 = vpop.f32.mrb[0].mxu0
        %v1408 = vadd.f32 0.0, %v1407
        %v1409 = vpop.f32.mrb[0].mxu0
        %v1410 = vpop.f32.mrb[0].mxu0
        %v1411 = vpop.f32.mrb[0].mxu0
        %1412 = vdwg.mxu0
        %v1413 = vadd.f32 %v785, %v1239
        %v1414 = vadd.f32 %v788, %v1242
        %v1415 = vadd.f32 %v795, %v1249
        %v1416 = vadd.f32 %v800, %v1254
        %v1417 = vadd.f32 %v807, %v1261
        %v1418 = vadd.f32 %v810, %v1264
        %v1419 = vadd.f32 %v817, %v1271
        %v1420 = vadd.f32 %v822, %v1276
        %v1421 = vadd.f32 %v829, %v1283
        %v1422 = vadd.f32 %v832, %v1286
        %v1423 = vadd.f32 %v839, %v1293
        %v1424 = vadd.f32 %v844, %v1298
        %v1425 = vadd.f32 %v851, %v1305
        %v1426 = vadd.f32 %v854, %v1308
        %v1427 = vadd.f32 %v861, %v1315
        %v1428 = vadd.f32 %v866, %v1320
        %v1429 = vadd.f32 %v873, %v1327
        %v1430 = vadd.f32 %v876, %v1330
        %v1431 = vadd.f32 %v883, %v1337
        %v1432 = vadd.f32 %v888, %v1342
        %v1433 = vadd.f32 %v895, %v1349
        %v1434 = vadd.f32 %v898, %v1352
        %v1435 = vadd.f32 %v905, %v1359
        %v1436 = vadd.f32 %v910, %v1364
        %v1437 = vadd.f32 %v917, %v1371
        %v1438 = vadd.f32 %v920, %v1374
        %v1439 = vadd.f32 %v927, %v1381
        %v1440 = vadd.f32 %v932, %v1386
        %v1441 = vadd.f32 %v939, %v1393
        %v1442 = vadd.f32 %v942, %v1396
        %v1443 = vadd.f32 %v949, %v1403
        %v1444 = vadd.f32 %v954, %v1408
        %s1445 = scalar_lea.vmem %s1, 4
        %v1446 = vld [vmem:[%s1445] sm:$0xf]
        %s1447 = scalar_lea.vmem %s1, 16
        %v1448 = vld [vmem:[%s1447] sm:$0xf]
        %v1450 = vsel %vm432, %v1448, 0
        %1452 = vmatprep.subr.bf16.mxu0 0
        %1453 = vmatpush1.bf16.msra.mxu0 %v1450
        %1454 = vmatprep.subr.bf16.mxu0 0
        %1455 = vmatpush1.bf16.msra.mxu0 0
        %1456 = vmatprep.subr.bf16.mxu0 0
        %1457 = vmatpush1.bf16.msra.mxu0 0
        %1458 = vmatprep.subr.bf16.mxu0 0
        %1459 = vmatpush1.bf16.msra.mxu0 0
        %1460 = vmatprep.subr.bf16.mxu0 0
        %1461 = vmatpush1.bf16.msra.mxu0 0
        %1462 = vmatprep.subr.bf16.mxu0 0
        %1463 = vmatpush1.bf16.msra.mxu0 0
        %1464 = vmatprep.subr.bf16.mxu0 0
        %1465 = vmatpush1.bf16.msra.mxu0 0
        %1466 = vmatprep.subr.bf16.mxu0 0
        %1467 = vmatpush1.bf16.msra.mxu0 0
        %1468 = vmatprep.subr.bf16.mxu0 0
        %1469 = vmatpush1.bf16.msra.mxu0 0
        %1470 = vmatprep.subr.bf16.mxu0 0
        %1471 = vmatpush1.bf16.msra.mxu0 0
        %1472 = vmatprep.subr.bf16.mxu0 0
        %1473 = vmatpush1.bf16.msra.mxu0 0
        %1474 = vmatprep.subr.bf16.mxu0 0
        %1475 = vmatpush1.bf16.msra.mxu0 0
        %1476 = vmatprep.subr.bf16.mxu0 0
        %1477 = vmatpush1.bf16.msra.mxu0 0
        %1478 = vmatprep.subr.bf16.mxu0 0
        %1479 = vmatpush1.bf16.msra.mxu0 0
        %1480 = vmatprep.subr.bf16.mxu0 0
        %1481 = vmatpush1.bf16.msra.mxu0 0
        %1482 = vmatprep.subr.bf16.mxu0 0
        %1483 = vmatpush1.bf16.msra.mxu0 0
        %1484 = vmatprep.mubr.bf16.mxu0 0
        %1485 = vmatmul.mubr.bf16.gmra.mrb[0].mxu0 %v361
        %v1486 = vpop.f32.mrb[0].mxu0
        %v1487 = vadd.f32 0.0, %v1486
        %v1488 = vpop.f32.mrb[0].mxu0
        %v1489 = vpop.f32.mrb[0].mxu0
        %v1490 = vadd.f32 0.0, %v1489
        %v1491 = vpop.f32.mrb[0].mxu0
        %1492 = vmatprep.mubr.bf16.mxu0 0
        %1493 = vmatmul.mubr.bf16.gmra.mrb[0].mxu0 %v364
        %v1494 = vpop.f32.mrb[0].mxu0
        %v1495 = vadd.f32 0.0, %v1494
        %v1496 = vpop.f32.mrb[0].mxu0
        %v1497 = vpop.f32.mrb[0].mxu0
        %v1498 = vadd.f32 0.0, %v1497
        %v1499 = vpop.f32.mrb[0].mxu0
        %1500 = vmatprep.mubr.bf16.mxu0 0
        %1501 = vmatmul.mubr.bf16.gmra.mrb[0].mxu0 %v367
        %v1502 = vpop.f32.mrb[0].mxu0
        %v1503 = vadd.f32 0.0, %v1502
        %v1504 = vpop.f32.mrb[0].mxu0
        %v1505 = vpop.f32.mrb[0].mxu0
        %v1506 = vadd.f32 0.0, %v1505
        %v1507 = vpop.f32.mrb[0].mxu0
        %1508 = vmatprep.mubr.bf16.mxu0 0
        %1509 = vmatmul.mubr.bf16.gmra.mrb[0].mxu0 %v370
        %v1510 = vpop.f32.mrb[0].mxu0
        %v1511 = vadd.f32 0.0, %v1510
        %v1512 = vpop.f32.mrb[0].mxu0
        %v1513 = vpop.f32.mrb[0].mxu0
        %v1514 = vadd.f32 0.0, %v1513
        %v1515 = vpop.f32.mrb[0].mxu0
        %1516 = vmatprep.mubr.bf16.mxu0 0
        %1517 = vmatmul.mubr.bf16.gmra.mrb[0].mxu0 %v373
        %v1518 = vpop.f32.mrb[0].mxu0
        %v1519 = vadd.f32 0.0, %v1518
        %v1520 = vpop.f32.mrb[0].mxu0
        %v1521 = vpop.f32.mrb[0].mxu0
        %v1522 = vadd.f32 0.0, %v1521
        %v1523 = vpop.f32.mrb[0].mxu0
        %1524 = vmatprep.mubr.bf16.mxu0 0
        %1525 = vmatmul.mubr.bf16.gmra.mrb[0].mxu0 %v376
        %v1526 = vpop.f32.mrb[0].mxu0
        %v1527 = vadd.f32 0.0, %v1526
        %v1528 = vpop.f32.mrb[0].mxu0
        %v1529 = vpop.f32.mrb[0].mxu0
        %v1530 = vadd.f32 0.0, %v1529
        %v1531 = vpop.f32.mrb[0].mxu0
        %1532 = vmatprep.mubr.bf16.mxu0 0
        %1533 = vmatmul.mubr.bf16.gmra.mrb[0].mxu0 %v379
        %v1534 = vpop.f32.mrb[0].mxu0
        %v1535 = vadd.f32 0.0, %v1534
        %v1536 = vpop.f32.mrb[0].mxu0
        %v1537 = vpop.f32.mrb[0].mxu0
        %v1538 = vadd.f32 0.0, %v1537
        %v1539 = vpop.f32.mrb[0].mxu0
        %1540 = vmatprep.mubr.bf16.mxu0 0
        %1541 = vmatmul.mubr.bf16.gmra.mrb[0].mxu0 %v382
        %v1542 = vpop.f32.mrb[0].mxu0
        %v1543 = vadd.f32 0.0, %v1542
        %v1544 = vpop.f32.mrb[0].mxu0
        %v1545 = vpop.f32.mrb[0].mxu0
        %v1546 = vadd.f32 0.0, %v1545
        %v1547 = vpop.f32.mrb[0].mxu0
        %1548 = vmatprep.mubr.bf16.mxu0 0
        %1549 = vmatmul.mubr.bf16.gmra.mrb[0].mxu0 %v385
        %v1550 = vpop.f32.mrb[0].mxu0
        %v1551 = vadd.f32 0.0, %v1550
        %v1552 = vpop.f32.mrb[0].mxu0
        %v1553 = vpop.f32.mrb[0].mxu0
        %v1554 = vadd.f32 0.0, %v1553
        %v1555 = vpop.f32.mrb[0].mxu0
        %1556 = vmatprep.mubr.bf16.mxu0 0
        %1557 = vmatmul.mubr.bf16.gmra.mrb[0].mxu0 %v388
        %v1558 = vpop.f32.mrb[0].mxu0
        %v1559 = vadd.f32 0.0, %v1558
        %v1560 = vpop.f32.mrb[0].mxu0
        %v1561 = vpop.f32.mrb[0].mxu0
        %v1562 = vadd.f32 0.0, %v1561
        %v1563 = vpop.f32.mrb[0].mxu0
        %1564 = vmatprep.mubr.bf16.mxu0 0
        %1565 = vmatmul.mubr.bf16.gmra.mrb[0].mxu0 %v391
        %v1566 = vpop.f32.mrb[0].mxu0
        %v1567 = vadd.f32 0.0, %v1566
        %v1568 = vpop.f32.mrb[0].mxu0
        %v1569 = vpop.f32.mrb[0].mxu0
        %v1570 = vadd.f32 0.0, %v1569
        %v1571 = vpop.f32.mrb[0].mxu0
        %1572 = vmatprep.mubr.bf16.mxu0 0
        %1573 = vmatmul.mubr.bf16.gmra.mrb[0].mxu0 %v394
        %v1574 = vpop.f32.mrb[0].mxu0
        %v1575 = vadd.f32 0.0, %v1574
        %v1576 = vpop.f32.mrb[0].mxu0
        %v1577 = vpop.f32.mrb[0].mxu0
        %v1578 = vadd.f32 0.0, %v1577
        %v1579 = vpop.f32.mrb[0].mxu0
        %1580 = vmatprep.mubr.bf16.mxu0 0
        %1581 = vmatmul.mubr.bf16.gmra.mrb[0].mxu0 %v397
        %v1582 = vpop.f32.mrb[0].mxu0
        %v1583 = vadd.f32 0.0, %v1582
        %v1584 = vpop.f32.mrb[0].mxu0
        %v1585 = vpop.f32.mrb[0].mxu0
        %v1586 = vadd.f32 0.0, %v1585
        %v1587 = vpop.f32.mrb[0].mxu0
        %1588 = vmatprep.mubr.bf16.mxu0 0
        %1589 = vmatmul.mubr.bf16.gmra.mrb[0].mxu0 %v400
        %v1590 = vpop.f32.mrb[0].mxu0
        %v1591 = vadd.f32 0.0, %v1590
        %v1592 = vpop.f32.mrb[0].mxu0
        %v1593 = vpop.f32.mrb[0].mxu0
        %v1594 = vadd.f32 0.0, %v1593
        %v1595 = vpop.f32.mrb[0].mxu0
        %1596 = vmatprep.mubr.bf16.mxu0 0
        %1597 = vmatmul.mubr.bf16.gmra.mrb[0].mxu0 %v403
        %v1598 = vpop.f32.mrb[0].mxu0
        %v1599 = vadd.f32 0.0, %v1598
        %v1600 = vpop.f32.mrb[0].mxu0
        %v1601 = vpop.f32.mrb[0].mxu0
        %v1602 = vadd.f32 0.0, %v1601
        %v1603 = vpop.f32.mrb[0].mxu0
        %1604 = vmatprep.mubr.bf16.mxu0 0
        %1605 = vmatmul.mubr.bf16.gmra.mrb[0].mxu0 %v406
        %v1606 = vpop.f32.mrb[0].mxu0
        %v1607 = vadd.f32 0.0, %v1606
        %v1608 = vpop.f32.mrb[0].mxu0
        %v1609 = vpop.f32.mrb[0].mxu0
        %v1610 = vadd.f32 0.0, %v1609
        %v1611 = vpop.f32.mrb[0].mxu0
        %1612 = vmatprep.mubr.bf16.mxu0 0
        %1613 = vmatmul.mubr.bf16.gmra.mrb[0].mxu0 %v409
        %v1614 = vpop.f32.mrb[0].mxu0
        %v1615 = vadd.f32 0.0, %v1614
        %v1616 = vpop.f32.mrb[0].mxu0
        %v1617 = vpop.f32.mrb[0].mxu0
        %v1618 = vadd.f32 0.0, %v1617
        %v1619 = vpop.f32.mrb[0].mxu0
        %1620 = vmatprep.mubr.bf16.mxu0 0
        %1621 = vmatmul.mubr.bf16.gmra.mrb[0].mxu0 %v412
        %v1622 = vpop.f32.mrb[0].mxu0
        %v1623 = vadd.f32 0.0, %v1622
        %v1624 = vpop.f32.mrb[0].mxu0
        %v1625 = vpop.f32.mrb[0].mxu0
        %v1626 = vadd.f32 0.0, %v1625
        %v1627 = vpop.f32.mrb[0].mxu0
        %1628 = vmatprep.mubr.bf16.mxu0 0
        %1629 = vmatmul.mubr.bf16.gmra.mrb[0].mxu0 %v415
        %v1630 = vpop.f32.mrb[0].mxu0
        %v1631 = vadd.f32 0.0, %v1630
        %v1632 = vpop.f32.mrb[0].mxu0
        %v1633 = vpop.f32.mrb[0].mxu0
        %v1634 = vadd.f32 0.0, %v1633
        %v1635 = vpop.f32.mrb[0].mxu0
        %1636 = vmatprep.mubr.bf16.mxu0 0
        %1637 = vmatmul.mubr.bf16.gmra.mrb[0].mxu0 %v418
        %v1638 = vpop.f32.mrb[0].mxu0
        %v1639 = vadd.f32 0.0, %v1638
        %v1640 = vpop.f32.mrb[0].mxu0
        %v1641 = vpop.f32.mrb[0].mxu0
        %v1642 = vadd.f32 0.0, %v1641
        %v1643 = vpop.f32.mrb[0].mxu0
        %1644 = vmatprep.mubr.bf16.mxu0 0
        %1645 = vmatmul.mubr.bf16.gmra.mrb[0].mxu0 %v421
        %v1646 = vpop.f32.mrb[0].mxu0
        %v1647 = vadd.f32 0.0, %v1646
        %v1648 = vpop.f32.mrb[0].mxu0
        %v1649 = vpop.f32.mrb[0].mxu0
        %v1650 = vadd.f32 0.0, %v1649
        %v1651 = vpop.f32.mrb[0].mxu0
        %1652 = vmatprep.mubr.bf16.mxu0 0
        %1653 = vmatmul.mubr.bf16.gmra.mrb[0].mxu0 %v424
        %v1654 = vpop.f32.mrb[0].mxu0
        %v1655 = vadd.f32 0.0, %v1654
        %v1656 = vpop.f32.mrb[0].mxu0
        %v1657 = vpop.f32.mrb[0].mxu0
        %v1658 = vadd.f32 0.0, %v1657
        %v1659 = vpop.f32.mrb[0].mxu0
        %1660 = vmatprep.mubr.bf16.mxu0 0
        %1661 = vmatmul.mubr.bf16.gmra.mrb[0].mxu0 %v427
        %v1662 = vpop.f32.mrb[0].mxu0
        %v1663 = vadd.f32 0.0, %v1662
        %v1664 = vpop.f32.mrb[0].mxu0
        %v1665 = vpop.f32.mrb[0].mxu0
        %v1666 = vadd.f32 0.0, %v1665
        %v1667 = vpop.f32.mrb[0].mxu0
        %1668 = vmatprep.mubr.bf16.mxu0 0
        %1669 = vmatmul.mubr.bf16.gmra.mrb[0].mxu0 %v430
        %v1670 = vpop.f32.mrb[0].mxu0
        %v1671 = vadd.f32 0.0, %v1670
        %v1672 = vpop.f32.mrb[0].mxu0
        %v1673 = vpop.f32.mrb[0].mxu0
        %v1674 = vadd.f32 0.0, %v1673
        %v1675 = vpop.f32.mrb[0].mxu0
        %1676 = vdwg.mxu0
        %v1678 = vsel %vm432, %v1446, 0
        %1680 = vmatprep.subr.bf16.mxu0 0
        %1681 = vmatpush1.bf16.msra.mxu0 %v1678
        %1682 = vmatprep.subr.bf16.mxu0 0
        %1683 = vmatpush1.bf16.msra.mxu0 0
        %1684 = vmatprep.subr.bf16.mxu0 0
        %1685 = vmatpush1.bf16.msra.mxu0 0
        %1686 = vmatprep.subr.bf16.mxu0 0
        %1687 = vmatpush1.bf16.msra.mxu0 0
        %1688 = vmatprep.subr.bf16.mxu0 0
        %1689 = vmatpush1.bf16.msra.mxu0 0
        %1690 = vmatprep.subr.bf16.mxu0 0
        %1691 = vmatpush1.bf16.msra.mxu0 0
        %1692 = vmatprep.subr.bf16.mxu0 0
        %1693 = vmatpush1.bf16.msra.mxu0 0
        %1694 = vmatprep.subr.bf16.mxu0 0
        %1695 = vmatpush1.bf16.msra.mxu0 0
        %1696 = vmatprep.subr.bf16.mxu0 0
        %1697 = vmatpush1.bf16.msra.mxu0 0
        %1698 = vmatprep.subr.bf16.mxu0 0
        %1699 = vmatpush1.bf16.msra.mxu0 0
        %1700 = vmatprep.subr.bf16.mxu0 0
        %1701 = vmatpush1.bf16.msra.mxu0 0
        %1702 = vmatprep.subr.bf16.mxu0 0
        %1703 = vmatpush1.bf16.msra.mxu0 0
        %1704 = vmatprep.subr.bf16.mxu0 0
        %1705 = vmatpush1.bf16.msra.mxu0 0
        %1706 = vmatprep.subr.bf16.mxu0 0
        %1707 = vmatpush1.bf16.msra.mxu0 0
        %1708 = vmatprep.subr.bf16.mxu0 0
        %1709 = vmatpush1.bf16.msra.mxu0 0
        %1710 = vmatprep.subr.bf16.mxu0 0
        %1711 = vmatpush1.bf16.msra.mxu0 0
        %1712 = vmatprep.mubr.bf16.mxu0 0
        %1713 = vmatmul.mubr.bf16.gmra.mrb[0].mxu0 %v676
        %v1714 = vpop.f32.mrb[0].mxu0
        %v1715 = vadd.f32 %v1487, %v1714
        %v1716 = vpop.f32.mrb[0].mxu0
        %v1717 = vpop.f32.mrb[0].mxu0
        %v1718 = vadd.f32 %v1490, %v1717
        %v1719 = vpop.f32.mrb[0].mxu0
        %1720 = vmatprep.mubr.bf16.mxu0 0
        %1721 = vmatmul.mubr.bf16.gmra.mrb[0].mxu0 %v679
        %v1722 = vpop.f32.mrb[0].mxu0
        %v1723 = vadd.f32 %v1495, %v1722
        %v1724 = vpop.f32.mrb[0].mxu0
        %v1725 = vpop.f32.mrb[0].mxu0
        %v1726 = vadd.f32 %v1498, %v1725
        %v1727 = vpop.f32.mrb[0].mxu0
        %1728 = vmatprep.mubr.bf16.mxu0 0
        %1729 = vmatmul.mubr.bf16.gmra.mrb[0].mxu0 %v682
        %v1730 = vpop.f32.mrb[0].mxu0
        %v1731 = vadd.f32 %v1503, %v1730
        %v1732 = vpop.f32.mrb[0].mxu0
        %v1733 = vpop.f32.mrb[0].mxu0
        %v1734 = vadd.f32 %v1506, %v1733
        %v1735 = vpop.f32.mrb[0].mxu0
        %1736 = vmatprep.mubr.bf16.mxu0 0
        %1737 = vmatmul.mubr.bf16.gmra.mrb[0].mxu0 %v685
        %v1738 = vpop.f32.mrb[0].mxu0
        %v1739 = vadd.f32 %v1511, %v1738
        %v1740 = vpop.f32.mrb[0].mxu0
        %v1741 = vpop.f32.mrb[0].mxu0
        %v1742 = vadd.f32 %v1514, %v1741
        %v1743 = vpop.f32.mrb[0].mxu0
        %1744 = vmatprep.mubr.bf16.mxu0 0
        %1745 = vmatmul.mubr.bf16.gmra.mrb[0].mxu0 %v688
        %v1746 = vpop.f32.mrb[0].mxu0
        %v1747 = vadd.f32 %v1519, %v1746
        %v1748 = vpop.f32.mrb[0].mxu0
        %v1749 = vpop.f32.mrb[0].mxu0
        %v1750 = vadd.f32 %v1522, %v1749
        %v1751 = vpop.f32.mrb[0].mxu0
        %1752 = vmatprep.mubr.bf16.mxu0 0
        %1753 = vmatmul.mubr.bf16.gmra.mrb[0].mxu0 %v691
        %v1754 = vpop.f32.mrb[0].mxu0
        %v1755 = vadd.f32 %v1527, %v1754
        %v1756 = vpop.f32.mrb[0].mxu0
        %v1757 = vpop.f32.mrb[0].mxu0
        %v1758 = vadd.f32 %v1530, %v1757
        %v1759 = vpop.f32.mrb[0].mxu0
        %1760 = vmatprep.mubr.bf16.mxu0 0
        %1761 = vmatmul.mubr.bf16.gmra.mrb[0].mxu0 %v694
        %v1762 = vpop.f32.mrb[0].mxu0
        %v1763 = vadd.f32 %v1535, %v1762
        %v1764 = vpop.f32.mrb[0].mxu0
        %v1765 = vpop.f32.mrb[0].mxu0
        %v1766 = vadd.f32 %v1538, %v1765
        %v1767 = vpop.f32.mrb[0].mxu0
        %1768 = vmatprep.mubr.bf16.mxu0 0
        %1769 = vmatmul.mubr.bf16.gmra.mrb[0].mxu0 %v697
        %v1770 = vpop.f32.mrb[0].mxu0
        %v1771 = vadd.f32 %v1543, %v1770
        %v1772 = vpop.f32.mrb[0].mxu0
        %v1773 = vpop.f32.mrb[0].mxu0
        %v1774 = vadd.f32 %v1546, %v1773
        %v1775 = vpop.f32.mrb[0].mxu0
        %1776 = vmatprep.mubr.bf16.mxu0 0
        %1777 = vmatmul.mubr.bf16.gmra.mrb[0].mxu0 %v700
        %v1778 = vpop.f32.mrb[0].mxu0
        %v1779 = vadd.f32 %v1551, %v1778
        %v1780 = vpop.f32.mrb[0].mxu0
        %v1781 = vpop.f32.mrb[0].mxu0
        %v1782 = vadd.f32 %v1554, %v1781
        %v1783 = vpop.f32.mrb[0].mxu0
        %1784 = vmatprep.mubr.bf16.mxu0 0
        %1785 = vmatmul.mubr.bf16.gmra.mrb[0].mxu0 %v703
        %v1786 = vpop.f32.mrb[0].mxu0
        %v1787 = vadd.f32 %v1559, %v1786
        %v1788 = vpop.f32.mrb[0].mxu0
        %v1789 = vpop.f32.mrb[0].mxu0
        %v1790 = vadd.f32 %v1562, %v1789
        %v1791 = vpop.f32.mrb[0].mxu0
        %1792 = vmatprep.mubr.bf16.mxu0 0
        %1793 = vmatmul.mubr.bf16.gmra.mrb[0].mxu0 %v706
        %v1794 = vpop.f32.mrb[0].mxu0
        %v1795 = vadd.f32 %v1567, %v1794
        %v1796 = vpop.f32.mrb[0].mxu0
        %v1797 = vpop.f32.mrb[0].mxu0
        %v1798 = vadd.f32 %v1570, %v1797
        %v1799 = vpop.f32.mrb[0].mxu0
        %1800 = vmatprep.mubr.bf16.mxu0 0
        %1801 = vmatmul.mubr.bf16.gmra.mrb[0].mxu0 %v709
        %v1802 = vpop.f32.mrb[0].mxu0
        %v1803 = vadd.f32 %v1575, %v1802
        %v1804 = vpop.f32.mrb[0].mxu0
        %v1805 = vpop.f32.mrb[0].mxu0
        %v1806 = vadd.f32 %v1578, %v1805
        %v1807 = vpop.f32.mrb[0].mxu0
        %1808 = vmatprep.mubr.bf16.mxu0 0
        %1809 = vmatmul.mubr.bf16.gmra.mrb[0].mxu0 %v712
        %v1810 = vpop.f32.mrb[0].mxu0
        %v1811 = vadd.f32 %v1583, %v1810
        %v1812 = vpop.f32.mrb[0].mxu0
        %v1813 = vpop.f32.mrb[0].mxu0
        %v1814 = vadd.f32 %v1586, %v1813
        %v1815 = vpop.f32.mrb[0].mxu0
        %1816 = vmatprep.mubr.bf16.mxu0 0
        %1817 = vmatmul.mubr.bf16.gmra.mrb[0].mxu0 %v715
        %v1818 = vpop.f32.mrb[0].mxu0
        %v1819 = vadd.f32 %v1591, %v1818
        %v1820 = vpop.f32.mrb[0].mxu0
        %v1821 = vpop.f32.mrb[0].mxu0
        %v1822 = vadd.f32 %v1594, %v1821
        %v1823 = vpop.f32.mrb[0].mxu0
        %1824 = vmatprep.mubr.bf16.mxu0 0
        %1825 = vmatmul.mubr.bf16.gmra.mrb[0].mxu0 %v718
        %v1826 = vpop.f32.mrb[0].mxu0
        %v1827 = vadd.f32 %v1599, %v1826
        %v1828 = vpop.f32.mrb[0].mxu0
        %v1829 = vpop.f32.mrb[0].mxu0
        %v1830 = vadd.f32 %v1602, %v1829
        %v1831 = vpop.f32.mrb[0].mxu0
        %1832 = vmatprep.mubr.bf16.mxu0 0
        %1833 = vmatmul.mubr.bf16.gmra.mrb[0].mxu0 %v721
        %v1834 = vpop.f32.mrb[0].mxu0
        %v1835 = vadd.f32 %v1607, %v1834
        %v1836 = vpop.f32.mrb[0].mxu0
        %v1837 = vpop.f32.mrb[0].mxu0
        %v1838 = vadd.f32 %v1610, %v1837
        %v1839 = vpop.f32.mrb[0].mxu0
        %1840 = vmatprep.mubr.bf16.mxu0 0
        %1841 = vmatmul.mubr.bf16.gmra.mrb[0].mxu0 %v724
        %v1842 = vpop.f32.mrb[0].mxu0
        %v1843 = vadd.f32 %v1615, %v1842
        %v1844 = vpop.f32.mrb[0].mxu0
        %v1845 = vpop.f32.mrb[0].mxu0
        %v1846 = vadd.f32 %v1618, %v1845
        %v1847 = vpop.f32.mrb[0].mxu0
        %1848 = vmatprep.mubr.bf16.mxu0 0
        %1849 = vmatmul.mubr.bf16.gmra.mrb[0].mxu0 %v727
        %v1850 = vpop.f32.mrb[0].mxu0
        %v1851 = vadd.f32 %v1623, %v1850
        %v1852 = vpop.f32.mrb[0].mxu0
        %v1853 = vpop.f32.mrb[0].mxu0
        %v1854 = vadd.f32 %v1626, %v1853
        %v1855 = vpop.f32.mrb[0].mxu0
        %1856 = vmatprep.mubr.bf16.mxu0 0
        %1857 = vmatmul.mubr.bf16.gmra.mrb[0].mxu0 %v730
        %v1858 = vpop.f32.mrb[0].mxu0
        %v1859 = vadd.f32 %v1631, %v1858
        %v1860 = vpop.f32.mrb[0].mxu0
        %v1861 = vpop.f32.mrb[0].mxu0
        %v1862 = vadd.f32 %v1634, %v1861
        %v1863 = vpop.f32.mrb[0].mxu0
        %1864 = vmatprep.mubr.bf16.mxu0 0
        %1865 = vmatmul.mubr.bf16.gmra.mrb[0].mxu0 %v733
        %v1866 = vpop.f32.mrb[0].mxu0
        %v1867 = vadd.f32 %v1639, %v1866
        %v1868 = vpop.f32.mrb[0].mxu0
        %v1869 = vpop.f32.mrb[0].mxu0
        %v1870 = vadd.f32 %v1642, %v1869
        %v1871 = vpop.f32.mrb[0].mxu0
        %1872 = vmatprep.mubr.bf16.mxu0 0
        %1873 = vmatmul.mubr.bf16.gmra.mrb[0].mxu0 %v736
        %v1874 = vpop.f32.mrb[0].mxu0
        %v1875 = vadd.f32 %v1647, %v1874
        %v1876 = vpop.f32.mrb[0].mxu0
        %v1877 = vpop.f32.mrb[0].mxu0
        %v1878 = vadd.f32 %v1650, %v1877
        %v1879 = vpop.f32.mrb[0].mxu0
        %1880 = vmatprep.mubr.bf16.mxu0 0
        %1881 = vmatmul.mubr.bf16.gmra.mrb[0].mxu0 %v739
        %v1882 = vpop.f32.mrb[0].mxu0
        %v1883 = vadd.f32 %v1655, %v1882
        %v1884 = vpop.f32.mrb[0].mxu0
        %v1885 = vpop.f32.mrb[0].mxu0
        %v1886 = vadd.f32 %v1658, %v1885
        %v1887 = vpop.f32.mrb[0].mxu0
        %1888 = vmatprep.mubr.bf16.mxu0 0
        %1889 = vmatmul.mubr.bf16.gmra.mrb[0].mxu0 %v742
        %v1890 = vpop.f32.mrb[0].mxu0
        %v1891 = vadd.f32 %v1663, %v1890
        %v1892 = vpop.f32.mrb[0].mxu0
        %v1893 = vpop.f32.mrb[0].mxu0
        %v1894 = vadd.f32 %v1666, %v1893
        %v1895 = vpop.f32.mrb[0].mxu0
        %1896 = vmatprep.mubr.bf16.mxu0 0
        %1897 = vmatmul.mubr.bf16.gmra.mrb[0].mxu0 %v745
        %v1898 = vpop.f32.mrb[0].mxu0
        %v1899 = vadd.f32 %v1671, %v1898
        %v1900 = vpop.f32.mrb[0].mxu0
        %v1901 = vpop.f32.mrb[0].mxu0
        %v1902 = vadd.f32 %v1674, %v1901
        %v1903 = vpop.f32.mrb[0].mxu0
        %1904 = vdwg.mxu0
        %s1905 = scalar_lea.vmem %s1, 28
        %v1906 = vld [vmem:[%s1905] sm:$0xf]
        %v1908 = vsel %vm432, %v1906, 0
        %1910 = vmatprep.subr.bf16.mxu0 0
        %1911 = vmatpush1.bf16.msra.mxu0 %v1908
        %1912 = vmatprep.subr.bf16.mxu0 0
        %1913 = vmatpush1.bf16.msra.mxu0 0
        %1914 = vmatprep.subr.bf16.mxu0 0
        %1915 = vmatpush1.bf16.msra.mxu0 0
        %1916 = vmatprep.subr.bf16.mxu0 0
        %1917 = vmatpush1.bf16.msra.mxu0 0
        %1918 = vmatprep.subr.bf16.mxu0 0
        %1919 = vmatpush1.bf16.msra.mxu0 0
        %1920 = vmatprep.subr.bf16.mxu0 0
        %1921 = vmatpush1.bf16.msra.mxu0 0
        %1922 = vmatprep.subr.bf16.mxu0 0
        %1923 = vmatpush1.bf16.msra.mxu0 0
        %1924 = vmatprep.subr.bf16.mxu0 0
        %1925 = vmatpush1.bf16.msra.mxu0 0
        %1926 = vmatprep.subr.bf16.mxu0 0
        %1927 = vmatpush1.bf16.msra.mxu0 0
        %1928 = vmatprep.subr.bf16.mxu0 0
        %1929 = vmatpush1.bf16.msra.mxu0 0
        %1930 = vmatprep.subr.bf16.mxu0 0
        %1931 = vmatpush1.bf16.msra.mxu0 0
        %1932 = vmatprep.subr.bf16.mxu0 0
        %1933 = vmatpush1.bf16.msra.mxu0 0
        %1934 = vmatprep.subr.bf16.mxu0 0
        %1935 = vmatpush1.bf16.msra.mxu0 0
        %1936 = vmatprep.subr.bf16.mxu0 0
        %1937 = vmatpush1.bf16.msra.mxu0 0
        %1938 = vmatprep.subr.bf16.mxu0 0
        %1939 = vmatpush1.bf16.msra.mxu0 0
        %1940 = vmatprep.subr.bf16.mxu0 0
        %1941 = vmatpush1.bf16.msra.mxu0 0
        %1942 = vmatprep.mubr.bf16.mxu0 0
        %1943 = vmatmul.mubr.bf16.gmra.mrb[0].mxu0 %v1130
        %v1944 = vpop.f32.mrb[0].mxu0
        %v1945 = vadd.f32 0.0, %v1944
        %v1946 = vpop.f32.mrb[0].mxu0
        %v1947 = vpop.f32.mrb[0].mxu0
        %v1948 = vadd.f32 0.0, %v1947
        %v1949 = vpop.f32.mrb[0].mxu0
        %1950 = vmatprep.mubr.bf16.mxu0 0
        %1951 = vmatmul.mubr.bf16.gmra.mrb[0].mxu0 %v1133
        %v1952 = vpop.f32.mrb[0].mxu0
        %v1953 = vadd.f32 0.0, %v1952
        %v1954 = vpop.f32.mrb[0].mxu0
        %v1955 = vpop.f32.mrb[0].mxu0
        %v1956 = vadd.f32 0.0, %v1955
        %v1957 = vpop.f32.mrb[0].mxu0
        %1958 = vmatprep.mubr.bf16.mxu0 0
        %1959 = vmatmul.mubr.bf16.gmra.mrb[0].mxu0 %v1136
        %v1960 = vpop.f32.mrb[0].mxu0
        %v1961 = vadd.f32 0.0, %v1960
        %v1962 = vpop.f32.mrb[0].mxu0
        %v1963 = vpop.f32.mrb[0].mxu0
        %v1964 = vadd.f32 0.0, %v1963
        %v1965 = vpop.f32.mrb[0].mxu0
        %1966 = vmatprep.mubr.bf16.mxu0 0
        %1967 = vmatmul.mubr.bf16.gmra.mrb[0].mxu0 %v1139
        %v1968 = vpop.f32.mrb[0].mxu0
        %v1969 = vadd.f32 0.0, %v1968
        %v1970 = vpop.f32.mrb[0].mxu0
        %v1971 = vpop.f32.mrb[0].mxu0
        %v1972 = vadd.f32 0.0, %v1971
        %v1973 = vpop.f32.mrb[0].mxu0
        %1974 = vmatprep.mubr.bf16.mxu0 0
        %1975 = vmatmul.mubr.bf16.gmra.mrb[0].mxu0 %v1142
        %v1976 = vpop.f32.mrb[0].mxu0
        %v1977 = vadd.f32 0.0, %v1976
        %v1978 = vpop.f32.mrb[0].mxu0
        %v1979 = vpop.f32.mrb[0].mxu0
        %v1980 = vadd.f32 0.0, %v1979
        %v1981 = vpop.f32.mrb[0].mxu0
        %1982 = vmatprep.mubr.bf16.mxu0 0
        %1983 = vmatmul.mubr.bf16.gmra.mrb[0].mxu0 %v1145
        %v1984 = vpop.f32.mrb[0].mxu0
        %v1985 = vadd.f32 0.0, %v1984
        %v1986 = vpop.f32.mrb[0].mxu0
        %v1987 = vpop.f32.mrb[0].mxu0
        %v1988 = vadd.f32 0.0, %v1987
        %v1989 = vpop.f32.mrb[0].mxu0
        %1990 = vmatprep.mubr.bf16.mxu0 0
        %1991 = vmatmul.mubr.bf16.gmra.mrb[0].mxu0 %v1148
        %v1992 = vpop.f32.mrb[0].mxu0
        %v1993 = vadd.f32 0.0, %v1992
        %v1994 = vpop.f32.mrb[0].mxu0
        %v1995 = vpop.f32.mrb[0].mxu0
        %v1996 = vadd.f32 0.0, %v1995
        %v1997 = vpop.f32.mrb[0].mxu0
        %1998 = vmatprep.mubr.bf16.mxu0 0
        %1999 = vmatmul.mubr.bf16.gmra.mrb[0].mxu0 %v1151
        %v2000 = vpop.f32.mrb[0].mxu0
        %v2001 = vadd.f32 0.0, %v2000
        %v2002 = vpop.f32.mrb[0].mxu0
        %v2003 = vpop.f32.mrb[0].mxu0
        %v2004 = vadd.f32 0.0, %v2003
        %v2005 = vpop.f32.mrb[0].mxu0
        %2006 = vmatprep.mubr.bf16.mxu0 0
        %2007 = vmatmul.mubr.bf16.gmra.mrb[0].mxu0 %v1154
        %v2008 = vpop.f32.mrb[0].mxu0
        %v2009 = vadd.f32 0.0, %v2008
        %v2010 = vpop.f32.mrb[0].mxu0
        %v2011 = vpop.f32.mrb[0].mxu0
        %v2012 = vadd.f32 0.0, %v2011
        %v2013 = vpop.f32.mrb[0].mxu0
        %2014 = vmatprep.mubr.bf16.mxu0 0
        %2015 = vmatmul.mubr.bf16.gmra.mrb[0].mxu0 %v1157
        %v2016 = vpop.f32.mrb[0].mxu0
        %v2017 = vadd.f32 0.0, %v2016
        %v2018 = vpop.f32.mrb[0].mxu0
        %v2019 = vpop.f32.mrb[0].mxu0
        %v2020 = vadd.f32 0.0, %v2019
        %v2021 = vpop.f32.mrb[0].mxu0
        %2022 = vmatprep.mubr.bf16.mxu0 0
        %2023 = vmatmul.mubr.bf16.gmra.mrb[0].mxu0 %v1160
        %v2024 = vpop.f32.mrb[0].mxu0
        %v2025 = vadd.f32 0.0, %v2024
        %v2026 = vpop.f32.mrb[0].mxu0
        %v2027 = vpop.f32.mrb[0].mxu0
        %v2028 = vadd.f32 0.0, %v2027
        %v2029 = vpop.f32.mrb[0].mxu0
        %2030 = vmatprep.mubr.bf16.mxu0 0
        %2031 = vmatmul.mubr.bf16.gmra.mrb[0].mxu0 %v1163
        %v2032 = vpop.f32.mrb[0].mxu0
        %v2033 = vadd.f32 0.0, %v2032
        %v2034 = vpop.f32.mrb[0].mxu0
        %v2035 = vpop.f32.mrb[0].mxu0
        %v2036 = vadd.f32 0.0, %v2035
        %v2037 = vpop.f32.mrb[0].mxu0
        %2038 = vmatprep.mubr.bf16.mxu0 0
        %2039 = vmatmul.mubr.bf16.gmra.mrb[0].mxu0 %v1166
        %v2040 = vpop.f32.mrb[0].mxu0
        %v2041 = vadd.f32 0.0, %v2040
        %v2042 = vpop.f32.mrb[0].mxu0
        %v2043 = vpop.f32.mrb[0].mxu0
        %v2044 = vadd.f32 0.0, %v2043
        %v2045 = vpop.f32.mrb[0].mxu0
        %2046 = vmatprep.mubr.bf16.mxu0 0
        %2047 = vmatmul.mubr.bf16.gmra.mrb[0].mxu0 %v1169
        %v2048 = vpop.f32.mrb[0].mxu0
        %v2049 = vadd.f32 0.0, %v2048
        %v2050 = vpop.f32.mrb[0].mxu0
        %v2051 = vpop.f32.mrb[0].mxu0
        %v2052 = vadd.f32 0.0, %v2051
        %v2053 = vpop.f32.mrb[0].mxu0
        %2054 = vmatprep.mubr.bf16.mxu0 0
        %2055 = vmatmul.mubr.bf16.gmra.mrb[0].mxu0 %v1172
        %v2056 = vpop.f32.mrb[0].mxu0
        %v2057 = vadd.f32 0.0, %v2056
        %v2058 = vpop.f32.mrb[0].mxu0
        %v2059 = vpop.f32.mrb[0].mxu0
        %v2060 = vadd.f32 0.0, %v2059
        %v2061 = vpop.f32.mrb[0].mxu0
        %2062 = vmatprep.mubr.bf16.mxu0 0
        %2063 = vmatmul.mubr.bf16.gmra.mrb[0].mxu0 %v1175
        %v2064 = vpop.f32.mrb[0].mxu0
        %v2065 = vadd.f32 0.0, %v2064
        %v2066 = vpop.f32.mrb[0].mxu0
        %v2067 = vpop.f32.mrb[0].mxu0
        %v2068 = vadd.f32 0.0, %v2067
        %v2069 = vpop.f32.mrb[0].mxu0
        %2070 = vmatprep.mubr.bf16.mxu0 0
        %2071 = vmatmul.mubr.bf16.gmra.mrb[0].mxu0 %v1178
        %v2072 = vpop.f32.mrb[0].mxu0
        %v2073 = vadd.f32 0.0, %v2072
        %v2074 = vpop.f32.mrb[0].mxu0
        %v2075 = vpop.f32.mrb[0].mxu0
        %v2076 = vadd.f32 0.0, %v2075
        %v2077 = vpop.f32.mrb[0].mxu0
        %2078 = vmatprep.mubr.bf16.mxu0 0
        %2079 = vmatmul.mubr.bf16.gmra.mrb[0].mxu0 %v1181
        %v2080 = vpop.f32.mrb[0].mxu0
        %v2081 = vadd.f32 0.0, %v2080
        %v2082 = vpop.f32.mrb[0].mxu0
        %v2083 = vpop.f32.mrb[0].mxu0
        %v2084 = vadd.f32 0.0, %v2083
        %v2085 = vpop.f32.mrb[0].mxu0
        %2086 = vmatprep.mubr.bf16.mxu0 0
        %2087 = vmatmul.mubr.bf16.gmra.mrb[0].mxu0 %v1184
        %v2088 = vpop.f32.mrb[0].mxu0
        %v2089 = vadd.f32 0.0, %v2088
        %v2090 = vpop.f32.mrb[0].mxu0
        %v2091 = vpop.f32.mrb[0].mxu0
        %v2092 = vadd.f32 0.0, %v2091
        %v2093 = vpop.f32.mrb[0].mxu0
        %2094 = vmatprep.mubr.bf16.mxu0 0
        %2095 = vmatmul.mubr.bf16.gmra.mrb[0].mxu0 %v1187
        %v2096 = vpop.f32.mrb[0].mxu0
        %v2097 = vadd.f32 0.0, %v2096
        %v2098 = vpop.f32.mrb[0].mxu0
        %v2099 = vpop.f32.mrb[0].mxu0
        %v2100 = vadd.f32 0.0, %v2099
        %v2101 = vpop.f32.mrb[0].mxu0
        %2102 = vmatprep.mubr.bf16.mxu0 0
        %2103 = vmatmul.mubr.bf16.gmra.mrb[0].mxu0 %v1190
        %v2104 = vpop.f32.mrb[0].mxu0
        %v2105 = vadd.f32 0.0, %v2104
        %v2106 = vpop.f32.mrb[0].mxu0
        %v2107 = vpop.f32.mrb[0].mxu0
        %v2108 = vadd.f32 0.0, %v2107
        %v2109 = vpop.f32.mrb[0].mxu0
        %2110 = vmatprep.mubr.bf16.mxu0 0
        %2111 = vmatmul.mubr.bf16.gmra.mrb[0].mxu0 %v1193
        %v2112 = vpop.f32.mrb[0].mxu0
        %v2113 = vadd.f32 0.0, %v2112
        %v2114 = vpop.f32.mrb[0].mxu0
        %v2115 = vpop.f32.mrb[0].mxu0
        %v2116 = vadd.f32 0.0, %v2115
        %v2117 = vpop.f32.mrb[0].mxu0
        %2118 = vmatprep.mubr.bf16.mxu0 0
        %2119 = vmatmul.mubr.bf16.gmra.mrb[0].mxu0 %v1196
        %v2120 = vpop.f32.mrb[0].mxu0
        %v2121 = vadd.f32 0.0, %v2120
        %v2122 = vpop.f32.mrb[0].mxu0
        %v2123 = vpop.f32.mrb[0].mxu0
        %v2124 = vadd.f32 0.0, %v2123
        %v2125 = vpop.f32.mrb[0].mxu0
        %2126 = vmatprep.mubr.bf16.mxu0 0
        %2127 = vmatmul.mubr.bf16.gmra.mrb[0].mxu0 %v1199
        %v2128 = vpop.f32.mrb[0].mxu0
        %v2129 = vadd.f32 0.0, %v2128
        %v2130 = vpop.f32.mrb[0].mxu0
        %v2131 = vpop.f32.mrb[0].mxu0
        %v2132 = vadd.f32 0.0, %v2131
        %v2133 = vpop.f32.mrb[0].mxu0
        %2134 = vdwg.mxu0
        %v2135 = vadd.f32 %v1715, %v1945
        %v2136 = vadd.f32 %v1718, %v1948
        %v2137 = vadd.f32 %v1723, %v1953
        %v2138 = vadd.f32 %v1726, %v1956
        %v2139 = vadd.f32 %v1731, %v1961
        %v2140 = vadd.f32 %v1734, %v1964
        %v2141 = vadd.f32 %v1739, %v1969
        %v2142 = vadd.f32 %v1742, %v1972
        %v2143 = vadd.f32 %v1747, %v1977
        %v2144 = vadd.f32 %v1750, %v1980
        %v2145 = vadd.f32 %v1755, %v1985
        %v2146 = vadd.f32 %v1758, %v1988
        %v2147 = vadd.f32 %v1763, %v1993
        %v2148 = vadd.f32 %v1766, %v1996
        %v2149 = vadd.f32 %v1771, %v2001
        %v2150 = vadd.f32 %v1774, %v2004
        %v2151 = vadd.f32 %v1779, %v2009
        %v2152 = vadd.f32 %v1782, %v2012
        %v2153 = vadd.f32 %v1787, %v2017
        %v2154 = vadd.f32 %v1790, %v2020
        %v2155 = vadd.f32 %v1795, %v2025
        %v2156 = vadd.f32 %v1798, %v2028
        %v2157 = vadd.f32 %v1803, %v2033
        %v2158 = vadd.f32 %v1806, %v2036
        %v2159 = vadd.f32 %v1811, %v2041
        %v2160 = vadd.f32 %v1814, %v2044
        %v2161 = vadd.f32 %v1819, %v2049
        %v2162 = vadd.f32 %v1822, %v2052
        %v2163 = vadd.f32 %v1827, %v2057
        %v2164 = vadd.f32 %v1830, %v2060
        %v2165 = vadd.f32 %v1835, %v2065
        %v2166 = vadd.f32 %v1838, %v2068
        %v2167 = vadd.f32 %v1843, %v2073
        %v2168 = vadd.f32 %v1846, %v2076
        %v2169 = vadd.f32 %v1851, %v2081
        %v2170 = vadd.f32 %v1854, %v2084
        %v2171 = vadd.f32 %v1859, %v2089
        %v2172 = vadd.f32 %v1862, %v2092
        %v2173 = vadd.f32 %v1867, %v2097
        %v2174 = vadd.f32 %v1870, %v2100
        %v2175 = vadd.f32 %v1875, %v2105
        %v2176 = vadd.f32 %v1878, %v2108
        %v2177 = vadd.f32 %v1883, %v2113
        %v2178 = vadd.f32 %v1886, %v2116
        %v2179 = vadd.f32 %v1891, %v2121
        %v2180 = vadd.f32 %v1894, %v2124
        %v2181 = vadd.f32 %v1899, %v2129
        %v2182 = vadd.f32 %v1902, %v2132
        %vm2231 = vcmask 1046528
        %v2232 = vrot.slane %v2135, 1
        %v2233 = vrot.slane %v2136, 1
        %v2234 = vsel %vm2231, %v2232, %v2233
        %v2235 = vrot.slane %v2137, 1
        %v2236 = vsel %vm2231, %v2233, %v2235
        %v2237 = vrot.slane %v2138, 1
        %v2238 = vrot.slane %v2139, 1
        %v2239 = vsel %vm2231, %v2237, %v2238
        %v2240 = vrot.slane %v2140, 1
        %v2241 = vsel %vm2231, %v2238, %v2240
        %v2242 = vrot.slane %v2141, 1
        %v2243 = vrot.slane %v2142, 1
        %v2244 = vsel %vm2231, %v2242, %v2243
        %v2245 = vrot.slane %v2143, 1
        %v2246 = vsel %vm2231, %v2243, %v2245
        %v2247 = vrot.slane %v2144, 1
        %v2248 = vrot.slane %v2145, 1
        %v2249 = vsel %vm2231, %v2247, %v2248
        %v2250 = vrot.slane %v2146, 1
        %v2251 = vsel %vm2231, %v2248, %v2250
        %v2252 = vrot.slane %v2147, 1
        %v2253 = vrot.slane %v2148, 1
        %v2254 = vsel %vm2231, %v2252, %v2253
        %v2255 = vrot.slane %v2149, 1
        %v2256 = vsel %vm2231, %v2253, %v2255
        %v2257 = vrot.slane %v2150, 1
        %v2258 = vrot.slane %v2151, 1
        %v2259 = vsel %vm2231, %v2257, %v2258
        %v2260 = vrot.slane %v2152, 1
        %v2261 = vsel %vm2231, %v2258, %v2260
        %v2262 = vrot.slane %v2153, 1
        %v2263 = vrot.slane %v2154, 1
        %v2264 = vsel %vm2231, %v2262, %v2263
        %v2265 = vrot.slane %v2155, 1
        %v2266 = vsel %vm2231, %v2263, %v2265
        %v2267 = vrot.slane %v2156, 1
        %v2268 = vrot.slane %v2157, 1
        %v2269 = vsel %vm2231, %v2267, %v2268
        %v2270 = vrot.slane %v2158, 1
        %v2271 = vsel %vm2231, %v2268, %v2270
        %v2272 = vrot.slane %v2159, 1
        %v2273 = vrot.slane %v2160, 1
        %v2274 = vsel %vm2231, %v2272, %v2273
        %v2275 = vrot.slane %v2161, 1
        %v2276 = vsel %vm2231, %v2273, %v2275
        %v2277 = vrot.slane %v2162, 1
        %v2278 = vrot.slane %v2163, 1
        %v2279 = vsel %vm2231, %v2277, %v2278
        %v2280 = vrot.slane %v2164, 1
        %v2281 = vsel %vm2231, %v2278, %v2280
        %v2282 = vrot.slane %v2165, 1
        %v2283 = vrot.slane %v2166, 1
        %v2284 = vsel %vm2231, %v2282, %v2283
        %v2285 = vrot.slane %v2167, 1
        %v2286 = vsel %vm2231, %v2283, %v2285
        %v2287 = vrot.slane %v2168, 1
        %v2288 = vrot.slane %v2169, 1
        %v2289 = vsel %vm2231, %v2287, %v2288
        %v2290 = vrot.slane %v2170, 1
        %v2291 = vsel %vm2231, %v2288, %v2290
        %v2292 = vrot.slane %v2171, 1
        %v2293 = vrot.slane %v2172, 1
        %v2294 = vsel %vm2231, %v2292, %v2293
        %v2295 = vrot.slane %v2173, 1
        %v2296 = vsel %vm2231, %v2293, %v2295
        %v2297 = vrot.slane %v2174, 1
        %v2298 = vrot.slane %v2175, 1
        %v2299 = vsel %vm2231, %v2297, %v2298
        %v2300 = vrot.slane %v2176, 1
        %v2301 = vsel %vm2231, %v2298, %v2300
        %v2302 = vrot.slane %v2177, 1
        %v2303 = vrot.slane %v2178, 1
        %v2304 = vsel %vm2231, %v2302, %v2303
        %v2305 = vrot.slane %v2179, 1
        %v2306 = vsel %vm2231, %v2303, %v2305
        %v2307 = vrot.slane %v2180, 1
        %v2308 = vrot.slane %v2181, 1
        %v2309 = vsel %vm2231, %v2307, %v2308
        %v2310 = vrot.slane %v2182, 1
        %v2311 = vsel %vm2231, %v2308, %v2310
        %v2344 = vadd.f32 %v1413, %v2234
        %v2345 = vadd.f32 %v1414, %v2236
        %v2346 = vadd.f32 %v1415, %v2239
        %v2347 = vadd.f32 %v1416, %v2241
        %v2348 = vadd.f32 %v1417, %v2244
        %v2349 = vadd.f32 %v1418, %v2246
        %v2350 = vadd.f32 %v1419, %v2249
        %v2351 = vadd.f32 %v1420, %v2251
        %v2352 = vadd.f32 %v1421, %v2254
        %v2353 = vadd.f32 %v1422, %v2256
        %v2354 = vadd.f32 %v1423, %v2259
        %v2355 = vadd.f32 %v1424, %v2261
        %v2356 = vadd.f32 %v1425, %v2264
        %v2357 = vadd.f32 %v1426, %v2266
        %v2358 = vadd.f32 %v1427, %v2269
        %v2359 = vadd.f32 %v1428, %v2271
        %v2360 = vadd.f32 %v1429, %v2274
        %v2361 = vadd.f32 %v1430, %v2276
        %v2362 = vadd.f32 %v1431, %v2279
        %v2363 = vadd.f32 %v1432, %v2281
        %v2364 = vadd.f32 %v1433, %v2284
        %v2365 = vadd.f32 %v1434, %v2286
        %v2366 = vadd.f32 %v1435, %v2289
        %v2367 = vadd.f32 %v1436, %v2291
        %v2368 = vadd.f32 %v1437, %v2294
        %v2369 = vadd.f32 %v1438, %v2296
        %v2370 = vadd.f32 %v1439, %v2299
        %v2371 = vadd.f32 %v1440, %v2301
        %v2372 = vadd.f32 %v1441, %v2304
        %v2373 = vadd.f32 %v1442, %v2306
        %v2374 = vadd.f32 %v1443, %v2309
        %v2375 = vadd.f32 %v1444, %v2311
        %s2376 = scalar_lea.vmem %s1, 8
        %v2377 = vld [vmem:[%s2376] sm:$0xf]
        %s2378 = scalar_lea.vmem %s1, 20
        %v2379 = vld [vmem:[%s2378] sm:$0xf]
        %v2381 = vsel %vm432, %v2379, 0
        %2383 = vmatprep.subr.bf16.mxu0 0
        %2384 = vmatpush1.bf16.msra.mxu0 %v2381
        %2385 = vmatprep.subr.bf16.mxu0 0
        %2386 = vmatpush1.bf16.msra.mxu0 0
        %2387 = vmatprep.subr.bf16.mxu0 0
        %2388 = vmatpush1.bf16.msra.mxu0 0
        %2389 = vmatprep.subr.bf16.mxu0 0
        %2390 = vmatpush1.bf16.msra.mxu0 0
        %2391 = vmatprep.subr.bf16.mxu0 0
        %2392 = vmatpush1.bf16.msra.mxu0 0
        %2393 = vmatprep.subr.bf16.mxu0 0
        %2394 = vmatpush1.bf16.msra.mxu0 0
        %2395 = vmatprep.subr.bf16.mxu0 0
        %2396 = vmatpush1.bf16.msra.mxu0 0
        %2397 = vmatprep.subr.bf16.mxu0 0
        %2398 = vmatpush1.bf16.msra.mxu0 0
        %2399 = vmatprep.subr.bf16.mxu0 0
        %2400 = vmatpush1.bf16.msra.mxu0 0
        %2401 = vmatprep.subr.bf16.mxu0 0
        %2402 = vmatpush1.bf16.msra.mxu0 0
        %2403 = vmatprep.subr.bf16.mxu0 0
        %2404 = vmatpush1.bf16.msra.mxu0 0
        %2405 = vmatprep.subr.bf16.mxu0 0
        %2406 = vmatpush1.bf16.msra.mxu0 0
        %2407 = vmatprep.subr.bf16.mxu0 0
        %2408 = vmatpush1.bf16.msra.mxu0 0
        %2409 = vmatprep.subr.bf16.mxu0 0
        %2410 = vmatpush1.bf16.msra.mxu0 0
        %2411 = vmatprep.subr.bf16.mxu0 0
        %2412 = vmatpush1.bf16.msra.mxu0 0
        %2413 = vmatprep.subr.bf16.mxu0 0
        %2414 = vmatpush1.bf16.msra.mxu0 0
        %2415 = vmatprep.mubr.bf16.mxu0 0
        %2416 = vmatmul.mubr.bf16.gmra.mrb[0].mxu0 %v361
        %v2417 = vpop.f32.mrb[0].mxu0
        %v2418 = vadd.f32 0.0, %v2417
        %v2419 = vpop.f32.mrb[0].mxu0
        %v2420 = vpop.f32.mrb[0].mxu0
        %v2421 = vadd.f32 0.0, %v2420
        %v2422 = vpop.f32.mrb[0].mxu0
        %2423 = vmatprep.mubr.bf16.mxu0 0
        %2424 = vmatmul.mubr.bf16.gmra.mrb[0].mxu0 %v364
        %v2425 = vpop.f32.mrb[0].mxu0
        %v2426 = vadd.f32 0.0, %v2425
        %v2427 = vpop.f32.mrb[0].mxu0
        %v2428 = vpop.f32.mrb[0].mxu0
        %v2429 = vadd.f32 0.0, %v2428
        %v2430 = vpop.f32.mrb[0].mxu0
        %2431 = vmatprep.mubr.bf16.mxu0 0
        %2432 = vmatmul.mubr.bf16.gmra.mrb[0].mxu0 %v367
        %v2433 = vpop.f32.mrb[0].mxu0
        %v2434 = vadd.f32 0.0, %v2433
        %v2435 = vpop.f32.mrb[0].mxu0
        %v2436 = vpop.f32.mrb[0].mxu0
        %v2437 = vadd.f32 0.0, %v2436
        %v2438 = vpop.f32.mrb[0].mxu0
        %2439 = vmatprep.mubr.bf16.mxu0 0
        %2440 = vmatmul.mubr.bf16.gmra.mrb[0].mxu0 %v370
        %v2441 = vpop.f32.mrb[0].mxu0
        %v2442 = vadd.f32 0.0, %v2441
        %v2443 = vpop.f32.mrb[0].mxu0
        %v2444 = vpop.f32.mrb[0].mxu0
        %v2445 = vadd.f32 0.0, %v2444
        %v2446 = vpop.f32.mrb[0].mxu0
        %2447 = vmatprep.mubr.bf16.mxu0 0
        %2448 = vmatmul.mubr.bf16.gmra.mrb[0].mxu0 %v373
        %v2449 = vpop.f32.mrb[0].mxu0
        %v2450 = vadd.f32 0.0, %v2449
        %v2451 = vpop.f32.mrb[0].mxu0
        %v2452 = vpop.f32.mrb[0].mxu0
        %v2453 = vadd.f32 0.0, %v2452
        %v2454 = vpop.f32.mrb[0].mxu0
        %2455 = vmatprep.mubr.bf16.mxu0 0
        %2456 = vmatmul.mubr.bf16.gmra.mrb[0].mxu0 %v376
        %v2457 = vpop.f32.mrb[0].mxu0
        %v2458 = vadd.f32 0.0, %v2457
        %v2459 = vpop.f32.mrb[0].mxu0
        %v2460 = vpop.f32.mrb[0].mxu0
        %v2461 = vadd.f32 0.0, %v2460
        %v2462 = vpop.f32.mrb[0].mxu0
        %2463 = vmatprep.mubr.bf16.mxu0 0
        %2464 = vmatmul.mubr.bf16.gmra.mrb[0].mxu0 %v379
        %v2465 = vpop.f32.mrb[0].mxu0
        %v2466 = vadd.f32 0.0, %v2465
        %v2467 = vpop.f32.mrb[0].mxu0
        %v2468 = vpop.f32.mrb[0].mxu0
        %v2469 = vadd.f32 0.0, %v2468
        %v2470 = vpop.f32.mrb[0].mxu0
        %2471 = vmatprep.mubr.bf16.mxu0 0
        %2472 = vmatmul.mubr.bf16.gmra.mrb[0].mxu0 %v382
        %v2473 = vpop.f32.mrb[0].mxu0
        %v2474 = vadd.f32 0.0, %v2473
        %v2475 = vpop.f32.mrb[0].mxu0
        %v2476 = vpop.f32.mrb[0].mxu0
        %v2477 = vadd.f32 0.0, %v2476
        %v2478 = vpop.f32.mrb[0].mxu0
        %2479 = vmatprep.mubr.bf16.mxu0 0
        %2480 = vmatmul.mubr.bf16.gmra.mrb[0].mxu0 %v385
        %v2481 = vpop.f32.mrb[0].mxu0
        %v2482 = vadd.f32 0.0, %v2481
        %v2483 = vpop.f32.mrb[0].mxu0
        %v2484 = vpop.f32.mrb[0].mxu0
        %v2485 = vadd.f32 0.0, %v2484
        %v2486 = vpop.f32.mrb[0].mxu0
        %2487 = vmatprep.mubr.bf16.mxu0 0
        %2488 = vmatmul.mubr.bf16.gmra.mrb[0].mxu0 %v388
        %v2489 = vpop.f32.mrb[0].mxu0
        %v2490 = vadd.f32 0.0, %v2489
        %v2491 = vpop.f32.mrb[0].mxu0
        %v2492 = vpop.f32.mrb[0].mxu0
        %v2493 = vadd.f32 0.0, %v2492
        %v2494 = vpop.f32.mrb[0].mxu0
        %2495 = vmatprep.mubr.bf16.mxu0 0
        %2496 = vmatmul.mubr.bf16.gmra.mrb[0].mxu0 %v391
        %v2497 = vpop.f32.mrb[0].mxu0
        %v2498 = vadd.f32 0.0, %v2497
        %v2499 = vpop.f32.mrb[0].mxu0
        %v2500 = vpop.f32.mrb[0].mxu0
        %v2501 = vadd.f32 0.0, %v2500
        %v2502 = vpop.f32.mrb[0].mxu0
        %2503 = vmatprep.mubr.bf16.mxu0 0
        %2504 = vmatmul.mubr.bf16.gmra.mrb[0].mxu0 %v394
        %v2505 = vpop.f32.mrb[0].mxu0
        %v2506 = vadd.f32 0.0, %v2505
        %v2507 = vpop.f32.mrb[0].mxu0
        %v2508 = vpop.f32.mrb[0].mxu0
        %v2509 = vadd.f32 0.0, %v2508
        %v2510 = vpop.f32.mrb[0].mxu0
        %2511 = vmatprep.mubr.bf16.mxu0 0
        %2512 = vmatmul.mubr.bf16.gmra.mrb[0].mxu0 %v397
        %v2513 = vpop.f32.mrb[0].mxu0
        %v2514 = vadd.f32 0.0, %v2513
        %v2515 = vpop.f32.mrb[0].mxu0
        %v2516 = vpop.f32.mrb[0].mxu0
        %v2517 = vadd.f32 0.0, %v2516
        %v2518 = vpop.f32.mrb[0].mxu0
        %2519 = vmatprep.mubr.bf16.mxu0 0
        %2520 = vmatmul.mubr.bf16.gmra.mrb[0].mxu0 %v400
        %v2521 = vpop.f32.mrb[0].mxu0
        %v2522 = vadd.f32 0.0, %v2521
        %v2523 = vpop.f32.mrb[0].mxu0
        %v2524 = vpop.f32.mrb[0].mxu0
        %v2525 = vadd.f32 0.0, %v2524
        %v2526 = vpop.f32.mrb[0].mxu0
        %2527 = vmatprep.mubr.bf16.mxu0 0
        %2528 = vmatmul.mubr.bf16.gmra.mrb[0].mxu0 %v403
        %v2529 = vpop.f32.mrb[0].mxu0
        %v2530 = vadd.f32 0.0, %v2529
        %v2531 = vpop.f32.mrb[0].mxu0
        %v2532 = vpop.f32.mrb[0].mxu0
        %v2533 = vadd.f32 0.0, %v2532
        %v2534 = vpop.f32.mrb[0].mxu0
        %2535 = vmatprep.mubr.bf16.mxu0 0
        %2536 = vmatmul.mubr.bf16.gmra.mrb[0].mxu0 %v406
        %v2537 = vpop.f32.mrb[0].mxu0
        %v2538 = vadd.f32 0.0, %v2537
        %v2539 = vpop.f32.mrb[0].mxu0
        %v2540 = vpop.f32.mrb[0].mxu0
        %v2541 = vadd.f32 0.0, %v2540
        %v2542 = vpop.f32.mrb[0].mxu0
        %2543 = vmatprep.mubr.bf16.mxu0 0
        %2544 = vmatmul.mubr.bf16.gmra.mrb[0].mxu0 %v409
        %v2545 = vpop.f32.mrb[0].mxu0
        %v2546 = vadd.f32 0.0, %v2545
        %v2547 = vpop.f32.mrb[0].mxu0
        %v2548 = vpop.f32.mrb[0].mxu0
        %v2549 = vadd.f32 0.0, %v2548
        %v2550 = vpop.f32.mrb[0].mxu0
        %2551 = vmatprep.mubr.bf16.mxu0 0
        %2552 = vmatmul.mubr.bf16.gmra.mrb[0].mxu0 %v412
        %v2553 = vpop.f32.mrb[0].mxu0
        %v2554 = vadd.f32 0.0, %v2553
        %v2555 = vpop.f32.mrb[0].mxu0
        %v2556 = vpop.f32.mrb[0].mxu0
        %v2557 = vadd.f32 0.0, %v2556
        %v2558 = vpop.f32.mrb[0].mxu0
        %2559 = vmatprep.mubr.bf16.mxu0 0
        %2560 = vmatmul.mubr.bf16.gmra.mrb[0].mxu0 %v415
        %v2561 = vpop.f32.mrb[0].mxu0
        %v2562 = vadd.f32 0.0, %v2561
        %v2563 = vpop.f32.mrb[0].mxu0
        %v2564 = vpop.f32.mrb[0].mxu0
        %v2565 = vadd.f32 0.0, %v2564
        %v2566 = vpop.f32.mrb[0].mxu0
        %2567 = vmatprep.mubr.bf16.mxu0 0
        %2568 = vmatmul.mubr.bf16.gmra.mrb[0].mxu0 %v418
        %v2569 = vpop.f32.mrb[0].mxu0
        %v2570 = vadd.f32 0.0, %v2569
        %v2571 = vpop.f32.mrb[0].mxu0
        %v2572 = vpop.f32.mrb[0].mxu0
        %v2573 = vadd.f32 0.0, %v2572
        %v2574 = vpop.f32.mrb[0].mxu0
        %2575 = vmatprep.mubr.bf16.mxu0 0
        %2576 = vmatmul.mubr.bf16.gmra.mrb[0].mxu0 %v421
        %v2577 = vpop.f32.mrb[0].mxu0
        %v2578 = vadd.f32 0.0, %v2577
        %v2579 = vpop.f32.mrb[0].mxu0
        %v2580 = vpop.f32.mrb[0].mxu0
        %v2581 = vadd.f32 0.0, %v2580
        %v2582 = vpop.f32.mrb[0].mxu0
        %2583 = vmatprep.mubr.bf16.mxu0 0
        %2584 = vmatmul.mubr.bf16.gmra.mrb[0].mxu0 %v424
        %v2585 = vpop.f32.mrb[0].mxu0
        %v2586 = vadd.f32 0.0, %v2585
        %v2587 = vpop.f32.mrb[0].mxu0
        %v2588 = vpop.f32.mrb[0].mxu0
        %v2589 = vadd.f32 0.0, %v2588
        %v2590 = vpop.f32.mrb[0].mxu0
        %2591 = vmatprep.mubr.bf16.mxu0 0
        %2592 = vmatmul.mubr.bf16.gmra.mrb[0].mxu0 %v427
        %v2593 = vpop.f32.mrb[0].mxu0
        %v2594 = vadd.f32 0.0, %v2593
        %v2595 = vpop.f32.mrb[0].mxu0
        %v2596 = vpop.f32.mrb[0].mxu0
        %v2597 = vadd.f32 0.0, %v2596
        %v2598 = vpop.f32.mrb[0].mxu0
        %2599 = vmatprep.mubr.bf16.mxu0 0
        %2600 = vmatmul.mubr.bf16.gmra.mrb[0].mxu0 %v430
        %v2601 = vpop.f32.mrb[0].mxu0
        %v2602 = vadd.f32 0.0, %v2601
        %v2603 = vpop.f32.mrb[0].mxu0
        %v2604 = vpop.f32.mrb[0].mxu0
        %v2605 = vadd.f32 0.0, %v2604
        %v2606 = vpop.f32.mrb[0].mxu0
        %2607 = vdwg.mxu0
        %v2609 = vsel %vm432, %v2377, 0
        %2611 = vmatprep.subr.bf16.mxu0 0
        %2612 = vmatpush1.bf16.msra.mxu0 %v2609
        %2613 = vmatprep.subr.bf16.mxu0 0
        %2614 = vmatpush1.bf16.msra.mxu0 0
        %2615 = vmatprep.subr.bf16.mxu0 0
        %2616 = vmatpush1.bf16.msra.mxu0 0
        %2617 = vmatprep.subr.bf16.mxu0 0
        %2618 = vmatpush1.bf16.msra.mxu0 0
        %2619 = vmatprep.subr.bf16.mxu0 0
        %2620 = vmatpush1.bf16.msra.mxu0 0
        %2621 = vmatprep.subr.bf16.mxu0 0
        %2622 = vmatpush1.bf16.msra.mxu0 0
        %2623 = vmatprep.subr.bf16.mxu0 0
        %2624 = vmatpush1.bf16.msra.mxu0 0
        %2625 = vmatprep.subr.bf16.mxu0 0
        %2626 = vmatpush1.bf16.msra.mxu0 0
        %2627 = vmatprep.subr.bf16.mxu0 0
        %2628 = vmatpush1.bf16.msra.mxu0 0
        %2629 = vmatprep.subr.bf16.mxu0 0
        %2630 = vmatpush1.bf16.msra.mxu0 0
        %2631 = vmatprep.subr.bf16.mxu0 0
        %2632 = vmatpush1.bf16.msra.mxu0 0
        %2633 = vmatprep.subr.bf16.mxu0 0
        %2634 = vmatpush1.bf16.msra.mxu0 0
        %2635 = vmatprep.subr.bf16.mxu0 0
        %2636 = vmatpush1.bf16.msra.mxu0 0
        %2637 = vmatprep.subr.bf16.mxu0 0
        %2638 = vmatpush1.bf16.msra.mxu0 0
        %2639 = vmatprep.subr.bf16.mxu0 0
        %2640 = vmatpush1.bf16.msra.mxu0 0
        %2641 = vmatprep.subr.bf16.mxu0 0
        %2642 = vmatpush1.bf16.msra.mxu0 0
        %2643 = vmatprep.mubr.bf16.mxu0 0
        %2644 = vmatmul.mubr.bf16.gmra.mrb[0].mxu0 %v676
        %v2645 = vpop.f32.mrb[0].mxu0
        %v2646 = vadd.f32 %v2418, %v2645
        %v2647 = vpop.f32.mrb[0].mxu0
        %v2648 = vpop.f32.mrb[0].mxu0
        %v2649 = vadd.f32 %v2421, %v2648
        %v2650 = vpop.f32.mrb[0].mxu0
        %2651 = vmatprep.mubr.bf16.mxu0 0
        %2652 = vmatmul.mubr.bf16.gmra.mrb[0].mxu0 %v679
        %v2653 = vpop.f32.mrb[0].mxu0
        %v2654 = vadd.f32 %v2426, %v2653
        %v2655 = vpop.f32.mrb[0].mxu0
        %v2656 = vpop.f32.mrb[0].mxu0
        %v2657 = vadd.f32 %v2429, %v2656
        %v2658 = vpop.f32.mrb[0].mxu0
        %2659 = vmatprep.mubr.bf16.mxu0 0
        %2660 = vmatmul.mubr.bf16.gmra.mrb[0].mxu0 %v682
        %v2661 = vpop.f32.mrb[0].mxu0
        %v2662 = vadd.f32 %v2434, %v2661
        %v2663 = vpop.f32.mrb[0].mxu0
        %v2664 = vpop.f32.mrb[0].mxu0
        %v2665 = vadd.f32 %v2437, %v2664
        %v2666 = vpop.f32.mrb[0].mxu0
        %2667 = vmatprep.mubr.bf16.mxu0 0
        %2668 = vmatmul.mubr.bf16.gmra.mrb[0].mxu0 %v685
        %v2669 = vpop.f32.mrb[0].mxu0
        %v2670 = vadd.f32 %v2442, %v2669
        %v2671 = vpop.f32.mrb[0].mxu0
        %v2672 = vpop.f32.mrb[0].mxu0
        %v2673 = vadd.f32 %v2445, %v2672
        %v2674 = vpop.f32.mrb[0].mxu0
        %2675 = vmatprep.mubr.bf16.mxu0 0
        %2676 = vmatmul.mubr.bf16.gmra.mrb[0].mxu0 %v688
        %v2677 = vpop.f32.mrb[0].mxu0
        %v2678 = vadd.f32 %v2450, %v2677
        %v2679 = vpop.f32.mrb[0].mxu0
        %v2680 = vpop.f32.mrb[0].mxu0
        %v2681 = vadd.f32 %v2453, %v2680
        %v2682 = vpop.f32.mrb[0].mxu0
        %2683 = vmatprep.mubr.bf16.mxu0 0
        %2684 = vmatmul.mubr.bf16.gmra.mrb[0].mxu0 %v691
        %v2685 = vpop.f32.mrb[0].mxu0
        %v2686 = vadd.f32 %v2458, %v2685
        %v2687 = vpop.f32.mrb[0].mxu0
        %v2688 = vpop.f32.mrb[0].mxu0
        %v2689 = vadd.f32 %v2461, %v2688
        %v2690 = vpop.f32.mrb[0].mxu0
        %2691 = vmatprep.mubr.bf16.mxu0 0
        %2692 = vmatmul.mubr.bf16.gmra.mrb[0].mxu0 %v694
        %v2693 = vpop.f32.mrb[0].mxu0
        %v2694 = vadd.f32 %v2466, %v2693
        %v2695 = vpop.f32.mrb[0].mxu0
        %v2696 = vpop.f32.mrb[0].mxu0
        %v2697 = vadd.f32 %v2469, %v2696
        %v2698 = vpop.f32.mrb[0].mxu0
        %2699 = vmatprep.mubr.bf16.mxu0 0
        %2700 = vmatmul.mubr.bf16.gmra.mrb[0].mxu0 %v697
        %v2701 = vpop.f32.mrb[0].mxu0
        %v2702 = vadd.f32 %v2474, %v2701
        %v2703 = vpop.f32.mrb[0].mxu0
        %v2704 = vpop.f32.mrb[0].mxu0
        %v2705 = vadd.f32 %v2477, %v2704
        %v2706 = vpop.f32.mrb[0].mxu0
        %2707 = vmatprep.mubr.bf16.mxu0 0
        %2708 = vmatmul.mubr.bf16.gmra.mrb[0].mxu0 %v700
        %v2709 = vpop.f32.mrb[0].mxu0
        %v2710 = vadd.f32 %v2482, %v2709
        %v2711 = vpop.f32.mrb[0].mxu0
        %v2712 = vpop.f32.mrb[0].mxu0
        %v2713 = vadd.f32 %v2485, %v2712
        %v2714 = vpop.f32.mrb[0].mxu0
        %2715 = vmatprep.mubr.bf16.mxu0 0
        %2716 = vmatmul.mubr.bf16.gmra.mrb[0].mxu0 %v703
        %v2717 = vpop.f32.mrb[0].mxu0
        %v2718 = vadd.f32 %v2490, %v2717
        %v2719 = vpop.f32.mrb[0].mxu0
        %v2720 = vpop.f32.mrb[0].mxu0
        %v2721 = vadd.f32 %v2493, %v2720
        %v2722 = vpop.f32.mrb[0].mxu0
        %2723 = vmatprep.mubr.bf16.mxu0 0
        %2724 = vmatmul.mubr.bf16.gmra.mrb[0].mxu0 %v706
        %v2725 = vpop.f32.mrb[0].mxu0
        %v2726 = vadd.f32 %v2498, %v2725
        %v2727 = vpop.f32.mrb[0].mxu0
        %v2728 = vpop.f32.mrb[0].mxu0
        %v2729 = vadd.f32 %v2501, %v2728
        %v2730 = vpop.f32.mrb[0].mxu0
        %2731 = vmatprep.mubr.bf16.mxu0 0
        %2732 = vmatmul.mubr.bf16.gmra.mrb[0].mxu0 %v709
        %v2733 = vpop.f32.mrb[0].mxu0
        %v2734 = vadd.f32 %v2506, %v2733
        %v2735 = vpop.f32.mrb[0].mxu0
        %v2736 = vpop.f32.mrb[0].mxu0
        %v2737 = vadd.f32 %v2509, %v2736
        %v2738 = vpop.f32.mrb[0].mxu0
        %2739 = vmatprep.mubr.bf16.mxu0 0
        %2740 = vmatmul.mubr.bf16.gmra.mrb[0].mxu0 %v712
        %v2741 = vpop.f32.mrb[0].mxu0
        %v2742 = vadd.f32 %v2514, %v2741
        %v2743 = vpop.f32.mrb[0].mxu0
        %v2744 = vpop.f32.mrb[0].mxu0
        %v2745 = vadd.f32 %v2517, %v2744
        %v2746 = vpop.f32.mrb[0].mxu0
        %2747 = vmatprep.mubr.bf16.mxu0 0
        %2748 = vmatmul.mubr.bf16.gmra.mrb[0].mxu0 %v715
        %v2749 = vpop.f32.mrb[0].mxu0
        %v2750 = vadd.f32 %v2522, %v2749
        %v2751 = vpop.f32.mrb[0].mxu0
        %v2752 = vpop.f32.mrb[0].mxu0
        %v2753 = vadd.f32 %v2525, %v2752
        %v2754 = vpop.f32.mrb[0].mxu0
        %2755 = vmatprep.mubr.bf16.mxu0 0
        %2756 = vmatmul.mubr.bf16.gmra.mrb[0].mxu0 %v718
        %v2757 = vpop.f32.mrb[0].mxu0
        %v2758 = vadd.f32 %v2530, %v2757
        %v2759 = vpop.f32.mrb[0].mxu0
        %v2760 = vpop.f32.mrb[0].mxu0
        %v2761 = vadd.f32 %v2533, %v2760
        %v2762 = vpop.f32.mrb[0].mxu0
        %2763 = vmatprep.mubr.bf16.mxu0 0
        %2764 = vmatmul.mubr.bf16.gmra.mrb[0].mxu0 %v721
        %v2765 = vpop.f32.mrb[0].mxu0
        %v2766 = vadd.f32 %v2538, %v2765
        %v2767 = vpop.f32.mrb[0].mxu0
        %v2768 = vpop.f32.mrb[0].mxu0
        %v2769 = vadd.f32 %v2541, %v2768
        %v2770 = vpop.f32.mrb[0].mxu0
        %2771 = vmatprep.mubr.bf16.mxu0 0
        %2772 = vmatmul.mubr.bf16.gmra.mrb[0].mxu0 %v724
        %v2773 = vpop.f32.mrb[0].mxu0
        %v2774 = vadd.f32 %v2546, %v2773
        %v2775 = vpop.f32.mrb[0].mxu0
        %v2776 = vpop.f32.mrb[0].mxu0
        %v2777 = vadd.f32 %v2549, %v2776
        %v2778 = vpop.f32.mrb[0].mxu0
        %2779 = vmatprep.mubr.bf16.mxu0 0
        %2780 = vmatmul.mubr.bf16.gmra.mrb[0].mxu0 %v727
        %v2781 = vpop.f32.mrb[0].mxu0
        %v2782 = vadd.f32 %v2554, %v2781
        %v2783 = vpop.f32.mrb[0].mxu0
        %v2784 = vpop.f32.mrb[0].mxu0
        %v2785 = vadd.f32 %v2557, %v2784
        %v2786 = vpop.f32.mrb[0].mxu0
        %2787 = vmatprep.mubr.bf16.mxu0 0
        %2788 = vmatmul.mubr.bf16.gmra.mrb[0].mxu0 %v730
        %v2789 = vpop.f32.mrb[0].mxu0
        %v2790 = vadd.f32 %v2562, %v2789
        %v2791 = vpop.f32.mrb[0].mxu0
        %v2792 = vpop.f32.mrb[0].mxu0
        %v2793 = vadd.f32 %v2565, %v2792
        %v2794 = vpop.f32.mrb[0].mxu0
        %2795 = vmatprep.mubr.bf16.mxu0 0
        %2796 = vmatmul.mubr.bf16.gmra.mrb[0].mxu0 %v733
        %v2797 = vpop.f32.mrb[0].mxu0
        %v2798 = vadd.f32 %v2570, %v2797
        %v2799 = vpop.f32.mrb[0].mxu0
        %v2800 = vpop.f32.mrb[0].mxu0
        %v2801 = vadd.f32 %v2573, %v2800
        %v2802 = vpop.f32.mrb[0].mxu0
        %2803 = vmatprep.mubr.bf16.mxu0 0
        %2804 = vmatmul.mubr.bf16.gmra.mrb[0].mxu0 %v736
        %v2805 = vpop.f32.mrb[0].mxu0
        %v2806 = vadd.f32 %v2578, %v2805
        %v2807 = vpop.f32.mrb[0].mxu0
        %v2808 = vpop.f32.mrb[0].mxu0
        %v2809 = vadd.f32 %v2581, %v2808
        %v2810 = vpop.f32.mrb[0].mxu0
        %2811 = vmatprep.mubr.bf16.mxu0 0
        %2812 = vmatmul.mubr.bf16.gmra.mrb[0].mxu0 %v739
        %v2813 = vpop.f32.mrb[0].mxu0
        %v2814 = vadd.f32 %v2586, %v2813
        %v2815 = vpop.f32.mrb[0].mxu0
        %v2816 = vpop.f32.mrb[0].mxu0
        %v2817 = vadd.f32 %v2589, %v2816
        %v2818 = vpop.f32.mrb[0].mxu0
        %2819 = vmatprep.mubr.bf16.mxu0 0
        %2820 = vmatmul.mubr.bf16.gmra.mrb[0].mxu0 %v742
        %v2821 = vpop.f32.mrb[0].mxu0
        %v2822 = vadd.f32 %v2594, %v2821
        %v2823 = vpop.f32.mrb[0].mxu0
        %v2824 = vpop.f32.mrb[0].mxu0
        %v2825 = vadd.f32 %v2597, %v2824
        %v2826 = vpop.f32.mrb[0].mxu0
        %2827 = vmatprep.mubr.bf16.mxu0 0
        %2828 = vmatmul.mubr.bf16.gmra.mrb[0].mxu0 %v745
        %v2829 = vpop.f32.mrb[0].mxu0
        %v2830 = vadd.f32 %v2602, %v2829
        %v2831 = vpop.f32.mrb[0].mxu0
        %v2832 = vpop.f32.mrb[0].mxu0
        %v2833 = vadd.f32 %v2605, %v2832
        %v2834 = vpop.f32.mrb[0].mxu0
        %2835 = vdwg.mxu0
        %s2836 = scalar_lea.vmem %s1, 32
        %v2837 = vld [vmem:[%s2836] sm:$0xf]
        %v2839 = vsel %vm432, %v2837, 0
        %2841 = vmatprep.subr.bf16.mxu0 0
        %2842 = vmatpush1.bf16.msra.mxu0 %v2839
        %2843 = vmatprep.subr.bf16.mxu0 0
        %2844 = vmatpush1.bf16.msra.mxu0 0
        %2845 = vmatprep.subr.bf16.mxu0 0
        %2846 = vmatpush1.bf16.msra.mxu0 0
        %2847 = vmatprep.subr.bf16.mxu0 0
        %2848 = vmatpush1.bf16.msra.mxu0 0
        %2849 = vmatprep.subr.bf16.mxu0 0
        %2850 = vmatpush1.bf16.msra.mxu0 0
        %2851 = vmatprep.subr.bf16.mxu0 0
        %2852 = vmatpush1.bf16.msra.mxu0 0
        %2853 = vmatprep.subr.bf16.mxu0 0
        %2854 = vmatpush1.bf16.msra.mxu0 0
        %2855 = vmatprep.subr.bf16.mxu0 0
        %2856 = vmatpush1.bf16.msra.mxu0 0
        %2857 = vmatprep.subr.bf16.mxu0 0
        %2858 = vmatpush1.bf16.msra.mxu0 0
        %2859 = vmatprep.subr.bf16.mxu0 0
        %2860 = vmatpush1.bf16.msra.mxu0 0
        %2861 = vmatprep.subr.bf16.mxu0 0
        %2862 = vmatpush1.bf16.msra.mxu0 0
        %2863 = vmatprep.subr.bf16.mxu0 0
        %2864 = vmatpush1.bf16.msra.mxu0 0
        %2865 = vmatprep.subr.bf16.mxu0 0
        %2866 = vmatpush1.bf16.msra.mxu0 0
        %2867 = vmatprep.subr.bf16.mxu0 0
        %2868 = vmatpush1.bf16.msra.mxu0 0
        %2869 = vmatprep.subr.bf16.mxu0 0
        %2870 = vmatpush1.bf16.msra.mxu0 0
        %2871 = vmatprep.subr.bf16.mxu0 0
        %2872 = vmatpush1.bf16.msra.mxu0 0
        %2873 = vmatprep.mubr.bf16.mxu0 0
        %2874 = vmatmul.mubr.bf16.gmra.mrb[0].mxu0 %v1130
        %v2875 = vpop.f32.mrb[0].mxu0
        %v2876 = vadd.f32 0.0, %v2875
        %v2877 = vpop.f32.mrb[0].mxu0
        %v2878 = vpop.f32.mrb[0].mxu0
        %v2879 = vadd.f32 0.0, %v2878
        %v2880 = vpop.f32.mrb[0].mxu0
        %2881 = vmatprep.mubr.bf16.mxu0 0
        %2882 = vmatmul.mubr.bf16.gmra.mrb[0].mxu0 %v1133
        %v2883 = vpop.f32.mrb[0].mxu0
        %v2884 = vadd.f32 0.0, %v2883
        %v2885 = vpop.f32.mrb[0].mxu0
        %v2886 = vpop.f32.mrb[0].mxu0
        %v2887 = vadd.f32 0.0, %v2886
        %v2888 = vpop.f32.mrb[0].mxu0
        %2889 = vmatprep.mubr.bf16.mxu0 0
        %2890 = vmatmul.mubr.bf16.gmra.mrb[0].mxu0 %v1136
        %v2891 = vpop.f32.mrb[0].mxu0
        %v2892 = vadd.f32 0.0, %v2891
        %v2893 = vpop.f32.mrb[0].mxu0
        %v2894 = vpop.f32.mrb[0].mxu0
        %v2895 = vadd.f32 0.0, %v2894
        %v2896 = vpop.f32.mrb[0].mxu0
        %2897 = vmatprep.mubr.bf16.mxu0 0
        %2898 = vmatmul.mubr.bf16.gmra.mrb[0].mxu0 %v1139
        %v2899 = vpop.f32.mrb[0].mxu0
        %v2900 = vadd.f32 0.0, %v2899
        %v2901 = vpop.f32.mrb[0].mxu0
        %v2902 = vpop.f32.mrb[0].mxu0
        %v2903 = vadd.f32 0.0, %v2902
        %v2904 = vpop.f32.mrb[0].mxu0
        %2905 = vmatprep.mubr.bf16.mxu0 0
        %2906 = vmatmul.mubr.bf16.gmra.mrb[0].mxu0 %v1142
        %v2907 = vpop.f32.mrb[0].mxu0
        %v2908 = vadd.f32 0.0, %v2907
        %v2909 = vpop.f32.mrb[0].mxu0
        %v2910 = vpop.f32.mrb[0].mxu0
        %v2911 = vadd.f32 0.0, %v2910
        %v2912 = vpop.f32.mrb[0].mxu0
        %2913 = vmatprep.mubr.bf16.mxu0 0
        %2914 = vmatmul.mubr.bf16.gmra.mrb[0].mxu0 %v1145
        %v2915 = vpop.f32.mrb[0].mxu0
        %v2916 = vadd.f32 0.0, %v2915
        %v2917 = vpop.f32.mrb[0].mxu0
        %v2918 = vpop.f32.mrb[0].mxu0
        %v2919 = vadd.f32 0.0, %v2918
        %v2920 = vpop.f32.mrb[0].mxu0
        %2921 = vmatprep.mubr.bf16.mxu0 0
        %2922 = vmatmul.mubr.bf16.gmra.mrb[0].mxu0 %v1148
        %v2923 = vpop.f32.mrb[0].mxu0
        %v2924 = vadd.f32 0.0, %v2923
        %v2925 = vpop.f32.mrb[0].mxu0
        %v2926 = vpop.f32.mrb[0].mxu0
        %v2927 = vadd.f32 0.0, %v2926
        %v2928 = vpop.f32.mrb[0].mxu0
        %2929 = vmatprep.mubr.bf16.mxu0 0
        %2930 = vmatmul.mubr.bf16.gmra.mrb[0].mxu0 %v1151
        %v2931 = vpop.f32.mrb[0].mxu0
        %v2932 = vadd.f32 0.0, %v2931
        %v2933 = vpop.f32.mrb[0].mxu0
        %v2934 = vpop.f32.mrb[0].mxu0
        %v2935 = vadd.f32 0.0, %v2934
        %v2936 = vpop.f32.mrb[0].mxu0
        %2937 = vmatprep.mubr.bf16.mxu0 0
        %2938 = vmatmul.mubr.bf16.gmra.mrb[0].mxu0 %v1154
        %v2939 = vpop.f32.mrb[0].mxu0
        %v2940 = vadd.f32 0.0, %v2939
        %v2941 = vpop.f32.mrb[0].mxu0
        %v2942 = vpop.f32.mrb[0].mxu0
        %v2943 = vadd.f32 0.0, %v2942
        %v2944 = vpop.f32.mrb[0].mxu0
        %2945 = vmatprep.mubr.bf16.mxu0 0
        %2946 = vmatmul.mubr.bf16.gmra.mrb[0].mxu0 %v1157
        %v2947 = vpop.f32.mrb[0].mxu0
        %v2948 = vadd.f32 0.0, %v2947
        %v2949 = vpop.f32.mrb[0].mxu0
        %v2950 = vpop.f32.mrb[0].mxu0
        %v2951 = vadd.f32 0.0, %v2950
        %v2952 = vpop.f32.mrb[0].mxu0
        %2953 = vmatprep.mubr.bf16.mxu0 0
        %2954 = vmatmul.mubr.bf16.gmra.mrb[0].mxu0 %v1160
        %v2955 = vpop.f32.mrb[0].mxu0
        %v2956 = vadd.f32 0.0, %v2955
        %v2957 = vpop.f32.mrb[0].mxu0
        %v2958 = vpop.f32.mrb[0].mxu0
        %v2959 = vadd.f32 0.0, %v2958
        %v2960 = vpop.f32.mrb[0].mxu0
        %2961 = vmatprep.mubr.bf16.mxu0 0
        %2962 = vmatmul.mubr.bf16.gmra.mrb[0].mxu0 %v1163
        %v2963 = vpop.f32.mrb[0].mxu0
        %v2964 = vadd.f32 0.0, %v2963
        %v2965 = vpop.f32.mrb[0].mxu0
        %v2966 = vpop.f32.mrb[0].mxu0
        %v2967 = vadd.f32 0.0, %v2966
        %v2968 = vpop.f32.mrb[0].mxu0
        %2969 = vmatprep.mubr.bf16.mxu0 0
        %2970 = vmatmul.mubr.bf16.gmra.mrb[0].mxu0 %v1166
        %v2971 = vpop.f32.mrb[0].mxu0
        %v2972 = vadd.f32 0.0, %v2971
        %v2973 = vpop.f32.mrb[0].mxu0
        %v2974 = vpop.f32.mrb[0].mxu0
        %v2975 = vadd.f32 0.0, %v2974
        %v2976 = vpop.f32.mrb[0].mxu0
        %2977 = vmatprep.mubr.bf16.mxu0 0
        %2978 = vmatmul.mubr.bf16.gmra.mrb[0].mxu0 %v1169
        %v2979 = vpop.f32.mrb[0].mxu0
        %v2980 = vadd.f32 0.0, %v2979
        %v2981 = vpop.f32.mrb[0].mxu0
        %v2982 = vpop.f32.mrb[0].mxu0
        %v2983 = vadd.f32 0.0, %v2982
        %v2984 = vpop.f32.mrb[0].mxu0
        %2985 = vmatprep.mubr.bf16.mxu0 0
        %2986 = vmatmul.mubr.bf16.gmra.mrb[0].mxu0 %v1172
        %v2987 = vpop.f32.mrb[0].mxu0
        %v2988 = vadd.f32 0.0, %v2987
        %v2989 = vpop.f32.mrb[0].mxu0
        %v2990 = vpop.f32.mrb[0].mxu0
        %v2991 = vadd.f32 0.0, %v2990
        %v2992 = vpop.f32.mrb[0].mxu0
        %2993 = vmatprep.mubr.bf16.mxu0 0
        %2994 = vmatmul.mubr.bf16.gmra.mrb[0].mxu0 %v1175
        %v2995 = vpop.f32.mrb[0].mxu0
        %v2996 = vadd.f32 0.0, %v2995
        %v2997 = vpop.f32.mrb[0].mxu0
        %v2998 = vpop.f32.mrb[0].mxu0
        %v2999 = vadd.f32 0.0, %v2998
        %v3000 = vpop.f32.mrb[0].mxu0
        %3001 = vmatprep.mubr.bf16.mxu0 0
        %3002 = vmatmul.mubr.bf16.gmra.mrb[0].mxu0 %v1178
        %v3003 = vpop.f32.mrb[0].mxu0
        %v3004 = vadd.f32 0.0, %v3003
        %v3005 = vpop.f32.mrb[0].mxu0
        %v3006 = vpop.f32.mrb[0].mxu0
        %v3007 = vadd.f32 0.0, %v3006
        %v3008 = vpop.f32.mrb[0].mxu0
        %3009 = vmatprep.mubr.bf16.mxu0 0
        %3010 = vmatmul.mubr.bf16.gmra.mrb[0].mxu0 %v1181
        %v3011 = vpop.f32.mrb[0].mxu0
        %v3012 = vadd.f32 0.0, %v3011
        %v3013 = vpop.f32.mrb[0].mxu0
        %v3014 = vpop.f32.mrb[0].mxu0
        %v3015 = vadd.f32 0.0, %v3014
        %v3016 = vpop.f32.mrb[0].mxu0
        %3017 = vmatprep.mubr.bf16.mxu0 0
        %3018 = vmatmul.mubr.bf16.gmra.mrb[0].mxu0 %v1184
        %v3019 = vpop.f32.mrb[0].mxu0
        %v3020 = vadd.f32 0.0, %v3019
        %v3021 = vpop.f32.mrb[0].mxu0
        %v3022 = vpop.f32.mrb[0].mxu0
        %v3023 = vadd.f32 0.0, %v3022
        %v3024 = vpop.f32.mrb[0].mxu0
        %3025 = vmatprep.mubr.bf16.mxu0 0
        %3026 = vmatmul.mubr.bf16.gmra.mrb[0].mxu0 %v1187
        %v3027 = vpop.f32.mrb[0].mxu0
        %v3028 = vadd.f32 0.0, %v3027
        %v3029 = vpop.f32.mrb[0].mxu0
        %v3030 = vpop.f32.mrb[0].mxu0
        %v3031 = vadd.f32 0.0, %v3030
        %v3032 = vpop.f32.mrb[0].mxu0
        %3033 = vmatprep.mubr.bf16.mxu0 0
        %3034 = vmatmul.mubr.bf16.gmra.mrb[0].mxu0 %v1190
        %v3035 = vpop.f32.mrb[0].mxu0
        %v3036 = vadd.f32 0.0, %v3035
        %v3037 = vpop.f32.mrb[0].mxu0
        %v3038 = vpop.f32.mrb[0].mxu0
        %v3039 = vadd.f32 0.0, %v3038
        %v3040 = vpop.f32.mrb[0].mxu0
        %3041 = vmatprep.mubr.bf16.mxu0 0
        %3042 = vmatmul.mubr.bf16.gmra.mrb[0].mxu0 %v1193
        %v3043 = vpop.f32.mrb[0].mxu0
        %v3044 = vadd.f32 0.0, %v3043
        %v3045 = vpop.f32.mrb[0].mxu0
        %v3046 = vpop.f32.mrb[0].mxu0
        %v3047 = vadd.f32 0.0, %v3046
        %v3048 = vpop.f32.mrb[0].mxu0
        %3049 = vmatprep.mubr.bf16.mxu0 0
        %3050 = vmatmul.mubr.bf16.gmra.mrb[0].mxu0 %v1196
        %v3051 = vpop.f32.mrb[0].mxu0
        %v3052 = vadd.f32 0.0, %v3051
        %v3053 = vpop.f32.mrb[0].mxu0
        %v3054 = vpop.f32.mrb[0].mxu0
        %v3055 = vadd.f32 0.0, %v3054
        %v3056 = vpop.f32.mrb[0].mxu0
        %3057 = vmatprep.mubr.bf16.mxu0 0
        %3058 = vmatmul.mubr.bf16.gmra.mrb[0].mxu0 %v1199
        %v3059 = vpop.f32.mrb[0].mxu0
        %v3060 = vadd.f32 0.0, %v3059
        %v3061 = vpop.f32.mrb[0].mxu0
        %v3062 = vpop.f32.mrb[0].mxu0
        %v3063 = vadd.f32 0.0, %v3062
        %v3064 = vpop.f32.mrb[0].mxu0
        %3065 = vdwg.mxu0
        %v3066 = vadd.f32 %v2646, %v2876
        %v3067 = vadd.f32 %v2649, %v2879
        %v3068 = vadd.f32 %v2654, %v2884
        %v3069 = vadd.f32 %v2657, %v2887
        %v3070 = vadd.f32 %v2662, %v2892
        %v3071 = vadd.f32 %v2665, %v2895
        %v3072 = vadd.f32 %v2670, %v2900
        %v3073 = vadd.f32 %v2673, %v2903
        %v3074 = vadd.f32 %v2678, %v2908
        %v3075 = vadd.f32 %v2681, %v2911
        %v3076 = vadd.f32 %v2686, %v2916
        %v3077 = vadd.f32 %v2689, %v2919
        %v3078 = vadd.f32 %v2694, %v2924
        %v3079 = vadd.f32 %v2697, %v2927
        %v3080 = vadd.f32 %v2702, %v2932
        %v3081 = vadd.f32 %v2705, %v2935
        %v3082 = vadd.f32 %v2710, %v2940
        %v3083 = vadd.f32 %v2713, %v2943
        %v3084 = vadd.f32 %v2718, %v2948
        %v3085 = vadd.f32 %v2721, %v2951
        %v3086 = vadd.f32 %v2726, %v2956
        %v3087 = vadd.f32 %v2729, %v2959
        %v3088 = vadd.f32 %v2734, %v2964
        %v3089 = vadd.f32 %v2737, %v2967
        %v3090 = vadd.f32 %v2742, %v2972
        %v3091 = vadd.f32 %v2745, %v2975
        %v3092 = vadd.f32 %v2750, %v2980
        %v3093 = vadd.f32 %v2753, %v2983
        %v3094 = vadd.f32 %v2758, %v2988
        %v3095 = vadd.f32 %v2761, %v2991
        %v3096 = vadd.f32 %v2766, %v2996
        %v3097 = vadd.f32 %v2769, %v2999
        %v3098 = vadd.f32 %v2774, %v3004
        %v3099 = vadd.f32 %v2777, %v3007
        %v3100 = vadd.f32 %v2782, %v3012
        %v3101 = vadd.f32 %v2785, %v3015
        %v3102 = vadd.f32 %v2790, %v3020
        %v3103 = vadd.f32 %v2793, %v3023
        %v3104 = vadd.f32 %v2798, %v3028
        %v3105 = vadd.f32 %v2801, %v3031
        %v3106 = vadd.f32 %v2806, %v3036
        %v3107 = vadd.f32 %v2809, %v3039
        %v3108 = vadd.f32 %v2814, %v3044
        %v3109 = vadd.f32 %v2817, %v3047
        %v3110 = vadd.f32 %v2822, %v3052
        %v3111 = vadd.f32 %v2825, %v3055
        %v3112 = vadd.f32 %v2830, %v3060
        %v3113 = vadd.f32 %v2833, %v3063
        %vm3162 = vcmask 1045504
        %v3163 = vrot.slane %v3066, 2
        %v3164 = vrot.slane %v3067, 2
        %v3165 = vsel %vm3162, %v3163, %v3164
        %v3166 = vrot.slane %v3068, 2
        %v3167 = vsel %vm3162, %v3164, %v3166
        %v3168 = vrot.slane %v3069, 2
        %v3169 = vrot.slane %v3070, 2
        %v3170 = vsel %vm3162, %v3168, %v3169
        %v3171 = vrot.slane %v3071, 2
        %v3172 = vsel %vm3162, %v3169, %v3171
        %v3173 = vrot.slane %v3072, 2
        %v3174 = vrot.slane %v3073, 2
        %v3175 = vsel %vm3162, %v3173, %v3174
        %v3176 = vrot.slane %v3074, 2
        %v3177 = vsel %vm3162, %v3174, %v3176
        %v3178 = vrot.slane %v3075, 2
        %v3179 = vrot.slane %v3076, 2
        %v3180 = vsel %vm3162, %v3178, %v3179
        %v3181 = vrot.slane %v3077, 2
        %v3182 = vsel %vm3162, %v3179, %v3181
        %v3183 = vrot.slane %v3078, 2
        %v3184 = vrot.slane %v3079, 2
        %v3185 = vsel %vm3162, %v3183, %v3184
        %v3186 = vrot.slane %v3080, 2
        %v3187 = vsel %vm3162, %v3184, %v3186
        %v3188 = vrot.slane %v3081, 2
        %v3189 = vrot.slane %v3082, 2
        %v3190 = vsel %vm3162, %v3188, %v3189
        %v3191 = vrot.slane %v3083, 2
        %v3192 = vsel %vm3162, %v3189, %v3191
        %v3193 = vrot.slane %v3084, 2
        %v3194 = vrot.slane %v3085, 2
        %v3195 = vsel %vm3162, %v3193, %v3194
        %v3196 = vrot.slane %v3086, 2
        %v3197 = vsel %vm3162, %v3194, %v3196
        %v3198 = vrot.slane %v3087, 2
        %v3199 = vrot.slane %v3088, 2
        %v3200 = vsel %vm3162, %v3198, %v3199
        %v3201 = vrot.slane %v3089, 2
        %v3202 = vsel %vm3162, %v3199, %v3201
        %v3203 = vrot.slane %v3090, 2
        %v3204 = vrot.slane %v3091, 2
        %v3205 = vsel %vm3162, %v3203, %v3204
        %v3206 = vrot.slane %v3092, 2
        %v3207 = vsel %vm3162, %v3204, %v3206
        %v3208 = vrot.slane %v3093, 2
        %v3209 = vrot.slane %v3094, 2
        %v3210 = vsel %vm3162, %v3208, %v3209
        %v3211 = vrot.slane %v3095, 2
        %v3212 = vsel %vm3162, %v3209, %v3211
        %v3213 = vrot.slane %v3096, 2
        %v3214 = vrot.slane %v3097, 2
        %v3215 = vsel %vm3162, %v3213, %v3214
        %v3216 = vrot.slane %v3098, 2
        %v3217 = vsel %vm3162, %v3214, %v3216
        %v3218 = vrot.slane %v3099, 2
        %v3219 = vrot.slane %v3100, 2
        %v3220 = vsel %vm3162, %v3218, %v3219
        %v3221 = vrot.slane %v3101, 2
        %v3222 = vsel %vm3162, %v3219, %v3221
        %v3223 = vrot.slane %v3102, 2
        %v3224 = vrot.slane %v3103, 2
        %v3225 = vsel %vm3162, %v3223, %v3224
        %v3226 = vrot.slane %v3104, 2
        %v3227 = vsel %vm3162, %v3224, %v3226
        %v3228 = vrot.slane %v3105, 2
        %v3229 = vrot.slane %v3106, 2
        %v3230 = vsel %vm3162, %v3228, %v3229
        %v3231 = vrot.slane %v3107, 2
        %v3232 = vsel %vm3162, %v3229, %v3231
        %v3233 = vrot.slane %v3108, 2
        %v3234 = vrot.slane %v3109, 2
        %v3235 = vsel %vm3162, %v3233, %v3234
        %v3236 = vrot.slane %v3110, 2
        %v3237 = vsel %vm3162, %v3234, %v3236
        %v3238 = vrot.slane %v3111, 2
        %v3239 = vrot.slane %v3112, 2
        %v3240 = vsel %vm3162, %v3238, %v3239
        %v3241 = vrot.slane %v3113, 2
        %v3242 = vsel %vm3162, %v3239, %v3241
        %v3275 = vadd.f32 %v2344, %v3165
        %v3276 = vadd.f32 %v2345, %v3167
        %v3277 = vadd.f32 %v2346, %v3170
        %v3278 = vadd.f32 %v2347, %v3172
        %v3279 = vadd.f32 %v2348, %v3175
        %v3280 = vadd.f32 %v2349, %v3177
        %v3281 = vadd.f32 %v2350, %v3180
        %v3282 = vadd.f32 %v2351, %v3182
        %v3283 = vadd.f32 %v2352, %v3185
        %v3284 = vadd.f32 %v2353, %v3187
        %v3285 = vadd.f32 %v2354, %v3190
        %v3286 = vadd.f32 %v2355, %v3192
        %v3287 = vadd.f32 %v2356, %v3195
        %v3288 = vadd.f32 %v2357, %v3197
        %v3289 = vadd.f32 %v2358, %v3200
        %v3290 = vadd.f32 %v2359, %v3202
        %v3291 = vadd.f32 %v2360, %v3205
        %v3292 = vadd.f32 %v2361, %v3207
        %v3293 = vadd.f32 %v2362, %v3210
        %v3294 = vadd.f32 %v2363, %v3212
        %v3295 = vadd.f32 %v2364, %v3215
        %v3296 = vadd.f32 %v2365, %v3217
        %v3297 = vadd.f32 %v2366, %v3220
        %v3298 = vadd.f32 %v2367, %v3222
        %v3299 = vadd.f32 %v2368, %v3225
        %v3300 = vadd.f32 %v2369, %v3227
        %v3301 = vadd.f32 %v2370, %v3230
        %v3302 = vadd.f32 %v2371, %v3232
        %v3303 = vadd.f32 %v2372, %v3235
        %v3304 = vadd.f32 %v2373, %v3237
        %v3305 = vadd.f32 %v2374, %v3240
        %v3306 = vadd.f32 %v2375, %v3242
        %v3307 = vld [vmem:[%s2] sm:$0x1]
        %v3309 = vlaneseq
        %v3310 = vshrl.u32 %v3309, 7
        %v3311 = vsub.s32 0, %v3310
        %v3312 = vrot.slane %v3307, %v3311
        %v3314 = vadd.f32 %v3275, %v3312
        %v3315 = vadd.f32 %v3276, %v3312
        %v3316 = vadd.f32 %v3277, %v3312
        %v3317 = vadd.f32 %v3278, %v3312
        %v3318 = vadd.f32 %v3279, %v3312
        %v3319 = vadd.f32 %v3280, %v3312
        %v3320 = vadd.f32 %v3281, %v3312
        %v3321 = vadd.f32 %v3282, %v3312
        %v3322 = vadd.f32 %v3283, %v3312
        %v3323 = vadd.f32 %v3284, %v3312
        %v3324 = vadd.f32 %v3285, %v3312
        %v3325 = vadd.f32 %v3286, %v3312
        %v3326 = vadd.f32 %v3287, %v3312
        %v3327 = vadd.f32 %v3288, %v3312
        %v3328 = vadd.f32 %v3289, %v3312
        %v3329 = vadd.f32 %v3290, %v3312
        %v3330 = vadd.f32 %v3291, %v3312
        %v3331 = vadd.f32 %v3292, %v3312
        %v3332 = vadd.f32 %v3293, %v3312
        %v3333 = vadd.f32 %v3294, %v3312
        %v3334 = vadd.f32 %v3295, %v3312
        %v3335 = vadd.f32 %v3296, %v3312
        %v3336 = vadd.f32 %v3297, %v3312
        %v3337 = vadd.f32 %v3298, %v3312
        %v3338 = vadd.f32 %v3299, %v3312
        %v3339 = vadd.f32 %v3300, %v3312
        %v3340 = vadd.f32 %v3301, %v3312
        %v3341 = vadd.f32 %v3302, %v3312
        %v3342 = vadd.f32 %v3303, %v3312
        %v3343 = vadd.f32 %v3304, %v3312
        %v3344 = vadd.f32 %v3305, %v3312
        %v3345 = vadd.f32 %v3306, %v3312
        %v3346 = vpack.c.bf16 %v3315, %v3314
        %v3347 = vpack.c.bf16 %v3317, %v3316
        %v3348 = vpack.c.bf16 %v3319, %v3318
        %v3349 = vpack.c.bf16 %v3321, %v3320
        %v3350 = vpack.c.bf16 %v3323, %v3322
        %v3351 = vpack.c.bf16 %v3325, %v3324
        %v3352 = vpack.c.bf16 %v3327, %v3326
        %v3353 = vpack.c.bf16 %v3329, %v3328
        %v3354 = vpack.c.bf16 %v3331, %v3330
        %v3355 = vpack.c.bf16 %v3333, %v3332
        %v3356 = vpack.c.bf16 %v3335, %v3334
        %v3357 = vpack.c.bf16 %v3337, %v3336
        %v3358 = vpack.c.bf16 %v3339, %v3338
        %v3359 = vpack.c.bf16 %v3341, %v3340
        %v3360 = vpack.c.bf16 %v3343, %v3342
        %v3361 = vpack.c.bf16 %v3345, %v3344
        %v3378 = vunpack.c.l.b16 %v3346
        %v3379 = vunpack.c.h.b16 %v3346
        %v3380 = vunpack.c.l.b16 %v3347
        %v3381 = vunpack.c.h.b16 %v3347
        %v3382 = vunpack.c.l.b16 %v3348
        %v3383 = vunpack.c.h.b16 %v3348
        %v3384 = vunpack.c.l.b16 %v3349
        %v3385 = vunpack.c.h.b16 %v3349
        %v3386 = vunpack.c.l.b16 %v3350
        %v3387 = vunpack.c.h.b16 %v3350
        %v3388 = vunpack.c.l.b16 %v3351
        %v3389 = vunpack.c.h.b16 %v3351
        %v3390 = vunpack.c.l.b16 %v3352
        %v3391 = vunpack.c.h.b16 %v3352
        %v3392 = vunpack.c.l.b16 %v3353
        %v3393 = vunpack.c.h.b16 %v3353
        %v3394 = vunpack.c.l.b16 %v3354
        %v3395 = vunpack.c.h.b16 %v3354
        %v3396 = vunpack.c.l.b16 %v3355
        %v3397 = vunpack.c.h.b16 %v3355
        %v3398 = vunpack.c.l.b16 %v3356
        %v3399 = vunpack.c.h.b16 %v3356
        %v3400 = vunpack.c.l.b16 %v3357
        %v3401 = vunpack.c.h.b16 %v3357
        %v3402 = vunpack.c.l.b16 %v3358
        %v3403 = vunpack.c.h.b16 %v3358
        %v3404 = vunpack.c.l.b16 %v3359
        %v3405 = vunpack.c.h.b16 %v3359
        %v3406 = vunpack.c.l.b16 %v3360
        %v3407 = vunpack.c.h.b16 %v3360
        %v3408 = vunpack.c.l.b16 %v3361
        %v3409 = vunpack.c.h.b16 %v3361
        %v3410 = vpack.c.b16 %v3378, %v3378
        %v3411 = vpack.c.b16 %v3379, %v3379
        %v3412 = vpack.c.b16 %v3380, %v3380
        %v3413 = vpack.c.b16 %v3381, %v3381
        %v3414 = vpack.c.b16 %v3382, %v3382
        %v3415 = vpack.c.b16 %v3383, %v3383
        %v3416 = vpack.c.b16 %v3384, %v3384
        %v3417 = vpack.c.b16 %v3385, %v3385
        %v3418 = vpack.c.b16 %v3386, %v3386
        %v3419 = vpack.c.b16 %v3387, %v3387
        %v3420 = vpack.c.b16 %v3388, %v3388
        %v3421 = vpack.c.b16 %v3389, %v3389
        %v3422 = vpack.c.b16 %v3390, %v3390
        %v3423 = vpack.c.b16 %v3391, %v3391
        %v3424 = vpack.c.b16 %v3392, %v3392
        %v3425 = vpack.c.b16 %v3393, %v3393
        %v3426 = vpack.c.b16 %v3394, %v3394
        %v3427 = vpack.c.b16 %v3395, %v3395
        %v3428 = vpack.c.b16 %v3396, %v3396
        %v3429 = vpack.c.b16 %v3397, %v3397
        %v3430 = vpack.c.b16 %v3398, %v3398
        %v3431 = vpack.c.b16 %v3399, %v3399
        %v3432 = vpack.c.b16 %v3400, %v3400
        %v3433 = vpack.c.b16 %v3401, %v3401
        %v3434 = vpack.c.b16 %v3402, %v3402
        %v3435 = vpack.c.b16 %v3403, %v3403
        %v3436 = vpack.c.b16 %v3404, %v3404
        %v3437 = vpack.c.b16 %v3405, %v3405
        %v3438 = vpack.c.b16 %v3406, %v3406
        %v3439 = vpack.c.b16 %v3407, %v3407
        %v3440 = vpack.c.b16 %v3408, %v3408
        %v3441 = vpack.c.b16 %v3409, %v3409
        %vm3474 = vcmask 125952
        %3475 = vst.msk [vmem:[%s177] sm:$0xf] %vm3474, %v3410
        %3476 = vst.msk [vmem:[%s177 + $0x4] sm:$0xf] %vm3474, %v3411
        %3477 = vst.msk [vmem:[%s177 + $0x8] sm:$0xf] %vm3474, %v3412
        %3478 = vst.msk [vmem:[%s177 + $0xc] sm:$0xf] %vm3474, %v3413
        %3479 = vst.msk [vmem:[%s177 + $0x10] sm:$0xf] %vm3474, %v3414
        %3480 = vst.msk [vmem:[%s177 + $0x14] sm:$0xf] %vm3474, %v3415
        %3481 = vst.msk [vmem:[%s177 + $0x18] sm:$0xf] %vm3474, %v3416
        %3482 = vst.msk [vmem:[%s177 + $0x1c] sm:$0xf] %vm3474, %v3417
        %3483 = vst.msk [vmem:[%s177 + $0x20] sm:$0xf] %vm3474, %v3418
        %3484 = vst.msk [vmem:[%s177 + $0x24] sm:$0xf] %vm3474, %v3419
        %3485 = vst.msk [vmem:[%s177 + $0x28] sm:$0xf] %vm3474, %v3420
        %3486 = vst.msk [vmem:[%s177 + $0x2c] sm:$0xf] %vm3474, %v3421
        %3487 = vst.msk [vmem:[%s177 + $0x30] sm:$0xf] %vm3474, %v3422
        %3488 = vst.msk [vmem:[%s177 + $0x34] sm:$0xf] %vm3474, %v3423
        %3489 = vst.msk [vmem:[%s177 + $0x38] sm:$0xf] %vm3474, %v3424
        %3490 = vst.msk [vmem:[%s177 + $0x3c] sm:$0xf] %vm3474, %v3425
        %3491 = vst.msk [vmem:[%s177 + $0x40] sm:$0xf] %vm3474, %v3426
        %3492 = vst.msk [vmem:[%s177 + $0x44] sm:$0xf] %vm3474, %v3427
        %3493 = vst.msk [vmem:[%s177 + $0x48] sm:$0xf] %vm3474, %v3428
        %3494 = vst.msk [vmem:[%s177 + $0x4c] sm:$0xf] %vm3474, %v3429
        %3495 = vst.msk [vmem:[%s177 + $0x50] sm:$0xf] %vm3474, %v3430
        %3496 = vst.msk [vmem:[%s177 + $0x54] sm:$0xf] %vm3474, %v3431
        %3497 = vst.msk [vmem:[%s177 + $0x58] sm:$0xf] %vm3474, %v3432
        %3498 = vst.msk [vmem:[%s177 + $0x5c] sm:$0xf] %vm3474, %v3433
        %3499 = vst.msk [vmem:[%s177 + $0x60] sm:$0xf] %vm3474, %v3434
        %3500 = vst.msk [vmem:[%s177 + $0x64] sm:$0xf] %vm3474, %v3435
        %3501 = vst.msk [vmem:[%s177 + $0x68] sm:$0xf] %vm3474, %v3436
        %3502 = vst.msk [vmem:[%s177 + $0x6c] sm:$0xf] %vm3474, %v3437
        %3503 = vst.msk [vmem:[%s177 + $0x70] sm:$0xf] %vm3474, %v3438
        %3504 = vst.msk [vmem:[%s177 + $0x74] sm:$0xf] %vm3474, %v3439
        %3505 = vst.msk [vmem:[%s177 + $0x78] sm:$0xf] %vm3474, %v3440
        %3506 = vst.msk [vmem:[%s177 + $0x7c] sm:$0xf] %vm3474, %v3441
        %s3507 = sand.u32 %s107, 1
        %s3508 = scalar_lea.sflag [#allocation3], %s3507
        %s3509 = sand.u32 %s107, 1
        %s3510 = smul.addr %s3509, 128
        %s3511 = scalar_lea.vmem [#allocation2], %s3510
        // Predicated region
        $region33: #{tpu_custom_call.1} parent=31 // pred_check
          %p3512 = pneg %p117
        $region34: #{tpu_custom_call.1} parent=31 // pred_check_branch
          %3514 = sbr.rel (%p3512) target = $region36
        $region35: #{tpu_custom_call.1} parent=31 // pred_region
          %s3515 = smul.u32 16, %s22
          %s3517 = ssub.s32 2048, 2048
          %3518 = vsyncadd %s3508, %s3517
          %s3519 = smul.addr %s3515, 2
          %s3520 = smul.addr %s21, 32
          %s3521 = sadd.s32 %s3519, %s3520
          %s3522 = smul.addr %s3521, 64
          %s3523 = scalar_lea.hbm %s3, %s3522
          %s3524 = sshll.u32 %s3511, 4
          %s3525 = int_to_ptr.vmem [resolvable:$true] %s3524
          %3530 = dma.vmem_to_hbm [thread:$0]  %s3525, 2048, %s3523, %s3508, 64, 64, 4
        $region36: #{tpu_custom_call.1} parent=31 // pred_fallthru
          _
      $region32: #{tpu_custom_call.1} parent=5 // pred_fallthru
        _
      %p3531 = scmp.le.s32.totalorder 2, %s12
      // Predicated region
      $region37: #{tpu_custom_call.1} parent=5 // pred_check
        %p3532 = pneg %p3531
      $region38: #{tpu_custom_call.1} parent=5 // pred_check_branch
        %3534 = sbr.rel (%p3532) target = $region40
      $region39: #{tpu_custom_call.1} parent=5 // pred_region
        %s3535 = ssub.s32 %s12, 2
        // Predicated region
        $region41: #{tpu_custom_call.1} parent=39 // pred_check
          %p3536 = pneg %p123
        $region42: #{tpu_custom_call.1} parent=39 // pred_check_branch
          %3538 = sbr.rel (%p3536) target = $region44
        $region43: #{tpu_custom_call.1} parent=39 // pred_region
          %s3539 = sand.u32 %s108, 1
          %s3540 = scalar_lea.sflag [#allocation3], %s3539
          %s3541 = sand.u32 %s108, 1
          %s3542 = smul.addr %s3541, 128
          %s3543 = scalar_lea.vmem [#allocation2], %s3542
          %3544 = dma.done %s3540, 2048
        $region44: #{tpu_custom_call.1} parent=39 // pred_fallthru
          _
      $region40: #{tpu_custom_call.1} parent=5 // pred_fallthru
        _
    $region6: #{tpu_custom_call.1} parent=1 // loop_footer
      %s16 = sadd.s32 1, %s12
    $region7: #{tpu_custom_call.1} parent=1 // loop_footer_branch
      %11 = sbr.rel target = $region3
    $region8: #{tpu_custom_call.1} parent=1 // loop_exit
      _
    %3545 = vsyncpa [#allocation3], 1
    %s3546 = scalar_lea.sflag [#allocation3], 1
    %3547 = vsyncpa %s3546, 1

</llo_original>
